<compile_context>
chip_gen: v7x
topology: tpu7x:2x2x1
jax: 0.10.0
libtpu: 0.0.40
codegen_flags: <defaults>
</compile_context>

<pallas_src>
import functools

import jax
import jax.numpy as jnp
from jax.experimental import pallas as pl
from jax.experimental.pallas import tpu as pltpu


# ---------------------------- fused Pallas kernel --------------------------- #

def _double_conv_kernel(x2_ref, x1_ref, w1_ref, b1_ref, w2_ref, b2_ref, mask_ref,
                        o_ref, src_ref, *, H, W, C_skip, C_mid, C_out, Lpad):
    """Fused torch.cat([x2, x1], 1) + DoubleConv (2x [3x3 conv pad=1 + BN + ReLU]).

    Layout: channels on sublanes; zero-haloed, flattened padded-grid spatial
    positions (row stride Wp = W+2) on the 128-lane axis, rounded up to Lpad
    (multiple of 128).  Each conv is 9 per-tap MXU matmuls (bf16 in, f32 acc)
    reading static lane-offset slices of `src_ref`; the intermediate activation
    never leaves VMEM and no im2col patch buffer is materialized.

      x2_ref : (1, C_skip, Lp) bf16   spatially pre-padded + flattened skip feats
      x1_ref : (1, C_skip, Lp) bf16   pre-padded + flattened upsampled deep feats
      w1_ref : (9, C_mid, 2*C_skip) bf16   per-tap conv1 weights (concat kept whole)
      b1_ref : (C_mid, 1) f32         conv1 folded BN bias
      w2_ref : (9, C_out, C_mid) bf16 per-tap conv2 weights
      b2_ref : (C_out, 1) f32         conv2 folded BN bias
      mask_ref:(1, Lpad) f32          1.0 on interior lanes, 0.0 on halo/align tail
      o_ref  : (1, C_out, H*W) f32    interior-only output (lane-dense slab)
      src_ref: VMEM (max(2*C_skip, C_mid), Lpad + 2*(Wp+1)) bf16 staging buffer

    Invariant: every src lane outside the stored [M, M+Lp) window stays zero, and
    the halo lanes inside it are re-zeroed (mask) before conv2, so all 9 tap
    slices read exact Conv2d(padding=1) zeros and all values stay finite.
    """
    Wp = W + 2
    Lp = (H + 2) * Wp
    M = Wp + 1                       # margin so every tap slice stays in bounds
    C_cat = 2 * C_skip
    offs = [(ky - 1) * Wp + (kx - 1) for ky in range(3) for kx in range(3)]

    # Zero halo / margins / 128-alignment tail once (exact zeros, no NaN reads).
    src_ref[...] = jnp.zeros_like(src_ref)

    # Fused torch.cat([x2, x1], dim=1): two lane-dense stores, one per half.
    src_ref[:C_skip, M:M + Lp] = x2_ref[0]
    src_ref[C_skip:C_cat, M:M + Lp] = x1_ref[0]

    def conv3x3(w_ref, c_in):
        # 9 per-tap matmuls accumulated in f32; operands are bf16 slices of src.
        acc = None
        for t, off in enumerate(offs):
            tap = src_ref[:c_in, M + off:M + off + Lpad]
            d = jnp.dot(w_ref[t], tap, preferred_element_type=jnp.float32)
            acc = d if acc is None else acc + d
        return acc

    # ---- conv1 + folded BN + ReLU (single chain over the full concat K dim) ----
    h = jnp.maximum(conv3x3(w1_ref, C_cat) + b1_ref[...], 0.0)     # (C_mid, Lpad) f32

    # ---- conv2 + folded BN + ReLU: re-impose zero halo, stay in VMEM -----------
    src_ref[:C_mid, M:M + Lpad] = (h * mask_ref[...]).astype(src_ref.dtype)
    out = jnp.maximum(conv3x3(w2_ref, C_mid) + b2_ref[...], 0.0)   # (C_out, Lpad) f32

    # Store only the interior H x W positions into a lane-dense (C_out, H*W) slab
    # (no post-kernel HBM slice pass).
    # TODO(synk): for production sizes, replace this trace-time H unroll with a
    # halo'd row-strip grid axis (lane-dense stores once W >= 128, fits v7x VMEM,
    # gives pipeline depth and a second parallel axis for the v7x TensorCores).
    for y in range(H):
        o_ref[0, :, y * W:(y + 1) * W] = out[:, (y + 1) * Wp + 1:(y + 1) * Wp + 1 + W]


def double_conv_fused(x2_nchw, x1_nchw, params):
    """Fused torch.cat([x2, x1], dim=1) + DoubleConv(residual=False), NCHW."""
    (w1, b1), (w2, b2) = params
    N, C_skip, H, W = x2_nchw.shape
    C_in, C_mid = w1.shape[2], w1.shape[3]
    C_out = w2.shape[3]
    assert C_in == 2 * C_skip and x1_nchw.shape == x2_nchw.shape

    Wp, Hp = W + 2, H + 2
    Lp = Hp * Wp                                  # true padded-grid positions
    Lpad = ((Lp + 127) // 128) * 128              # 128-aligned matmul N dim
    M = Wp + 1
    Lbuf = Lpad + 2 * M
    C_sub = max(2 * C_skip, C_mid)                # src sublanes cover both convs

    # Spatial zero-pad (Conv2d padding=1) + free flatten, done once in XLA so the
    # kernel stages each half with ONE dense store; bf16 halves the HBM->VMEM DMA
    # and feeds the MXU natively.
    def prep(x):
        xp = jnp.pad(x, ((0, 0), (0, 0), (1, 1), (1, 1)))
        return xp.reshape(N, C_skip, Lp).astype(jnp.bfloat16)
    x2f, x1f = prep(x2_nchw), prep(x1_nchw)

    # Per-tap weight layout (tap, Cout, Cin); conv1 keeps the [x2, x1] concat
    # channel order of torch.cat whole (no split-K halves).
    w1k = jnp.transpose(w1, (0, 1, 3, 2)).reshape(9, C_mid, C_in).astype(jnp.bfloat16)
    w2k = jnp.transpose(w2, (0, 1, 3, 2)).reshape(9, C_out, C_mid).astype(jnp.bfloat16)

    # Interior mask over the padded + 128-aligned lane grid.
    lane = jnp.arange(Lpad, dtype=jnp.int32)
    ypos, xpos = lane // Wp, lane % Wp
    mask = ((lane < Lp) & (ypos >= 1) & (ypos <= H) & (xpos >= 1) & (xpos <= W)
            ).astype(jnp.float32).reshape(1, Lpad)

    kernel = functools.partial(_double_conv_kernel, H=H, W=W, C_skip=C_skip,
                               C_mid=C_mid, C_out=C_out, Lpad=Lpad)
    out = pl.pallas_call(
        kernel,
        out_shape=jax.ShapeDtypeStruct((N, C_out, H * W), jnp.float32),
        grid=(N,),
        in_specs=[
            pl.BlockSpec((1, C_skip, Lp), lambda n: (n, 0, 0)),
            pl.BlockSpec((1, C_skip, Lp), lambda n: (n, 0, 0)),
            pl.BlockSpec((9, C_mid, C_in), lambda n: (0, 0, 0)),
            pl.BlockSpec((C_mid, 1), lambda n: (0, 0)),
            pl.BlockSpec((9, C_out, C_mid), lambda n: (0, 0, 0)),
            pl.BlockSpec((C_out, 1), lambda n: (0, 0)),
            pl.BlockSpec((1, Lpad), lambda n: (0, 0)),
        ],
        out_specs=pl.BlockSpec((1, C_out, H * W), lambda n: (n, 0, 0)),
        scratch_shapes=[pltpu.VMEM((C_sub, Lbuf), jnp.bfloat16)],
        compiler_params=pltpu.CompilerParams(
            dimension_semantics=("parallel",)),
    )(x2f, x1f, w1k, b1.reshape(C_mid, 1), w2k, b2.reshape(C_out, 1), mask)

    return out.reshape(N, C_out, H, W)            # free metadata reshape


# --------------------------------- JAX glue --------------------------------- #

def upsample_bilinear_x2_align_corners(x_nchw):
    """nn.Upsample(scale_factor=2, mode='bilinear', align_corners=True), NCHW."""
    N, C, H, W = x_nchw.shape
    H2, W2 = 2 * H, 2 * W

    def coords(n_in, n_out):
        if n_in == 1:
            z = jnp.zeros((n_out,), jnp.int32)
            return z, z, jnp.zeros((n_out,), jnp.float32)
        s = jnp.arange(n_out, dtype=jnp.float32) * (n_in - 1) / (n_out - 1)
        i0 = jnp.clip(jnp.floor(s).astype(jnp.int32), 0, n_in - 1)
        i1 = jnp.clip(i0 + 1, 0, n_in - 1)
        return i0, i1, s - i0.astype(jnp.float32)

    y0, y1, fy = coords(H, H2)
    x0, x1, fx = coords(W, W2)
    top = x_nchw[:, :, y0, :]
    bot = x_nchw[:, :, y1, :]
    rows = top * (1.0 - fy)[None, None, :, None] + bot * fy[None, None, :, None]
    left = rows[:, :, :, x0]
    right = rows[:, :, :, x1]
    return left * (1.0 - fx)[None, None, None, :] + right * fx[None, None, None, :]


def init_conv_bn(key, cin, cout, eps=1e-5):
    """Deterministic Conv2d(3x3)+BatchNorm2d params, BN (eval mode) folded in.

    Returns (w_folded, b_folded) with w in HWIO layout (3, 3, cin, cout)."""
    k1, k2, k3, k4, k5, k6 = jax.random.split(key, 6)
    w = 0.1 * jax.random.normal(k1, (3, 3, cin, cout), jnp.float32)
    conv_b = 0.1 * jax.random.normal(k2, (cout,), jnp.float32)
    gamma = 1.0 + 0.1 * jax.random.normal(k3, (cout,), jnp.float32)
    beta = 0.1 * jax.random.normal(k4, (cout,), jnp.float32)
    running_mean = 0.1 * jax.random.normal(k5, (cout,), jnp.float32)
    running_var = 0.5 + jnp.abs(jax.random.normal(k6, (cout,), jnp.float32))
    scale = gamma / jnp.sqrt(running_var + eps)
    w_folded = w * scale[None, None, None, :]
    b_folded = (conv_b - running_mean) * scale + beta
    return w_folded, b_folded


def upscale_forward(params, x1_nchw, x2_nchw):
    """Matches UpScale.forward(x1, x2) with bilinear=True, num_layers=2,
    residual=False.  Inputs/outputs are NCHW (PyTorch convention)."""
    x1 = upsample_bilinear_x2_align_corners(x1_nchw)
    diffY = x2_nchw.shape[2] - x1.shape[2]
    diffX = x2_nchw.shape[3] - x1.shape[3]
    x1 = jnp.pad(x1, ((0, 0), (0, 0),
                      (diffY // 2, diffY - diffY // 2),
                      (diffX // 2, diffX - diffX // 2)))
    # concat([x2, x1], dim=1) + DoubleConv are fused into one Pallas kernel.
    return double_conv_fused(x2_nchw, x1, params)


def upscale_reference(params, x1_nchw, x2_nchw, mxu_dtype=None):
    """Pure-JAX (XLA conv) reference.  With mxu_dtype=jnp.bfloat16 it applies the
    same MXU operand quantization as the kernel (bf16 inputs, f32 accumulation,
    f32 bias/ReLU), so the comparison tolerance can stay tight."""
    x1 = upsample_bilinear_x2_align_corners(x1_nchw)
    diffY = x2_nchw.shape[2] - x1.shape[2]
    diffX = x2_nchw.shape[3] - x1.shape[3]
    x1 = jnp.pad(x1, ((0, 0), (0, 0),
                      (diffY // 2, diffY - diffY // 2),
                      (diffX // 2, diffX - diffX // 2)))
    x = jnp.concatenate([x2_nchw, x1], axis=1)
    for (w, b) in params:
        if mxu_dtype is not None:
            xin, win, prec = x.astype(mxu_dtype), w.astype(mxu_dtype), None
        else:
            xin, win, prec = x, w, jax.lax.Precision.HIGHEST
        y = jax.lax.conv_general_dilated(
            xin, win, window_strides=(1, 1), padding=((1, 1), (1, 1)),
            dimension_numbers=("NCHW", "HWIO", "NCHW"),
            preferred_element_type=jnp.float32, precision=prec)
        x = jnp.maximum(y + b[None, :, None, None], 0.0)
    return x


# ----------------------------------- main ----------------------------------- #

if __name__ == "__main__":
    key = jax.random.PRNGKey(0)
    k_x1, k_x2, k_p1, k_p2 = jax.random.split(key, 4)

    N = 2
    C_half = 4                 # channels of each of x1 (deep path) and x2 (skip)
    C_in = 2 * C_half          # channels after the (fused) concatenation = 8
    C_out = 8
    H2, W2 = 16, 16            # x2 spatial size
    H1, W1 = 8, 8              # x1 spatial size (half of x2)

    x1 = jax.random.normal(k_x1, (N, C_half, H1, W1), jnp.float32)
    x2 = jax.random.normal(k_x2, (N, C_half, H2, W2), jnp.float32)

    params = [init_conv_bn(k_p1, C_in, C_out),
              init_conv_bn(k_p2, C_out, C_out)]

    out = jax.block_until_ready(upscale_forward(params, x1, x2))
    assert out.shape == (N, C_out, H2, W2), out.shape
    assert bool(jnp.all(jnp.isfinite(out)))

    # 1) Tight check vs a reference with matching bf16 MXU operand quantization
    #    (f32 accumulation) -- catches layout / halo / tap-offset bugs, which
    #    would show up as O(0.1+) errors.  Expected mismatch is ~1e-3.
    ref_bf16 = upscale_reference(params, x1, x2, mxu_dtype=jnp.bfloat16)
    err_tight = float(jnp.max(jnp.abs(out - ref_bf16)))
    assert err_tight < 3e-2, f"max abs error vs bf16-matched reference: {err_tight}"

    # 2) Loose check vs the pure-f32 reference -- bounds the total quantization
    #    introduced by feeding the MXU bf16 operands (expected ~1e-2 max).
    ref_f32 = upscale_reference(params, x1, x2, mxu_dtype=None)
    err_f32 = float(jnp.max(jnp.abs(out - ref_f32)))
    assert err_f32 < 1e-1, f"max abs error vs f32 reference: {err_f32}"

    print("KERNEL_OK")
</pallas_src>

<mosaic_0001>
module attributes {stable_mosaic.version = 11 : i64} {
  func.func @_double_conv_kernel(%arg0: i32, %arg1: memref<1x4x324xbf16, #tpu.memory_space<vmem>>, %arg2: memref<1x4x324xbf16, #tpu.memory_space<vmem>>, %arg3: memref<9x8x8xbf16, #tpu.memory_space<vmem>>, %arg4: memref<8x1xf32, #tpu.memory_space<vmem>>, %arg5: memref<9x8x8xbf16, #tpu.memory_space<vmem>>, %arg6: memref<8x1xf32, #tpu.memory_space<vmem>>, %arg7: memref<1x384xf32, #tpu.memory_space<vmem>>, %arg8: memref<1x8x256xf32, #tpu.memory_space<vmem>>, %arg9: memref<8x422xbf16, #tpu.memory_space<vmem>>) attributes {dimension_semantics = [#tpu.dimension_semantics<parallel>], iteration_bounds = array<i64: 2>, scalar_prefetch = 0 : i64, scratch_operands = 1 : i64, tpu.core_type = #tpu.core_type<tc>, window_params = [{transform_indices = @transform_0, window_bounds = array<i64: 1, 4, 324>}, {transform_indices = @transform_1, window_bounds = array<i64: 1, 4, 324>}, {pipeline_mode = #tpu.pipeline_mode<synchronous>, transform_indices = @transform_2, window_bounds = array<i64: 9, 8, 8>}, {pipeline_mode = #tpu.pipeline_mode<synchronous>, transform_indices = @transform_3, window_bounds = array<i64: 8, 1>}, {pipeline_mode = #tpu.pipeline_mode<synchronous>, transform_indices = @transform_4, window_bounds = array<i64: 9, 8, 8>}, {pipeline_mode = #tpu.pipeline_mode<synchronous>, transform_indices = @transform_5, window_bounds = array<i64: 8, 1>}, {pipeline_mode = #tpu.pipeline_mode<synchronous>, transform_indices = @transform_6, window_bounds = array<i64: 1, 384>}, {transform_indices = @transform_7, window_bounds = array<i64: 1, 8, 256>}]} {
    %cst = arith.constant 0.000000e+00 : bf16
    %0 = vector.broadcast %cst : bf16 to vector<8x422xbf16>
    %c0 = arith.constant 0 : index
    %c0_0 = arith.constant 0 : index
    %1 = vector.load %arg9[%c0, %c0_0] : memref<8x422xbf16, #tpu.memory_space<vmem>>, vector<8x422xbf16>
    tpu.vector_store %arg9[%c0, %c0_0], %0 {strides = array<i32>} : memref<8x422xbf16, #tpu.memory_space<vmem>>, vector<8x422xbf16>,
    %c0_1 = arith.constant 0 : index
    %c0_2 = arith.constant 0 : index
    %c0_3 = arith.constant 0 : index
    %2 = vector.load %arg1[%c0_1, %c0_2, %c0_3] : memref<1x4x324xbf16, #tpu.memory_space<vmem>>, vector<1x4x324xbf16>
    %3 = vector.shape_cast %2 : vector<1x4x324xbf16> to vector<4x324xbf16>
    %c0_4 = arith.constant 0 : index
    %c19 = arith.constant 19 : index
    %4 = vector.load %arg9[%c0_4, %c19] : memref<8x422xbf16, #tpu.memory_space<vmem>>, vector<4x324xbf16>
    tpu.vector_store %arg9[%c0_4, %c19], %3 {strides = array<i32>} : memref<8x422xbf16, #tpu.memory_space<vmem>>, vector<4x324xbf16>,
    %c0_5 = arith.constant 0 : index
    %c0_6 = arith.constant 0 : index
    %c0_7 = arith.constant 0 : index
    %5 = vector.load %arg2[%c0_5, %c0_6, %c0_7] : memref<1x4x324xbf16, #tpu.memory_space<vmem>>, vector<1x4x324xbf16>
    %6 = vector.shape_cast %5 : vector<1x4x324xbf16> to vector<4x324xbf16>
    %c4 = arith.constant 4 : index
    %c19_8 = arith.constant 19 : index
    %7 = vector.load %arg9[%c4, %c19_8] : memref<8x422xbf16, #tpu.memory_space<vmem>>, vector<4x324xbf16>
    tpu.vector_store %arg9[%c4, %c19_8], %6 {strides = array<i32>} : memref<8x422xbf16, #tpu.memory_space<vmem>>, vector<4x324xbf16>,
    %c0_9 = arith.constant 0 : index
    %c0_10 = arith.constant 0 : index
    %8 = vector.load %arg9[%c0_9, %c0_10] : memref<8x422xbf16, #tpu.memory_space<vmem>>, vector<8x384xbf16>
    %c0_11 = arith.constant 0 : index
    %c0_12 = arith.constant 0 : index
    %c0_13 = arith.constant 0 : index
    %9 = vector.load %arg3[%c0_11, %c0_12, %c0_13] : memref<9x8x8xbf16, #tpu.memory_space<vmem>>, vector<1x8x8xbf16>
    %10 = vector.shape_cast %9 : vector<1x8x8xbf16> to vector<8x8xbf16>
    %cst_14 = arith.constant dense<0.000000e+00> : vector<8x384xf32>
    %11 = tpu.matmul %10, %8, %cst_14 {dimension_numbers = #tpu.dot_dimension_numbers<[1], [0], [0], [1], [0, 0, 1, 1], [], []>} : vector<8x8xbf16>, vector<8x384xbf16>, vector<8x384xf32> -> vector<8x384xf32>
    %c0_15 = arith.constant 0 : index
    %c1 = arith.constant 1 : index
    %12 = vector.load %arg9[%c0_15, %c1] : memref<8x422xbf16, #tpu.memory_space<vmem>>, vector<8x384xbf16>
    %c1_16 = arith.constant 1 : index
    %c0_17 = arith.constant 0 : index
    %c0_18 = arith.constant 0 : index
    %13 = vector.load %arg3[%c1_16, %c0_17, %c0_18] : memref<9x8x8xbf16, #tpu.memory_space<vmem>>, vector<1x8x8xbf16>
    %14 = vector.shape_cast %13 : vector<1x8x8xbf16> to vector<8x8xbf16>
    %cst_19 = arith.constant dense<0.000000e+00> : vector<8x384xf32>
    %15 = tpu.matmul %14, %12, %cst_19 {dimension_numbers = #tpu.dot_dimension_numbers<[1], [0], [0], [1], [0, 0, 1, 1], [], []>} : vector<8x8xbf16>, vector<8x384xbf16>, vector<8x384xf32> -> vector<8x384xf32>
    %16 = arith.addf %11, %15 : vector<8x384xf32>
    %c0_20 = arith.constant 0 : index
    %c2 = arith.constant 2 : index
    %17 = vector.load %arg9[%c0_20, %c2] : memref<8x422xbf16, #tpu.memory_space<vmem>>, vector<8x384xbf16>
    %c2_21 = arith.constant 2 : index
    %c0_22 = arith.constant 0 : index
    %c0_23 = arith.constant 0 : index
    %18 = vector.load %arg3[%c2_21, %c0_22, %c0_23] : memref<9x8x8xbf16, #tpu.memory_space<vmem>>, vector<1x8x8xbf16>
    %19 = vector.shape_cast %18 : vector<1x8x8xbf16> to vector<8x8xbf16>
    %cst_24 = arith.constant dense<0.000000e+00> : vector<8x384xf32>
    %20 = tpu.matmul %19, %17, %cst_24 {dimension_numbers = #tpu.dot_dimension_numbers<[1], [0], [0], [1], [0, 0, 1, 1], [], []>} : vector<8x8xbf16>, vector<8x384xbf16>, vector<8x384xf32> -> vector<8x384xf32>
    %21 = arith.addf %16, %20 : vector<8x384xf32>
    %c0_25 = arith.constant 0 : index
    %c18 = arith.constant 18 : index
    %22 = vector.load %arg9[%c0_25, %c18] : memref<8x422xbf16, #tpu.memory_space<vmem>>, vector<8x384xbf16>
    %c3 = arith.constant 3 : index
    %c0_26 = arith.constant 0 : index
    %c0_27 = arith.constant 0 : index
    %23 = vector.load %arg3[%c3, %c0_26, %c0_27] : memref<9x8x8xbf16, #tpu.memory_space<vmem>>, vector<1x8x8xbf16>
    %24 = vector.shape_cast %23 : vector<1x8x8xbf16> to vector<8x8xbf16>
    %cst_28 = arith.constant dense<0.000000e+00> : vector<8x384xf32>
    %25 = tpu.matmul %24, %22, %cst_28 {dimension_numbers = #tpu.dot_dimension_numbers<[1], [0], [0], [1], [0, 0, 1, 1], [], []>} : vector<8x8xbf16>, vector<8x384xbf16>, vector<8x384xf32> -> vector<8x384xf32>
    %26 = arith.addf %21, %25 : vector<8x384xf32>
    %c0_29 = arith.constant 0 : index
    %c19_30 = arith.constant 19 : index
    %27 = vector.load %arg9[%c0_29, %c19_30] : memref<8x422xbf16, #tpu.memory_space<vmem>>, vector<8x384xbf16>
    %c4_31 = arith.constant 4 : index
    %c0_32 = arith.constant 0 : index
    %c0_33 = arith.constant 0 : index
    %28 = vector.load %arg3[%c4_31, %c0_32, %c0_33] : memref<9x8x8xbf16, #tpu.memory_space<vmem>>, vector<1x8x8xbf16>
    %29 = vector.shape_cast %28 : vector<1x8x8xbf16> to vector<8x8xbf16>
    %cst_34 = arith.constant dense<0.000000e+00> : vector<8x384xf32>
    %30 = tpu.matmul %29, %27, %cst_34 {dimension_numbers = #tpu.dot_dimension_numbers<[1], [0], [0], [1], [0, 0, 1, 1], [], []>} : vector<8x8xbf16>, vector<8x384xbf16>, vector<8x384xf32> -> vector<8x384xf32>
    %31 = arith.addf %26, %30 : vector<8x384xf32>
    %c0_35 = arith.constant 0 : index
    %c20 = arith.constant 20 : index
    %32 = vector.load %arg9[%c0_35, %c20] : memref<8x422xbf16, #tpu.memory_space<vmem>>, vector<8x384xbf16>
    %c5 = arith.constant 5 : index
    %c0_36 = arith.constant 0 : index
    %c0_37 = arith.constant 0 : index
    %33 = vector.load %arg3[%c5, %c0_36, %c0_37] : memref<9x8x8xbf16, #tpu.memory_space<vmem>>, vector<1x8x8xbf16>
    %34 = vector.shape_cast %33 : vector<1x8x8xbf16> to vector<8x8xbf16>
    %cst_38 = arith.constant dense<0.000000e+00> : vector<8x384xf32>
    %35 = tpu.matmul %34, %32, %cst_38 {dimension_numbers = #tpu.dot_dimension_numbers<[1], [0], [0], [1], [0, 0, 1, 1], [], []>} : vector<8x8xbf16>, vector<8x384xbf16>, vector<8x384xf32> -> vector<8x384xf32>
    %36 = arith.addf %31, %35 : vector<8x384xf32>
    %c0_39 = arith.constant 0 : index
    %c36 = arith.constant 36 : index
    %37 = vector.load %arg9[%c0_39, %c36] : memref<8x422xbf16, #tpu.memory_space<vmem>>, vector<8x384xbf16>
    %c6 = arith.constant 6 : index
    %c0_40 = arith.constant 0 : index
    %c0_41 = arith.constant 0 : index
    %38 = vector.load %arg3[%c6, %c0_40, %c0_41] : memref<9x8x8xbf16, #tpu.memory_space<vmem>>, vector<1x8x8xbf16>
    %39 = vector.shape_cast %38 : vector<1x8x8xbf16> to vector<8x8xbf16>
    %cst_42 = arith.constant dense<0.000000e+00> : vector<8x384xf32>
    %40 = tpu.matmul %39, %37, %cst_42 {dimension_numbers = #tpu.dot_dimension_numbers<[1], [0], [0], [1], [0, 0, 1, 1], [], []>} : vector<8x8xbf16>, vector<8x384xbf16>, vector<8x384xf32> -> vector<8x384xf32>
    %41 = arith.addf %36, %40 : vector<8x384xf32>
    %c0_43 = arith.constant 0 : index
    %c37 = arith.constant 37 : index
    %42 = vector.load %arg9[%c0_43, %c37] : memref<8x422xbf16, #tpu.memory_space<vmem>>, vector<8x384xbf16>
    %c7 = arith.constant 7 : index
    %c0_44 = arith.constant 0 : index
    %c0_45 = arith.constant 0 : index
    %43 = vector.load %arg3[%c7, %c0_44, %c0_45] : memref<9x8x8xbf16, #tpu.memory_space<vmem>>, vector<1x8x8xbf16>
    %44 = vector.shape_cast %43 : vector<1x8x8xbf16> to vector<8x8xbf16>
    %cst_46 = arith.constant dense<0.000000e+00> : vector<8x384xf32>
    %45 = tpu.matmul %44, %42, %cst_46 {dimension_numbers = #tpu.dot_dimension_numbers<[1], [0], [0], [1], [0, 0, 1, 1], [], []>} : vector<8x8xbf16>, vector<8x384xbf16>, vector<8x384xf32> -> vector<8x384xf32>
    %46 = arith.addf %41, %45 : vector<8x384xf32>
    %c0_47 = arith.constant 0 : index
    %c38 = arith.constant 38 : index
    %47 = vector.load %arg9[%c0_47, %c38] : memref<8x422xbf16, #tpu.memory_space<vmem>>, vector<8x384xbf16>
    %c8 = arith.constant 8 : index
    %c0_48 = arith.constant 0 : index
    %c0_49 = arith.constant 0 : index
    %48 = vector.load %arg3[%c8, %c0_48, %c0_49] : memref<9x8x8xbf16, #tpu.memory_space<vmem>>, vector<1x8x8xbf16>
    %49 = vector.shape_cast %48 : vector<1x8x8xbf16> to vector<8x8xbf16>
    %cst_50 = arith.constant dense<0.000000e+00> : vector<8x384xf32>
    %50 = tpu.matmul %49, %47, %cst_50 {dimension_numbers = #tpu.dot_dimension_numbers<[1], [0], [0], [1], [0, 0, 1, 1], [], []>} : vector<8x8xbf16>, vector<8x384xbf16>, vector<8x384xf32> -> vector<8x384xf32>
    %51 = arith.addf %46, %50 : vector<8x384xf32>
    %c0_51 = arith.constant 0 : index
    %c0_52 = arith.constant 0 : index
    %52 = vector.load %arg4[%c0_51, %c0_52] : memref<8x1xf32, #tpu.memory_space<vmem>>, vector<8x1xf32>
    %53 = vector.broadcast %52 : vector<8x1xf32> to vector<8x384xf32>
    %54 = arith.addf %51, %53 : vector<8x384xf32>
    %cst_53 = arith.constant 0.000000e+00 : f32
    %55 = vector.broadcast %cst_53 : f32 to vector<8x384xf32>
    %56 = arith.maximumf %54, %55 : vector<8x384xf32>
    %c0_54 = arith.constant 0 : index
    %c0_55 = arith.constant 0 : index
    %57 = vector.load %arg7[%c0_54, %c0_55] : memref<1x384xf32, #tpu.memory_space<vmem>>, vector<1x384xf32>
    %58 = vector.broadcast %57 : vector<1x384xf32> to vector<8x384xf32>
    %59 = arith.mulf %56, %58 : vector<8x384xf32>
    %60 = arith.truncf %59 : vector<8x384xf32> to vector<8x384xbf16>
    %c0_56 = arith.constant 0 : index
    %c19_57 = arith.constant 19 : index
    %61 = vector.load %arg9[%c0_56, %c19_57] : memref<8x422xbf16, #tpu.memory_space<vmem>>, vector<8x384xbf16>
    tpu.vector_store %arg9[%c0_56, %c19_57], %60 {strides = array<i32>} : memref<8x422xbf16, #tpu.memory_space<vmem>>, vector<8x384xbf16>,
    %c0_58 = arith.constant 0 : index
    %c0_59 = arith.constant 0 : index
    %62 = vector.load %arg9[%c0_58, %c0_59] : memref<8x422xbf16, #tpu.memory_space<vmem>>, vector<8x384xbf16>
    %c0_60 = arith.constant 0 : index
    %c0_61 = arith.constant 0 : index
    %c0_62 = arith.constant 0 : index
    %63 = vector.load %arg5[%c0_60, %c0_61, %c0_62] : memref<9x8x8xbf16, #tpu.memory_space<vmem>>, vector<1x8x8xbf16>
    %64 = vector.shape_cast %63 : vector<1x8x8xbf16> to vector<8x8xbf16>
    %cst_63 = arith.constant dense<0.000000e+00> : vector<8x384xf32>
    %65 = tpu.matmul %64, %62, %cst_63 {dimension_numbers = #tpu.dot_dimension_numbers<[1], [0], [0], [1], [0, 0, 1, 1], [], []>} : vector<8x8xbf16>, vector<8x384xbf16>, vector<8x384xf32> -> vector<8x384xf32>
    %c0_64 = arith.constant 0 : index
    %c1_65 = arith.constant 1 : index
    %66 = vector.load %arg9[%c0_64, %c1_65] : memref<8x422xbf16, #tpu.memory_space<vmem>>, vector<8x384xbf16>
    %c1_66 = arith.constant 1 : index
    %c0_67 = arith.constant 0 : index
    %c0_68 = arith.constant 0 : index
    %67 = vector.load %arg5[%c1_66, %c0_67, %c0_68] : memref<9x8x8xbf16, #tpu.memory_space<vmem>>, vector<1x8x8xbf16>
    %68 = vector.shape_cast %67 : vector<1x8x8xbf16> to vector<8x8xbf16>
    %cst_69 = arith.constant dense<0.000000e+00> : vector<8x384xf32>
    %69 = tpu.matmul %68, %66, %cst_69 {dimension_numbers = #tpu.dot_dimension_numbers<[1], [0], [0], [1], [0, 0, 1, 1], [], []>} : vector<8x8xbf16>, vector<8x384xbf16>, vector<8x384xf32> -> vector<8x384xf32>
    %70 = arith.addf %65, %69 : vector<8x384xf32>
    %c0_70 = arith.constant 0 : index
    %c2_71 = arith.constant 2 : index
    %71 = vector.load %arg9[%c0_70, %c2_71] : memref<8x422xbf16, #tpu.memory_space<vmem>>, vector<8x384xbf16>
    %c2_72 = arith.constant 2 : index
    %c0_73 = arith.constant 0 : index
    %c0_74 = arith.constant 0 : index
    %72 = vector.load %arg5[%c2_72, %c0_73, %c0_74] : memref<9x8x8xbf16, #tpu.memory_space<vmem>>, vector<1x8x8xbf16>
    %73 = vector.shape_cast %72 : vector<1x8x8xbf16> to vector<8x8xbf16>
    %cst_75 = arith.constant dense<0.000000e+00> : vector<8x384xf32>
    %74 = tpu.matmul %73, %71, %cst_75 {dimension_numbers = #tpu.dot_dimension_numbers<[1], [0], [0], [1], [0, 0, 1, 1], [], []>} : vector<8x8xbf16>, vector<8x384xbf16>, vector<8x384xf32> -> vector<8x384xf32>
    %75 = arith.addf %70, %74 : vector<8x384xf32>
    %c0_76 = arith.constant 0 : index
    %c18_77 = arith.constant 18 : index
    %76 = vector.load %arg9[%c0_76, %c18_77] : memref<8x422xbf16, #tpu.memory_space<vmem>>, vector<8x384xbf16>
    %c3_78 = arith.constant 3 : index
    %c0_79 = arith.constant 0 : index
    %c0_80 = arith.constant 0 : index
    %77 = vector.load %arg5[%c3_78, %c0_79, %c0_80] : memref<9x8x8xbf16, #tpu.memory_space<vmem>>, vector<1x8x8xbf16>
    %78 = vector.shape_cast %77 : vector<1x8x8xbf16> to vector<8x8xbf16>
    %cst_81 = arith.constant dense<0.000000e+00> : vector<8x384xf32>
    %79 = tpu.matmul %78, %76, %cst_81 {dimension_numbers = #tpu.dot_dimension_numbers<[1], [0], [0], [1], [0, 0, 1, 1], [], []>} : vector<8x8xbf16>, vector<8x384xbf16>, vector<8x384xf32> -> vector<8x384xf32>
    %80 = arith.addf %75, %79 : vector<8x384xf32>
    %c0_82 = arith.constant 0 : index
    %c19_83 = arith.constant 19 : index
    %81 = vector.load %arg9[%c0_82, %c19_83] : memref<8x422xbf16, #tpu.memory_space<vmem>>, vector<8x384xbf16>
    %c4_84 = arith.constant 4 : index
    %c0_85 = arith.constant 0 : index
    %c0_86 = arith.constant 0 : index
    %82 = vector.load %arg5[%c4_84, %c0_85, %c0_86] : memref<9x8x8xbf16, #tpu.memory_space<vmem>>, vector<1x8x8xbf16>
    %83 = vector.shape_cast %82 : vector<1x8x8xbf16> to vector<8x8xbf16>
    %cst_87 = arith.constant dense<0.000000e+00> : vector<8x384xf32>
    %84 = tpu.matmul %83, %81, %cst_87 {dimension_numbers = #tpu.dot_dimension_numbers<[1], [0], [0], [1], [0, 0, 1, 1], [], []>} : vector<8x8xbf16>, vector<8x384xbf16>, vector<8x384xf32> -> vector<8x384xf32>
    %85 = arith.addf %80, %84 : vector<8x384xf32>
    %c0_88 = arith.constant 0 : index
    %c20_89 = arith.constant 20 : index
    %86 = vector.load %arg9[%c0_88, %c20_89] : memref<8x422xbf16, #tpu.memory_space<vmem>>, vector<8x384xbf16>
    %c5_90 = arith.constant 5 : index
    %c0_91 = arith.constant 0 : index
    %c0_92 = arith.constant 0 : index
    %87 = vector.load %arg5[%c5_90, %c0_91, %c0_92] : memref<9x8x8xbf16, #tpu.memory_space<vmem>>, vector<1x8x8xbf16>
    %88 = vector.shape_cast %87 : vector<1x8x8xbf16> to vector<8x8xbf16>
    %cst_93 = arith.constant dense<0.000000e+00> : vector<8x384xf32>
    %89 = tpu.matmul %88, %86, %cst_93 {dimension_numbers = #tpu.dot_dimension_numbers<[1], [0], [0], [1], [0, 0, 1, 1], [], []>} : vector<8x8xbf16>, vector<8x384xbf16>, vector<8x384xf32> -> vector<8x384xf32>
    %90 = arith.addf %85, %89 : vector<8x384xf32>
    %c0_94 = arith.constant 0 : index
    %c36_95 = arith.constant 36 : index
    %91 = vector.load %arg9[%c0_94, %c36_95] : memref<8x422xbf16, #tpu.memory_space<vmem>>, vector<8x384xbf16>
    %c6_96 = arith.constant 6 : index
    %c0_97 = arith.constant 0 : index
    %c0_98 = arith.constant 0 : index
    %92 = vector.load %arg5[%c6_96, %c0_97, %c0_98] : memref<9x8x8xbf16, #tpu.memory_space<vmem>>, vector<1x8x8xbf16>
    %93 = vector.shape_cast %92 : vector<1x8x8xbf16> to vector<8x8xbf16>
    %cst_99 = arith.constant dense<0.000000e+00> : vector<8x384xf32>
    %94 = tpu.matmul %93, %91, %cst_99 {dimension_numbers = #tpu.dot_dimension_numbers<[1], [0], [0], [1], [0, 0, 1, 1], [], []>} : vector<8x8xbf16>, vector<8x384xbf16>, vector<8x384xf32> -> vector<8x384xf32>
    %95 = arith.addf %90, %94 : vector<8x384xf32>
    %c0_100 = arith.constant 0 : index
    %c37_101 = arith.constant 37 : index
    %96 = vector.load %arg9[%c0_100, %c37_101] : memref<8x422xbf16, #tpu.memory_space<vmem>>, vector<8x384xbf16>
    %c7_102 = arith.constant 7 : index
    %c0_103 = arith.constant 0 : index
    %c0_104 = arith.constant 0 : index
    %97 = vector.load %arg5[%c7_102, %c0_103, %c0_104] : memref<9x8x8xbf16, #tpu.memory_space<vmem>>, vector<1x8x8xbf16>
    %98 = vector.shape_cast %97 : vector<1x8x8xbf16> to vector<8x8xbf16>
    %cst_105 = arith.constant dense<0.000000e+00> : vector<8x384xf32>
    %99 = tpu.matmul %98, %96, %cst_105 {dimension_numbers = #tpu.dot_dimension_numbers<[1], [0], [0], [1], [0, 0, 1, 1], [], []>} : vector<8x8xbf16>, vector<8x384xbf16>, vector<8x384xf32> -> vector<8x384xf32>
    %100 = arith.addf %95, %99 : vector<8x384xf32>
    %c0_106 = arith.constant 0 : index
    %c38_107 = arith.constant 38 : index
    %101 = vector.load %arg9[%c0_106, %c38_107] : memref<8x422xbf16, #tpu.memory_space<vmem>>, vector<8x384xbf16>
    %c8_108 = arith.constant 8 : index
    %c0_109 = arith.constant 0 : index
    %c0_110 = arith.constant 0 : index
    %102 = vector.load %arg5[%c8_108, %c0_109, %c0_110] : memref<9x8x8xbf16, #tpu.memory_space<vmem>>, vector<1x8x8xbf16>
    %103 = vector.shape_cast %102 : vector<1x8x8xbf16> to vector<8x8xbf16>
    %cst_111 = arith.constant dense<0.000000e+00> : vector<8x384xf32>
    %104 = tpu.matmul %103, %101, %cst_111 {dimension_numbers = #tpu.dot_dimension_numbers<[1], [0], [0], [1], [0, 0, 1, 1], [], []>} : vector<8x8xbf16>, vector<8x384xbf16>, vector<8x384xf32> -> vector<8x384xf32>
    %105 = arith.addf %100, %104 : vector<8x384xf32>
    %c0_112 = arith.constant 0 : index
    %c0_113 = arith.constant 0 : index
    %106 = vector.load %arg6[%c0_112, %c0_113] : memref<8x1xf32, #tpu.memory_space<vmem>>, vector<8x1xf32>
    %107 = vector.broadcast %106 : vector<8x1xf32> to vector<8x384xf32>
    %108 = arith.addf %105, %107 : vector<8x384xf32>
    %cst_114 = arith.constant 0.000000e+00 : f32
    %109 = vector.broadcast %cst_114 : f32 to vector<8x384xf32>
    %110 = arith.maximumf %108, %109 : vector<8x384xf32>
    %111 = vector.extract_strided_slice %110 {offsets = [0, 19], sizes = [8, 16], strides = [1, 1]} : vector<8x384xf32> to vector<8x16xf32>
    %c0_115 = arith.constant 0 : index
    %c0_116 = arith.constant 0 : index
    %c0_117 = arith.constant 0 : index
    %112 = vector.load %arg8[%c0_115, %c0_116, %c0_117] : memref<1x8x256xf32, #tpu.memory_space<vmem>>, vector<1x8x16xf32>
    %113 = vector.shape_cast %112 : vector<1x8x16xf32> to vector<8x16xf32>
    %114 = vector.shape_cast %111 : vector<8x16xf32> to vector<1x8x16xf32>
    tpu.vector_store %arg8[%c0_115, %c0_116, %c0_117], %114 {strides = array<i32>} : memref<1x8x256xf32, #tpu.memory_space<vmem>>, vector<1x8x16xf32>,
    %115 = vector.extract_strided_slice %110 {offsets = [0, 37], sizes = [8, 16], strides = [1, 1]} : vector<8x384xf32> to vector<8x16xf32>
    %c0_118 = arith.constant 0 : index
    %c0_119 = arith.constant 0 : index
    %c16 = arith.constant 16 : index
    %116 = vector.load %arg8[%c0_118, %c0_119, %c16] : memref<1x8x256xf32, #tpu.memory_space<vmem>>, vector<1x8x16xf32>
    %117 = vector.shape_cast %116 : vector<1x8x16xf32> to vector<8x16xf32>
    %118 = vector.shape_cast %115 : vector<8x16xf32> to vector<1x8x16xf32>
    tpu.vector_store %arg8[%c0_118, %c0_119, %c16], %118 {strides = array<i32>} : memref<1x8x256xf32, #tpu.memory_space<vmem>>, vector<1x8x16xf32>,
    %119 = vector.extract_strided_slice %110 {offsets = [0, 55], sizes = [8, 16], strides = [1, 1]} : vector<8x384xf32> to vector<8x16xf32>
    %c0_120 = arith.constant 0 : index
    %c0_121 = arith.constant 0 : index
    %c32 = arith.constant 32 : index
    %120 = vector.load %arg8[%c0_120, %c0_121, %c32] : memref<1x8x256xf32, #tpu.memory_space<vmem>>, vector<1x8x16xf32>
    %121 = vector.shape_cast %120 : vector<1x8x16xf32> to vector<8x16xf32>
    %122 = vector.shape_cast %119 : vector<8x16xf32> to vector<1x8x16xf32>
    tpu.vector_store %arg8[%c0_120, %c0_121, %c32], %122 {strides = array<i32>} : memref<1x8x256xf32, #tpu.memory_space<vmem>>, vector<1x8x16xf32>,
    %123 = vector.extract_strided_slice %110 {offsets = [0, 73], sizes = [8, 16], strides = [1, 1]} : vector<8x384xf32> to vector<8x16xf32>
    %c0_122 = arith.constant 0 : index
    %c0_123 = arith.constant 0 : index
    %c48 = arith.constant 48 : index
    %124 = vector.load %arg8[%c0_122, %c0_123, %c48] : memref<1x8x256xf32, #tpu.memory_space<vmem>>, vector<1x8x16xf32>
    %125 = vector.shape_cast %124 : vector<1x8x16xf32> to vector<8x16xf32>
    %126 = vector.shape_cast %123 : vector<8x16xf32> to vector<1x8x16xf32>
    tpu.vector_store %arg8[%c0_122, %c0_123, %c48], %126 {strides = array<i32>} : memref<1x8x256xf32, #tpu.memory_space<vmem>>, vector<1x8x16xf32>,
    %127 = vector.extract_strided_slice %110 {offsets = [0, 91], sizes = [8, 16], strides = [1, 1]} : vector<8x384xf32> to vector<8x16xf32>
    %c0_124 = arith.constant 0 : index
    %c0_125 = arith.constant 0 : index
    %c64 = arith.constant 64 : index
    %128 = vector.load %arg8[%c0_124, %c0_125, %c64] : memref<1x8x256xf32, #tpu.memory_space<vmem>>, vector<1x8x16xf32>
    %129 = vector.shape_cast %128 : vector<1x8x16xf32> to vector<8x16xf32>
    %130 = vector.shape_cast %127 : vector<8x16xf32> to vector<1x8x16xf32>
    tpu.vector_store %arg8[%c0_124, %c0_125, %c64], %130 {strides = array<i32>} : memref<1x8x256xf32, #tpu.memory_space<vmem>>, vector<1x8x16xf32>,
    %131 = vector.extract_strided_slice %110 {offsets = [0, 109], sizes = [8, 16], strides = [1, 1]} : vector<8x384xf32> to vector<8x16xf32>
    %c0_126 = arith.constant 0 : index
    %c0_127 = arith.constant 0 : index
    %c80 = arith.constant 80 : index
    %132 = vector.load %arg8[%c0_126, %c0_127, %c80] : memref<1x8x256xf32, #tpu.memory_space<vmem>>, vector<1x8x16xf32>
    %133 = vector.shape_cast %132 : vector<1x8x16xf32> to vector<8x16xf32>
    %134 = vector.shape_cast %131 : vector<8x16xf32> to vector<1x8x16xf32>
    tpu.vector_store %arg8[%c0_126, %c0_127, %c80], %134 {strides = array<i32>} : memref<1x8x256xf32, #tpu.memory_space<vmem>>, vector<1x8x16xf32>,
    %135 = vector.extract_strided_slice %110 {offsets = [0, 127], sizes = [8, 16], strides = [1, 1]} : vector<8x384xf32> to vector<8x16xf32>
    %c0_128 = arith.constant 0 : index
    %c0_129 = arith.constant 0 : index
    %c96 = arith.constant 96 : index
    %136 = vector.load %arg8[%c0_128, %c0_129, %c96] : memref<1x8x256xf32, #tpu.memory_space<vmem>>, vector<1x8x16xf32>
    %137 = vector.shape_cast %136 : vector<1x8x16xf32> to vector<8x16xf32>
    %138 = vector.shape_cast %135 : vector<8x16xf32> to vector<1x8x16xf32>
    tpu.vector_store %arg8[%c0_128, %c0_129, %c96], %138 {strides = array<i32>} : memref<1x8x256xf32, #tpu.memory_space<vmem>>, vector<1x8x16xf32>,
    %139 = vector.extract_strided_slice %110 {offsets = [0, 145], sizes = [8, 16], strides = [1, 1]} : vector<8x384xf32> to vector<8x16xf32>
    %c0_130 = arith.constant 0 : index
    %c0_131 = arith.constant 0 : index
    %c112 = arith.constant 112 : index
    %140 = vector.load %arg8[%c0_130, %c0_131, %c112] : memref<1x8x256xf32, #tpu.memory_space<vmem>>, vector<1x8x16xf32>
    %141 = vector.shape_cast %140 : vector<1x8x16xf32> to vector<8x16xf32>
    %142 = vector.shape_cast %139 : vector<8x16xf32> to vector<1x8x16xf32>
    tpu.vector_store %arg8[%c0_130, %c0_131, %c112], %142 {strides = array<i32>} : memref<1x8x256xf32, #tpu.memory_space<vmem>>, vector<1x8x16xf32>,
    %143 = vector.extract_strided_slice %110 {offsets = [0, 163], sizes = [8, 16], strides = [1, 1]} : vector<8x384xf32> to vector<8x16xf32>
    %c0_132 = arith.constant 0 : index
    %c0_133 = arith.constant 0 : index
    %c128 = arith.constant 128 : index
    %144 = vector.load %arg8[%c0_132, %c0_133, %c128] : memref<1x8x256xf32, #tpu.memory_space<vmem>>, vector<1x8x16xf32>
    %145 = vector.shape_cast %144 : vector<1x8x16xf32> to vector<8x16xf32>
    %146 = vector.shape_cast %143 : vector<8x16xf32> to vector<1x8x16xf32>
    tpu.vector_store %arg8[%c0_132, %c0_133, %c128], %146 {strides = array<i32>} : memref<1x8x256xf32, #tpu.memory_space<vmem>>, vector<1x8x16xf32>,
    %147 = vector.extract_strided_slice %110 {offsets = [0, 181], sizes = [8, 16], strides = [1, 1]} : vector<8x384xf32> to vector<8x16xf32>
    %c0_134 = arith.constant 0 : index
    %c0_135 = arith.constant 0 : index
    %c144 = arith.constant 144 : index
    %148 = vector.load %arg8[%c0_134, %c0_135, %c144] : memref<1x8x256xf32, #tpu.memory_space<vmem>>, vector<1x8x16xf32>
    %149 = vector.shape_cast %148 : vector<1x8x16xf32> to vector<8x16xf32>
    %150 = vector.shape_cast %147 : vector<8x16xf32> to vector<1x8x16xf32>
    tpu.vector_store %arg8[%c0_134, %c0_135, %c144], %150 {strides = array<i32>} : memref<1x8x256xf32, #tpu.memory_space<vmem>>, vector<1x8x16xf32>,
    %151 = vector.extract_strided_slice %110 {offsets = [0, 199], sizes = [8, 16], strides = [1, 1]} : vector<8x384xf32> to vector<8x16xf32>
    %c0_136 = arith.constant 0 : index
    %c0_137 = arith.constant 0 : index
    %c160 = arith.constant 160 : index
    %152 = vector.load %arg8[%c0_136, %c0_137, %c160] : memref<1x8x256xf32, #tpu.memory_space<vmem>>, vector<1x8x16xf32>
    %153 = vector.shape_cast %152 : vector<1x8x16xf32> to vector<8x16xf32>
    %154 = vector.shape_cast %151 : vector<8x16xf32> to vector<1x8x16xf32>
    tpu.vector_store %arg8[%c0_136, %c0_137, %c160], %154 {strides = array<i32>} : memref<1x8x256xf32, #tpu.memory_space<vmem>>, vector<1x8x16xf32>,
    %155 = vector.extract_strided_slice %110 {offsets = [0, 217], sizes = [8, 16], strides = [1, 1]} : vector<8x384xf32> to vector<8x16xf32>
    %c0_138 = arith.constant 0 : index
    %c0_139 = arith.constant 0 : index
    %c176 = arith.constant 176 : index
    %156 = vector.load %arg8[%c0_138, %c0_139, %c176] : memref<1x8x256xf32, #tpu.memory_space<vmem>>, vector<1x8x16xf32>
    %157 = vector.shape_cast %156 : vector<1x8x16xf32> to vector<8x16xf32>
    %158 = vector.shape_cast %155 : vector<8x16xf32> to vector<1x8x16xf32>
    tpu.vector_store %arg8[%c0_138, %c0_139, %c176], %158 {strides = array<i32>} : memref<1x8x256xf32, #tpu.memory_space<vmem>>, vector<1x8x16xf32>,
    %159 = vector.extract_strided_slice %110 {offsets = [0, 235], sizes = [8, 16], strides = [1, 1]} : vector<8x384xf32> to vector<8x16xf32>
    %c0_140 = arith.constant 0 : index
    %c0_141 = arith.constant 0 : index
    %c192 = arith.constant 192 : index
    %160 = vector.load %arg8[%c0_140, %c0_141, %c192] : memref<1x8x256xf32, #tpu.memory_space<vmem>>, vector<1x8x16xf32>
    %161 = vector.shape_cast %160 : vector<1x8x16xf32> to vector<8x16xf32>
    %162 = vector.shape_cast %159 : vector<8x16xf32> to vector<1x8x16xf32>
    tpu.vector_store %arg8[%c0_140, %c0_141, %c192], %162 {strides = array<i32>} : memref<1x8x256xf32, #tpu.memory_space<vmem>>, vector<1x8x16xf32>,
    %163 = vector.extract_strided_slice %110 {offsets = [0, 253], sizes = [8, 16], strides = [1, 1]} : vector<8x384xf32> to vector<8x16xf32>
    %c0_142 = arith.constant 0 : index
    %c0_143 = arith.constant 0 : index
    %c208 = arith.constant 208 : index
    %164 = vector.load %arg8[%c0_142, %c0_143, %c208] : memref<1x8x256xf32, #tpu.memory_space<vmem>>, vector<1x8x16xf32>
    %165 = vector.shape_cast %164 : vector<1x8x16xf32> to vector<8x16xf32>
    %166 = vector.shape_cast %163 : vector<8x16xf32> to vector<1x8x16xf32>
    tpu.vector_store %arg8[%c0_142, %c0_143, %c208], %166 {strides = array<i32>} : memref<1x8x256xf32, #tpu.memory_space<vmem>>, vector<1x8x16xf32>,
    %167 = vector.extract_strided_slice %110 {offsets = [0, 271], sizes = [8, 16], strides = [1, 1]} : vector<8x384xf32> to vector<8x16xf32>
    %c0_144 = arith.constant 0 : index
    %c0_145 = arith.constant 0 : index
    %c224 = arith.constant 224 : index
    %168 = vector.load %arg8[%c0_144, %c0_145, %c224] : memref<1x8x256xf32, #tpu.memory_space<vmem>>, vector<1x8x16xf32>
    %169 = vector.shape_cast %168 : vector<1x8x16xf32> to vector<8x16xf32>
    %170 = vector.shape_cast %167 : vector<8x16xf32> to vector<1x8x16xf32>
    tpu.vector_store %arg8[%c0_144, %c0_145, %c224], %170 {strides = array<i32>} : memref<1x8x256xf32, #tpu.memory_space<vmem>>, vector<1x8x16xf32>,
    %171 = vector.extract_strided_slice %110 {offsets = [0, 289], sizes = [8, 16], strides = [1, 1]} : vector<8x384xf32> to vector<8x16xf32>
    %c0_146 = arith.constant 0 : index
    %c0_147 = arith.constant 0 : index
    %c240 = arith.constant 240 : index
    %172 = vector.load %arg8[%c0_146, %c0_147, %c240] : memref<1x8x256xf32, #tpu.memory_space<vmem>>, vector<1x8x16xf32>
    %173 = vector.shape_cast %172 : vector<1x8x16xf32> to vector<8x16xf32>
    %174 = vector.shape_cast %171 : vector<8x16xf32> to vector<1x8x16xf32>
    tpu.vector_store %arg8[%c0_146, %c0_147, %c240], %174 {strides = array<i32>} : memref<1x8x256xf32, #tpu.memory_space<vmem>>, vector<1x8x16xf32>,
    return
  }
  func.func @transform_0(%arg0: i32) -> (i32, i32, i32) {
    %c0_i32 = arith.constant 0 : i32
    %c0_i32_0 = arith.constant 0 : i32
    %c0_i32_1 = arith.constant 0 : i32
    return %arg0, %c0_i32, %c0_i32_0 : i32, i32, i32
  }
  func.func @transform_1(%arg0: i32) -> (i32, i32, i32) {
    %c0_i32 = arith.constant 0 : i32
    %c0_i32_0 = arith.constant 0 : i32
    %c0_i32_1 = arith.constant 0 : i32
    return %arg0, %c0_i32, %c0_i32_0 : i32, i32, i32
  }
  func.func @transform_2(%arg0: i32) -> (i32, i32, i32) {
    %c0_i32 = arith.constant 0 : i32
    %c0_i32_0 = arith.constant 0 : i32
    %c0_i32_1 = arith.constant 0 : i32
    %c0_i32_2 = arith.constant 0 : i32
    return %c0_i32, %c0_i32_0, %c0_i32_1 : i32, i32, i32
  }
  func.func @transform_3(%arg0: i32) -> (i32, i32) {
    %c0_i32 = arith.constant 0 : i32
    %c0_i32_0 = arith.constant 0 : i32
    %c0_i32_1 = arith.constant 0 : i32
    return %c0_i32, %c0_i32_0 : i32, i32
  }
  func.func @transform_4(%arg0: i32) -> (i32, i32, i32) {
    %c0_i32 = arith.constant 0 : i32
    %c0_i32_0 = arith.constant 0 : i32
    %c0_i32_1 = arith.constant 0 : i32
    %c0_i32_2 = arith.constant 0 : i32
    return %c0_i32, %c0_i32_0, %c0_i32_1 : i32, i32, i32
  }
  func.func @transform_5(%arg0: i32) -> (i32, i32) {
    %c0_i32 = arith.constant 0 : i32
    %c0_i32_0 = arith.constant 0 : i32
    %c0_i32_1 = arith.constant 0 : i32
    return %c0_i32, %c0_i32_0 : i32, i32
  }
  func.func @transform_6(%arg0: i32) -> (i32, i32) {
    %c0_i32 = arith.constant 0 : i32
    %c0_i32_0 = arith.constant 0 : i32
    %c0_i32_1 = arith.constant 0 : i32
    return %c0_i32, %c0_i32_0 : i32, i32
  }
  func.func @transform_7(%arg0: i32) -> (i32, i32, i32) {
    %c0_i32 = arith.constant 0 : i32
    %c0_i32_0 = arith.constant 0 : i32
    %c0_i32_1 = arith.constant 0 : i32
    return %arg0, %c0_i32, %c0_i32_0 : i32, i32, i32
  }
}

</mosaic_0001>

<llo_original>
// kernel: tpu_custom_call.1
$region0: #{tpu_custom_call.1}
  #allocation0 [shape = 'u32[]', space=smem, size = 0x4, offset = 0x4, fixed_abs, tag = 'smem constant byte address 0x4 - core index']
  #allocation1 [shape = 'u32[144,128]{1,0:T(1,128)}', space=vmem, size = 0x12000, scoped, tag = 'internal scratch']
  #allocation2 [shape = 'bf16[8,422]{1,0:T(8,128)(2,1)}', space=vmem, size = 0x2000, scoped, tag = 'scratch operand']
  %s0 = inlined_call_operand.vmem [shape: bf16[2,4,324], index: 0, kind: input, shape index: {}]
  %s1 = inlined_call_operand.vmem [shape: bf16[2,4,324], index: 1, kind: input, shape index: {}]
  %s2 = inlined_call_operand.vmem [shape: bf16[9,8,8], index: 2, kind: input, shape index: {}]
  %s3 = inlined_call_operand.vmem [shape: f32[8,1], index: 3, kind: input, shape index: {}]
  %s4 = inlined_call_operand.vmem [shape: bf16[9,8,8], index: 4, kind: input, shape index: {}]
  %s5 = inlined_call_operand.vmem [shape: f32[8,1], index: 5, kind: input, shape index: {}]
  %s6 = inlined_call_operand.vmem [shape: f32[1,384], index: 6, kind: input, shape index: {}]
  %s7 = inlined_call_operand.hbm [shape: f32[2,8,256], index: 7, kind: output, shape index: {}]
  %s8 = sld [smem:[#allocation0]]
  $region61: #{tpu_custom_call.1} parent=0
    _
  %s10 = ssub.s32 1, %s8
  %s11 = scalar_select 0, %s10, %s8
  $region1: #{tpu_custom_call.1} parent=0
    #allocation3 [shape = 'u8[16384]{0}', space=vmem, size = 0x4000, scoped, tag = 'output window, operand 0']
    #allocation4 [shape = 's32[2]{0}', space=sflag, size = 0x8, scoped, tag = 'scoped memory for tpu_custom_call.1']
    %12 = vsyncpa [#allocation4], 0
    %s13 = scalar_lea.sflag [#allocation4], 1
    %14 = vsyncpa %s13, 0
    loop: start=0, step=1, limit=4
    $region2: #{tpu_custom_call.1} parent=1 // loop_pre_header
      _
    $region3: #{tpu_custom_call.1} parent=1 // loop_header
      %s16 = sphi 0, %s20
      %p17 = scmp.ge.s32.totalorder %s16, 4
      %s26 = sphi 0, %s28
      %s29 = sphi 0, %s26
      %s30 = sphi 0, %s29
      %s46 = sphi 0, %s30
      %s52 = sphi 0, %s54
      %s55 = sphi 0, %s52
      %s56 = sphi 0, %s55
      %s72 = sphi 0, %s56
      %s76 = sphi 0, %s76
      %s78 = sphi 0, %s76
      %s79 = sphi 0, %s78
      %s93 = sphi 0, %s79
      %s97 = sphi 0, %s97
      %s99 = sphi 0, %s97
      %s100 = sphi 0, %s99
      %s114 = sphi 0, %s100
      %s118 = sphi 0, %s118
      %s120 = sphi 0, %s118
      %s121 = sphi 0, %s120
      %s135 = sphi 0, %s121
      %s139 = sphi 0, %s139
      %s141 = sphi 0, %s139
      %s142 = sphi 0, %s141
      %s156 = sphi 0, %s142
      %s160 = sphi 0, %s160
      %s162 = sphi 0, %s160
      %s163 = sphi 0, %s162
      %s177 = sphi 0, %s163
      %s183 = sphi 0, %s185
      %s186 = sphi 0, %s183
      %s187 = sphi 0, %s186
      %s203 = sphi 0, %s187
    $region4: #{tpu_custom_call.1} parent=1 // loop_header_branch
      %19 = sbr.rel (%p17) target = $region8
    $region5: #{tpu_custom_call.1} parent=1 // loop_body
      %s21 = ssub.s32 %s16, 1
      %s22 = ssub.s32 %s16, 2
      %s23 = sadd.s32 %s16, 1
      %s24 = ssub.s32 %s16, %s23
      %p25 = scmp.eq.s32.totalorder %s24, 0
      %s27 = sadd.s32 %s26, 1
      %s28 = scalar_select %p25, %s26, %s27
      %p31 = pneg %p25
      %p32 = scmp.eq.s32.totalorder %s16, 1
      %p33 = por %p31, %p32
      %p34 = scmp.ne.s32.totalorder %s26, %s29
      %p35 = scmp.eq.s32.totalorder %s16, 0
      %p36 = por %p34, %p35
      %p37 = scmp.ne.s32.totalorder %s26, %s29
      %p38 = scmp.eq.s32.totalorder %s21, 1
      %p39 = por %p37, %p38
      %p40 = scmp.ne.s32.totalorder %s29, %s30
      %p41 = scmp.eq.s32.totalorder %s21, 0
      %p42 = por %p40, %p41
      %p43 = scmp.ne.s32.totalorder %s29, %s30
      %p44 = scmp.eq.s32.totalorder %s22, 1
      %p45 = por %p43, %p44
      %p47 = scmp.ne.s32.totalorder %s30, %s46
      %p48 = scmp.eq.s32.totalorder %s22, 0
      %p49 = por %p47, %p48
      %s50 = ssub.s32 %s16, %s23
      %p51 = scmp.eq.s32.totalorder %s50, 0
      %s53 = sadd.s32 %s52, 1
      %s54 = scalar_select %p51, %s52, %s53
      %p57 = pneg %p51
      %p58 = scmp.eq.s32.totalorder %s16, 1
      %p59 = por %p57, %p58
      %p60 = scmp.ne.s32.totalorder %s52, %s55
      %p61 = scmp.eq.s32.totalorder %s16, 0
      %p62 = por %p60, %p61
      %p63 = scmp.ne.s32.totalorder %s52, %s55
      %p64 = scmp.eq.s32.totalorder %s21, 1
      %p65 = por %p63, %p64
      %p66 = scmp.ne.s32.totalorder %s55, %s56
      %p67 = scmp.eq.s32.totalorder %s21, 0
      %p68 = por %p66, %p67
      %p69 = scmp.ne.s32.totalorder %s55, %s56
      %p70 = scmp.eq.s32.totalorder %s22, 1
      %p71 = por %p69, %p70
      %p73 = scmp.ne.s32.totalorder %s56, %s72
      %p74 = scmp.eq.s32.totalorder %s22, 0
      %p75 = por %p73, %p74
      %s77 = sadd.s32 %s76, 1
      %p80 = scmp.eq.s32.totalorder %s16, 1
      %p81 = scmp.ne.s32.totalorder %s76, %s78
      %p82 = scmp.eq.s32.totalorder %s16, 0
      %p83 = por %p81, %p82
      %p84 = scmp.ne.s32.totalorder %s76, %s78
      %p85 = scmp.eq.s32.totalorder %s21, 1
      %p86 = por %p84, %p85
      %p87 = scmp.ne.s32.totalorder %s78, %s79
      %p88 = scmp.eq.s32.totalorder %s21, 0
      %p89 = por %p87, %p88
      %p90 = scmp.ne.s32.totalorder %s78, %s79
      %p91 = scmp.eq.s32.totalorder %s22, 1
      %p92 = por %p90, %p91
      %p94 = scmp.ne.s32.totalorder %s79, %s93
      %p95 = scmp.eq.s32.totalorder %s22, 0
      %p96 = por %p94, %p95
      %s98 = sadd.s32 %s97, 1
      %p101 = scmp.eq.s32.totalorder %s16, 1
      %p102 = scmp.ne.s32.totalorder %s97, %s99
      %p103 = scmp.eq.s32.totalorder %s16, 0
      %p104 = por %p102, %p103
      %p105 = scmp.ne.s32.totalorder %s97, %s99
      %p106 = scmp.eq.s32.totalorder %s21, 1
      %p107 = por %p105, %p106
      %p108 = scmp.ne.s32.totalorder %s99, %s100
      %p109 = scmp.eq.s32.totalorder %s21, 0
      %p110 = por %p108, %p109
      %p111 = scmp.ne.s32.totalorder %s99, %s100
      %p112 = scmp.eq.s32.totalorder %s22, 1
      %p113 = por %p111, %p112
      %p115 = scmp.ne.s32.totalorder %s100, %s114
      %p116 = scmp.eq.s32.totalorder %s22, 0
      %p117 = por %p115, %p116
      %s119 = sadd.s32 %s118, 1
      %p122 = scmp.eq.s32.totalorder %s16, 1
      %p123 = scmp.ne.s32.totalorder %s118, %s120
      %p124 = scmp.eq.s32.totalorder %s16, 0
      %p125 = por %p123, %p124
      %p126 = scmp.ne.s32.totalorder %s118, %s120
      %p127 = scmp.eq.s32.totalorder %s21, 1
      %p128 = por %p126, %p127
      %p129 = scmp.ne.s32.totalorder %s120, %s121
      %p130 = scmp.eq.s32.totalorder %s21, 0
      %p131 = por %p129, %p130
      %p132 = scmp.ne.s32.totalorder %s120, %s121
      %p133 = scmp.eq.s32.totalorder %s22, 1
      %p134 = por %p132, %p133
      %p136 = scmp.ne.s32.totalorder %s121, %s135
      %p137 = scmp.eq.s32.totalorder %s22, 0
      %p138 = por %p136, %p137
      %s140 = sadd.s32 %s139, 1
      %p143 = scmp.eq.s32.totalorder %s16, 1
      %p144 = scmp.ne.s32.totalorder %s139, %s141
      %p145 = scmp.eq.s32.totalorder %s16, 0
      %p146 = por %p144, %p145
      %p147 = scmp.ne.s32.totalorder %s139, %s141
      %p148 = scmp.eq.s32.totalorder %s21, 1
      %p149 = por %p147, %p148
      %p150 = scmp.ne.s32.totalorder %s141, %s142
      %p151 = scmp.eq.s32.totalorder %s21, 0
      %p152 = por %p150, %p151
      %p153 = scmp.ne.s32.totalorder %s141, %s142
      %p154 = scmp.eq.s32.totalorder %s22, 1
      %p155 = por %p153, %p154
      %p157 = scmp.ne.s32.totalorder %s142, %s156
      %p158 = scmp.eq.s32.totalorder %s22, 0
      %p159 = por %p157, %p158
      %s161 = sadd.s32 %s160, 1
      %p164 = scmp.eq.s32.totalorder %s16, 1
      %p165 = scmp.ne.s32.totalorder %s160, %s162
      %p166 = scmp.eq.s32.totalorder %s16, 0
      %p167 = por %p165, %p166
      %p168 = scmp.ne.s32.totalorder %s160, %s162
      %p169 = scmp.eq.s32.totalorder %s21, 1
      %p170 = por %p168, %p169
      %p171 = scmp.ne.s32.totalorder %s162, %s163
      %p172 = scmp.eq.s32.totalorder %s21, 0
      %p173 = por %p171, %p172
      %p174 = scmp.ne.s32.totalorder %s162, %s163
      %p175 = scmp.eq.s32.totalorder %s22, 1
      %p176 = por %p174, %p175
      %p178 = scmp.ne.s32.totalorder %s163, %s177
      %p179 = scmp.eq.s32.totalorder %s22, 0
      %p180 = por %p178, %p179
      %s181 = ssub.s32 %s16, %s23
      %p182 = scmp.eq.s32.totalorder %s181, 0
      %s184 = sadd.s32 %s183, 1
      %s185 = scalar_select %p182, %s183, %s184
      %p188 = pneg %p182
      %p189 = scmp.eq.s32.totalorder %s16, 1
      %p190 = por %p188, %p189
      %p191 = scmp.ne.s32.totalorder %s183, %s186
      %p192 = scmp.eq.s32.totalorder %s16, 0
      %p193 = por %p191, %p192
      %p194 = scmp.ne.s32.totalorder %s183, %s186
      %p195 = scmp.eq.s32.totalorder %s21, 1
      %p196 = por %p194, %p195
      %p197 = scmp.ne.s32.totalorder %s186, %s187
      %p198 = scmp.eq.s32.totalorder %s21, 0
      %p199 = por %p197, %p198
      %p200 = scmp.ne.s32.totalorder %s186, %s187
      %p201 = scmp.eq.s32.totalorder %s22, 1
      %p202 = por %p200, %p201
      %p204 = scmp.ne.s32.totalorder %s187, %s203
      %p205 = scmp.eq.s32.totalorder %s22, 0
      %p206 = por %p204, %p205
      %p207 = scmp.le.s32.totalorder 1, %s16
      %p208 = scmp.lt.s32.totalorder %s16, 3
      %p209 = pnand %p207, %p208
      %p210 = pneg %p209
      // Predicated region
      $region9: #{tpu_custom_call.1} parent=5 // pred_check
        _
      $region10: #{tpu_custom_call.1} parent=5 // pred_check_branch
        %212 = sbr.rel (%p209) target = $region12
      $region11: #{tpu_custom_call.1} parent=5 // pred_region
        %s213 = ssub.s32 %s16, 1
        // Predicated region
        $region13: #{tpu_custom_call.1} parent=11 // pred_check
          %p214 = pneg %p89
        $region14: #{tpu_custom_call.1} parent=11 // pred_check_branch
          %216 = sbr.rel (%p214) target = $region16
        $region15: #{tpu_custom_call.1} parent=11 // pred_region
          _
        $region16: #{tpu_custom_call.1} parent=11 // pred_fallthru
          _
        // Predicated region
        $region17: #{tpu_custom_call.1} parent=11 // pred_check
          %p217 = pneg %p110
        $region18: #{tpu_custom_call.1} parent=11 // pred_check_branch
          %219 = sbr.rel (%p217) target = $region20
        $region19: #{tpu_custom_call.1} parent=11 // pred_region
          _
        $region20: #{tpu_custom_call.1} parent=11 // pred_fallthru
          _
        // Predicated region
        $region21: #{tpu_custom_call.1} parent=11 // pred_check
          %p220 = pneg %p131
        $region22: #{tpu_custom_call.1} parent=11 // pred_check_branch
          %222 = sbr.rel (%p220) target = $region24
        $region23: #{tpu_custom_call.1} parent=11 // pred_region
          _
        $region24: #{tpu_custom_call.1} parent=11 // pred_fallthru
          _
        // Predicated region
        $region25: #{tpu_custom_call.1} parent=11 // pred_check
          %p223 = pneg %p152
        $region26: #{tpu_custom_call.1} parent=11 // pred_check_branch
          %225 = sbr.rel (%p223) target = $region28
        $region27: #{tpu_custom_call.1} parent=11 // pred_region
          _
        $region28: #{tpu_custom_call.1} parent=11 // pred_fallthru
          _
        // Predicated region
        $region29: #{tpu_custom_call.1} parent=11 // pred_check
          %p226 = pneg %p173
        $region30: #{tpu_custom_call.1} parent=11 // pred_check_branch
          %228 = sbr.rel (%p226) target = $region32
        $region31: #{tpu_custom_call.1} parent=11 // pred_region
          _
        $region32: #{tpu_custom_call.1} parent=11 // pred_fallthru
          _
      $region12: #{tpu_custom_call.1} parent=5 // pred_fallthru
        _
      %p229 = scmp.lt.s32.totalorder %s16, 2
      // Predicated region
      $region33: #{tpu_custom_call.1} parent=5 // pred_check
        %p230 = pneg %p229
      $region34: #{tpu_custom_call.1} parent=5 // pred_check_branch
        %232 = sbr.rel (%p230) target = $region36
      $region35: #{tpu_custom_call.1} parent=5 // pred_region
        // Predicated region
        $region37: #{tpu_custom_call.1} parent=35 // pred_check
          %p233 = pneg %p36
        $region38: #{tpu_custom_call.1} parent=35 // pred_check_branch
          %235 = sbr.rel (%p233) target = $region40
        $region39: #{tpu_custom_call.1} parent=35 // pred_region
          %p236 = scmp.lt.s32.totalorder %s16, 1
          %s237 = scalar_select %p236, %s16, 1
          %s238 = smul.addr %s237, 3
          %s239 = smul.addr %s238, 2
          %s240 = scalar_lea.vmem %s0, %s239
        $region40: #{tpu_custom_call.1} parent=35 // pred_fallthru
          _
        // Predicated region
        $region41: #{tpu_custom_call.1} parent=35 // pred_check
          %p241 = pneg %p62
        $region42: #{tpu_custom_call.1} parent=35 // pred_check_branch
          %243 = sbr.rel (%p241) target = $region44
        $region43: #{tpu_custom_call.1} parent=35 // pred_region
          %p244 = scmp.lt.s32.totalorder %s16, 1
          %s245 = scalar_select %p244, %s16, 1
          %s246 = smul.addr %s245, 3
          %s247 = smul.addr %s246, 2
          %s248 = scalar_lea.vmem %s1, %s247
        $region44: #{tpu_custom_call.1} parent=35 // pred_fallthru
          _
      $region36: #{tpu_custom_call.1} parent=5 // pred_fallthru
        _
      %p249 = scmp.le.s32.totalorder 1, %s16
      %p250 = scmp.lt.s32.totalorder %s16, 3
      %p251 = pnand %p249, %p250
      %p252 = pneg %p251
      // Predicated region
      $region45: #{tpu_custom_call.1} parent=5 // pred_check
        _
      $region46: #{tpu_custom_call.1} parent=5 // pred_check_branch
        %254 = sbr.rel (%p251) target = $region48
      $region47: #{tpu_custom_call.1} parent=5 // pred_region
        %s255 = ssub.s32 %s16, 1
        %p256 = scmp.lt.s32.totalorder %s21, 1
        %s257 = scalar_select %p256, %s21, 1
        %s258 = smul.addr %s257, 3
        %s259 = smul.addr %s258, 2
        %s260 = scalar_lea.vmem %s0, %s259
        %p261 = pneg %p42
        %p262 = pneg %p39
        %p263 = scmp.lt.s32.totalorder %s21, 1
        %s264 = scalar_select %p263, %s21, 1
        %s265 = smul.addr %s264, 3
        %s266 = smul.addr %s265, 2
        %s267 = scalar_lea.vmem %s1, %s266
        %p268 = pneg %p68
        %p269 = pneg %p65
        %p270 = pneg %p89
        %p271 = pneg %p86
        %p272 = pneg %p110
        %p273 = pneg %p107
        %p274 = pneg %p131
        %p275 = pneg %p128
        %p276 = pneg %p152
        %p277 = pneg %p149
        %p278 = pneg %p173
        %p279 = pneg %p170
        %p280 = pneg %p199
        %p281 = pneg %p196
        %s282 = sand.u32 %s186, 1
        %s283 = scalar_lea.sflag [#allocation4], %s282
        %s284 = sand.u32 %s186, 1
        %s285 = smul.addr %s284, 16
        %s286 = scalar_lea.vmem [#allocation3], %s285
        %p287 = scmp.lt.s32.totalorder %s21, 1
        %s288 = scalar_select %p287, %s21, 1
        %s289 = smul.addr %s288, 3
        %s290 = smul.addr %s289, 2
        %s291 = scalar_lea.vmem %s0, %s290
        %p292 = scmp.lt.s32.totalorder %s21, 1
        %s293 = scalar_select %p292, %s21, 1
        %s294 = smul.addr %s293, 3
        %s295 = smul.addr %s294, 2
        %s296 = scalar_lea.vmem %s1, %s295
        %298 = vst [vmem:[#allocation2] sm:$0xff] 0
        %vm299 = vcmask 1043456
        %vm300 = vcmask 310276
        %vm301 = vmor %vm300, %vm299
        %302 = vst.msk [vmem:[#allocation2 + $0x8] sm:$0xff] %vm301, 0
        %v303 = vld [vmem:[%s291] sm:$0x3f]
        %v305 = vcombine.high %v303, %v303
        %v307 = vunpack.c.l.s4 1983009808
        %v308 = vunpack.c.0.s8 %v307
        %v309 = vlaneseq
        %v310 = vshrl.u32 %v309, 7
        %v311 = vsub.s32 %v308, %v310
        %v312 = vrot.slane %v303, %v311
        %v314 = vunpack.c.l.s4 1983009808
        %v315 = vunpack.c.0.s8 %v314
        %v316 = vlaneseq
        %v317 = vshrl.u32 %v316, 7
        %v318 = vsub.s32 %v315, %v317
        %v319 = vrot.slane %v305, %v318
        %320 = vrot.lane.b32.xlu0 %v312, 19
        %v321 = vpop.permute.xlu0 %320
        %322 = vrot.lane.b32.xlu0 %v319, 19
        %v323 = vpop.permute.xlu0 %322
        %v324 = vrot.slane %v321, 4
        %vm325 = vcmask 154624
        %v326 = vsel %vm325, %v324, %v321
        %v327 = vsel %vm325, %v324, %v323
        %vm330 = vcmask 1041560
        %vm331 = vcmask 1045508
        %vm332 = vmor %vm331, %vm330
        %333 = vst.msk [vmem:[#allocation2] sm:$0x33] %vm332, %v326
        %vm334 = vcmask 705536
        %335 = vst.msk [vmem:[#allocation2 + $0x8] sm:$0x3] %vm334, %v327
        %v336 = vld [vmem:[%s296] sm:$0x3f]
        %v338 = vcombine.low %v336, %v336
        %v340 = vunpack.c.l.s4 1983009808
        %v341 = vunpack.c.0.s8 %v340
        %v342 = vlaneseq
        %v343 = vshrl.u32 %v342, 7
        %v344 = vsub.s32 %v341, %v343
        %v345 = vrot.slane %v338, %v344
        %v347 = vunpack.c.l.s4 1983009808
        %v348 = vunpack.c.0.s8 %v347
        %v349 = vlaneseq
        %v350 = vshrl.u32 %v349, 7
        %v351 = vsub.s32 %v348, %v350
        %v352 = vrot.slane %v336, %v351
        %353 = vrot.lane.b32.xlu0 %v345, 19
        %v354 = vpop.permute.xlu0 %353
        %355 = vrot.lane.b32.xlu0 %v352, 19
        %v356 = vpop.permute.xlu0 %355
        %v357 = vrot.slane %v354, 4
        %v358 = vsel %vm325, %v357, %v354
        %v359 = vsel %vm325, %v357, %v356
        %vm362 = vcmask 1043610
        %vm363 = vcmask 1047558
        %vm364 = vmor %vm363, %vm362
        %365 = vst.msk [vmem:[#allocation2] sm:$0xcc] %vm364, %v358
        %vm366 = vcmask 707586
        %367 = vst.msk [vmem:[#allocation2 + $0x8] sm:$0xc] %vm366, %v359
        %v368 = vld [vmem:[#allocation2] sm:$0xff]
        %v369 = vld [vmem:[#allocation2 + $0x8] sm:$0xf]
        %v370 = vld [vmem:[%s2] sm:$0xf]
        %v371 = vld [vmem:[#allocation2 + $0x8] sm:$0xff]
        %s372 = scalar_lea.vmem %s2, 4
        %v373 = vld [vmem:[%s372] sm:$0xf]
        %v376 = vunpack.c.l.b16 %v368
        %v377 = vunpack.c.h.b16 %v368
        %v378 = vunpack.c.l.b16 %v371
        %v379 = vunpack.c.h.b16 %v371
        %v380 = vpack.c.b16 %v376, %v376
        %v381 = vpack.c.b16 %v377, %v377
        %v382 = vpack.c.b16 %v378, %v378
        %v383 = vpack.c.b16 %v379, %v379
        %384 = vrot.lane.b32.xlu0 %v380, 127
        %v385 = vpop.permute.xlu0 %384
        %386 = vrot.lane.b32.xlu0 %v381, 127
        %v387 = vpop.permute.xlu0 %386
        %388 = vrot.lane.b32.xlu0 %v382, 127
        %v389 = vpop.permute.xlu0 %388
        %390 = vrot.lane.b32.xlu0 %v383, 127
        %v391 = vpop.permute.xlu0 %390
        %vm392 = vcmask 1039360
        %v393 = vsel %vm392, %v385, %v387
        %v394 = vsel %vm392, %v387, %v389
        %v395 = vsel %vm392, %v389, %v391
        %vm396 = vcmask 64512
        %v398 = vsel %vm396, %v373, 0
        %v401 = vsel %vm299, %v393, 0
        %v404 = vsel %vm299, %v394, 0
        %v407 = vsel %vm299, %v395, 0
        %409 = vmatprep.subr.bf16.mxu0 %v404
        %410 = vmatpush1.bf16.msra.mxu0 %v401
        %411 = vmatprep.subr.bf16.mxu0 0
        %412 = vmatpush1.bf16.msra.mxu0 0
        %413 = vmatprep.subr.bf16.mxu0 0
        %414 = vmatpush1.bf16.msra.mxu0 0
        %415 = vmatprep.subr.bf16.mxu0 0
        %416 = vmatpush1.bf16.msra.mxu0 0
        %417 = vmatprep.subr.bf16.mxu0 0
        %418 = vmatpush1.bf16.msra.mxu0 0
        %419 = vmatprep.subr.bf16.mxu0 0
        %420 = vmatpush1.bf16.msra.mxu0 0
        %421 = vmatprep.subr.bf16.mxu0 0
        %422 = vmatpush1.bf16.msra.mxu0 0
        %423 = vmatprep.subr.bf16.mxu0 0
        %424 = vmatpush1.bf16.msra.mxu0 0
        %425 = vmatprep.subr.bf16.mxu0 0
        %426 = vmatpush1.bf16.msra.mxu0 0
        %427 = vmatprep.subr.bf16.mxu0 0
        %428 = vmatpush1.bf16.msra.mxu0 0
        %429 = vmatprep.subr.bf16.mxu0 0
        %430 = vmatpush1.bf16.msra.mxu0 0
        %431 = vmatprep.subr.bf16.mxu0 0
        %432 = vmatpush1.bf16.msra.mxu0 0
        %433 = vmatprep.subr.bf16.mxu0 0
        %434 = vmatpush1.bf16.msra.mxu0 0
        %435 = vmatprep.subr.bf16.mxu0 0
        %436 = vmatpush1.bf16.msra.mxu0 0
        %437 = vmatprep.subr.bf16.mxu0 0
        %438 = vmatpush1.bf16.msra.mxu0 0
        %439 = vmatprep.subr.bf16.mxu0 0
        %440 = vmatpush1.bf16.msra.mxu0 0
        %441 = vmatprep.mubr.bf16.mxu0 0
        %442 = vmatmul.mubr.bf16.gmra.mrb[0].mxu0 %v398
        %v443 = vpop.f32.mrb[0].mxu0
        %v444 = vadd.f32 0.0, %v443
        %v445 = vpop.f32.mrb[0].mxu0
        %v446 = vadd.f32 0.0, %v445
        %v447 = vpop.f32.mrb[0].mxu0
        %v448 = vpop.f32.mrb[0].mxu0
        %449 = vdwg.mxu0
        %450 = vmatprep.subr.bf16.mxu0 0
        %451 = vmatpush1.bf16.msra.mxu0 %v407
        %452 = vmatprep.subr.bf16.mxu0 0
        %453 = vmatpush1.bf16.msra.mxu0 0
        %454 = vmatprep.subr.bf16.mxu0 0
        %455 = vmatpush1.bf16.msra.mxu0 0
        %456 = vmatprep.subr.bf16.mxu0 0
        %457 = vmatpush1.bf16.msra.mxu0 0
        %458 = vmatprep.subr.bf16.mxu0 0
        %459 = vmatpush1.bf16.msra.mxu0 0
        %460 = vmatprep.subr.bf16.mxu0 0
        %461 = vmatpush1.bf16.msra.mxu0 0
        %462 = vmatprep.subr.bf16.mxu0 0
        %463 = vmatpush1.bf16.msra.mxu0 0
        %464 = vmatprep.subr.bf16.mxu0 0
        %465 = vmatpush1.bf16.msra.mxu0 0
        %466 = vmatprep.subr.bf16.mxu0 0
        %467 = vmatpush1.bf16.msra.mxu0 0
        %468 = vmatprep.subr.bf16.mxu0 0
        %469 = vmatpush1.bf16.msra.mxu0 0
        %470 = vmatprep.subr.bf16.mxu0 0
        %471 = vmatpush1.bf16.msra.mxu0 0
        %472 = vmatprep.subr.bf16.mxu0 0
        %473 = vmatpush1.bf16.msra.mxu0 0
        %474 = vmatprep.subr.bf16.mxu0 0
        %475 = vmatpush1.bf16.msra.mxu0 0
        %476 = vmatprep.subr.bf16.mxu0 0
        %477 = vmatpush1.bf16.msra.mxu0 0
        %478 = vmatprep.subr.bf16.mxu0 0
        %479 = vmatpush1.bf16.msra.mxu0 0
        %480 = vmatprep.subr.bf16.mxu0 0
        %481 = vmatpush1.bf16.msra.mxu0 0
        %482 = vmatprep.mubr.bf16.mxu0 0
        %483 = vmatmul.mubr.bf16.gmra.mrb[0].mxu0 %v398
        %v484 = vpop.f32.mrb[0].mxu0
        %v485 = vadd.f32 0.0, %v484
        %v486 = vpop.f32.mrb[0].mxu0
        %v487 = vpop.f32.mrb[0].mxu0
        %v488 = vpop.f32.mrb[0].mxu0
        %489 = vdwg.mxu0
        %v491 = vunpack.c.l.b16 %v369
        %v492 = vpack.c.b16 %v491, %v491
        %v494 = vsel %vm396, %v370, 0
        %v497 = vsel %vm299, %v380, 0
        %v500 = vsel %vm299, %v381, 0
        %v503 = vsel %vm299, %v492, 0
        %505 = vmatprep.subr.bf16.mxu0 %v500
        %506 = vmatpush1.bf16.msra.mxu0 %v497
        %507 = vmatprep.subr.bf16.mxu0 0
        %508 = vmatpush1.bf16.msra.mxu0 0
        %509 = vmatprep.subr.bf16.mxu0 0
        %510 = vmatpush1.bf16.msra.mxu0 0
        %511 = vmatprep.subr.bf16.mxu0 0
        %512 = vmatpush1.bf16.msra.mxu0 0
        %513 = vmatprep.subr.bf16.mxu0 0
        %514 = vmatpush1.bf16.msra.mxu0 0
        %515 = vmatprep.subr.bf16.mxu0 0
        %516 = vmatpush1.bf16.msra.mxu0 0
        %517 = vmatprep.subr.bf16.mxu0 0
        %518 = vmatpush1.bf16.msra.mxu0 0
        %519 = vmatprep.subr.bf16.mxu0 0
        %520 = vmatpush1.bf16.msra.mxu0 0
        %521 = vmatprep.subr.bf16.mxu0 0
        %522 = vmatpush1.bf16.msra.mxu0 0
        %523 = vmatprep.subr.bf16.mxu0 0
        %524 = vmatpush1.bf16.msra.mxu0 0
        %525 = vmatprep.subr.bf16.mxu0 0
        %526 = vmatpush1.bf16.msra.mxu0 0
        %527 = vmatprep.subr.bf16.mxu0 0
        %528 = vmatpush1.bf16.msra.mxu0 0
        %529 = vmatprep.subr.bf16.mxu0 0
        %530 = vmatpush1.bf16.msra.mxu0 0
        %531 = vmatprep.subr.bf16.mxu0 0
        %532 = vmatpush1.bf16.msra.mxu0 0
        %533 = vmatprep.subr.bf16.mxu0 0
        %534 = vmatpush1.bf16.msra.mxu0 0
        %535 = vmatprep.subr.bf16.mxu0 0
        %536 = vmatpush1.bf16.msra.mxu0 0
        %537 = vmatprep.mubr.bf16.mxu0 0
        %538 = vmatmul.mubr.bf16.gmra.mrb[0].mxu0 %v494
        %v539 = vpop.f32.mrb[0].mxu0
        %v540 = vadd.f32 %v444, %v539
        %v541 = vpop.f32.mrb[0].mxu0
        %v542 = vadd.f32 %v446, %v541
        %v543 = vpop.f32.mrb[0].mxu0
        %v544 = vpop.f32.mrb[0].mxu0
        %545 = vdwg.mxu0
        %546 = vmatprep.subr.bf16.mxu0 0
        %547 = vmatpush1.bf16.msra.mxu0 %v503
        %548 = vmatprep.subr.bf16.mxu0 0
        %549 = vmatpush1.bf16.msra.mxu0 0
        %550 = vmatprep.subr.bf16.mxu0 0
        %551 = vmatpush1.bf16.msra.mxu0 0
        %552 = vmatprep.subr.bf16.mxu0 0
        %553 = vmatpush1.bf16.msra.mxu0 0
        %554 = vmatprep.subr.bf16.mxu0 0
        %555 = vmatpush1.bf16.msra.mxu0 0
        %556 = vmatprep.subr.bf16.mxu0 0
        %557 = vmatpush1.bf16.msra.mxu0 0
        %558 = vmatprep.subr.bf16.mxu0 0
        %559 = vmatpush1.bf16.msra.mxu0 0
        %560 = vmatprep.subr.bf16.mxu0 0
        %561 = vmatpush1.bf16.msra.mxu0 0
        %562 = vmatprep.subr.bf16.mxu0 0
        %563 = vmatpush1.bf16.msra.mxu0 0
        %564 = vmatprep.subr.bf16.mxu0 0
        %565 = vmatpush1.bf16.msra.mxu0 0
        %566 = vmatprep.subr.bf16.mxu0 0
        %567 = vmatpush1.bf16.msra.mxu0 0
        %568 = vmatprep.subr.bf16.mxu0 0
        %569 = vmatpush1.bf16.msra.mxu0 0
        %570 = vmatprep.subr.bf16.mxu0 0
        %571 = vmatpush1.bf16.msra.mxu0 0
        %572 = vmatprep.subr.bf16.mxu0 0
        %573 = vmatpush1.bf16.msra.mxu0 0
        %574 = vmatprep.subr.bf16.mxu0 0
        %575 = vmatpush1.bf16.msra.mxu0 0
        %576 = vmatprep.subr.bf16.mxu0 0
        %577 = vmatpush1.bf16.msra.mxu0 0
        %578 = vmatprep.mubr.bf16.mxu0 0
        %579 = vmatmul.mubr.bf16.gmra.mrb[0].mxu0 %v494
        %v580 = vpop.f32.mrb[0].mxu0
        %v581 = vadd.f32 %v485, %v580
        %v582 = vpop.f32.mrb[0].mxu0
        %v583 = vpop.f32.mrb[0].mxu0
        %v584 = vpop.f32.mrb[0].mxu0
        %585 = vdwg.mxu0
        %s586 = scalar_lea.vmem %s2, 8
        %v587 = vld [vmem:[%s586] sm:$0xf]
        %588 = vrot.lane.b32.xlu0 %v380, 126
        %v589 = vpop.permute.xlu0 %588
        %590 = vrot.lane.b32.xlu0 %v381, 126
        %v591 = vpop.permute.xlu0 %590
        %592 = vrot.lane.b32.xlu0 %v382, 126
        %v593 = vpop.permute.xlu0 %592
        %594 = vrot.lane.b32.xlu0 %v383, 126
        %v595 = vpop.permute.xlu0 %594
        %vm596 = vcmask 1031168
        %v597 = vsel %vm596, %v589, %v591
        %v598 = vsel %vm596, %v591, %v593
        %v599 = vsel %vm596, %v593, %v595
        %v601 = vsel %vm396, %v587, 0
        %v604 = vsel %vm299, %v597, 0
        %v607 = vsel %vm299, %v598, 0
        %v610 = vsel %vm299, %v599, 0
        %612 = vmatprep.subr.bf16.mxu0 %v607
        %613 = vmatpush1.bf16.msra.mxu0 %v604
        %614 = vmatprep.subr.bf16.mxu0 0
        %615 = vmatpush1.bf16.msra.mxu0 0
        %616 = vmatprep.subr.bf16.mxu0 0
        %617 = vmatpush1.bf16.msra.mxu0 0
        %618 = vmatprep.subr.bf16.mxu0 0
        %619 = vmatpush1.bf16.msra.mxu0 0
        %620 = vmatprep.subr.bf16.mxu0 0
        %621 = vmatpush1.bf16.msra.mxu0 0
        %622 = vmatprep.subr.bf16.mxu0 0
        %623 = vmatpush1.bf16.msra.mxu0 0
        %624 = vmatprep.subr.bf16.mxu0 0
        %625 = vmatpush1.bf16.msra.mxu0 0
        %626 = vmatprep.subr.bf16.mxu0 0
        %627 = vmatpush1.bf16.msra.mxu0 0
        %628 = vmatprep.subr.bf16.mxu0 0
        %629 = vmatpush1.bf16.msra.mxu0 0
        %630 = vmatprep.subr.bf16.mxu0 0
        %631 = vmatpush1.bf16.msra.mxu0 0
        %632 = vmatprep.subr.bf16.mxu0 0
        %633 = vmatpush1.bf16.msra.mxu0 0
        %634 = vmatprep.subr.bf16.mxu0 0
        %635 = vmatpush1.bf16.msra.mxu0 0
        %636 = vmatprep.subr.bf16.mxu0 0
        %637 = vmatpush1.bf16.msra.mxu0 0
        %638 = vmatprep.subr.bf16.mxu0 0
        %639 = vmatpush1.bf16.msra.mxu0 0
        %640 = vmatprep.subr.bf16.mxu0 0
        %641 = vmatpush1.bf16.msra.mxu0 0
        %642 = vmatprep.subr.bf16.mxu0 0
        %643 = vmatpush1.bf16.msra.mxu0 0
        %644 = vmatprep.mubr.bf16.mxu0 0
        %645 = vmatmul.mubr.bf16.gmra.mrb[0].mxu0 %v601
        %v646 = vpop.f32.mrb[0].mxu0
        %v647 = vadd.f32 0.0, %v646
        %v648 = vpop.f32.mrb[0].mxu0
        %v649 = vadd.f32 0.0, %v648
        %v650 = vpop.f32.mrb[0].mxu0
        %v651 = vpop.f32.mrb[0].mxu0
        %652 = vdwg.mxu0
        %653 = vmatprep.subr.bf16.mxu0 0
        %654 = vmatpush1.bf16.msra.mxu0 %v610
        %655 = vmatprep.subr.bf16.mxu0 0
        %656 = vmatpush1.bf16.msra.mxu0 0
        %657 = vmatprep.subr.bf16.mxu0 0
        %658 = vmatpush1.bf16.msra.mxu0 0
        %659 = vmatprep.subr.bf16.mxu0 0
        %660 = vmatpush1.bf16.msra.mxu0 0
        %661 = vmatprep.subr.bf16.mxu0 0
        %662 = vmatpush1.bf16.msra.mxu0 0
        %663 = vmatprep.subr.bf16.mxu0 0
        %664 = vmatpush1.bf16.msra.mxu0 0
        %665 = vmatprep.subr.bf16.mxu0 0
        %666 = vmatpush1.bf16.msra.mxu0 0
        %667 = vmatprep.subr.bf16.mxu0 0
        %668 = vmatpush1.bf16.msra.mxu0 0
        %669 = vmatprep.subr.bf16.mxu0 0
        %670 = vmatpush1.bf16.msra.mxu0 0
        %671 = vmatprep.subr.bf16.mxu0 0
        %672 = vmatpush1.bf16.msra.mxu0 0
        %673 = vmatprep.subr.bf16.mxu0 0
        %674 = vmatpush1.bf16.msra.mxu0 0
        %675 = vmatprep.subr.bf16.mxu0 0
        %676 = vmatpush1.bf16.msra.mxu0 0
        %677 = vmatprep.subr.bf16.mxu0 0
        %678 = vmatpush1.bf16.msra.mxu0 0
        %679 = vmatprep.subr.bf16.mxu0 0
        %680 = vmatpush1.bf16.msra.mxu0 0
        %681 = vmatprep.subr.bf16.mxu0 0
        %682 = vmatpush1.bf16.msra.mxu0 0
        %683 = vmatprep.subr.bf16.mxu0 0
        %684 = vmatpush1.bf16.msra.mxu0 0
        %685 = vmatprep.mubr.bf16.mxu0 0
        %686 = vmatmul.mubr.bf16.gmra.mrb[0].mxu0 %v601
        %v687 = vpop.f32.mrb[0].mxu0
        %v688 = vadd.f32 0.0, %v687
        %v689 = vpop.f32.mrb[0].mxu0
        %v690 = vpop.f32.mrb[0].mxu0
        %v691 = vpop.f32.mrb[0].mxu0
        %692 = vdwg.mxu0
        %v693 = vadd.f32 %v540, %v647
        %v694 = vadd.f32 %v542, %v649
        %v695 = vadd.f32 %v581, %v688
        %s696 = scalar_lea.vmem %s2, 12
        %v697 = vld [vmem:[%s696] sm:$0xf]
        %698 = vrot.lane.b32.xlu0 %v380, 110
        %v699 = vpop.permute.xlu0 %698
        %700 = vrot.lane.b32.xlu0 %v381, 110
        %v701 = vpop.permute.xlu0 %700
        %702 = vrot.lane.b32.xlu0 %v382, 110
        %v703 = vpop.permute.xlu0 %702
        %704 = vrot.lane.b32.xlu0 %v383, 110
        %v705 = vpop.permute.xlu0 %704
        %vm706 = vcmask 900096
        %v707 = vsel %vm706, %v699, %v701
        %v708 = vsel %vm706, %v701, %v703
        %v709 = vsel %vm706, %v703, %v705
        %v711 = vsel %vm396, %v697, 0
        %v714 = vsel %vm299, %v707, 0
        %v717 = vsel %vm299, %v708, 0
        %v720 = vsel %vm299, %v709, 0
        %722 = vmatprep.subr.bf16.mxu0 %v717
        %723 = vmatpush1.bf16.msra.mxu0 %v714
        %724 = vmatprep.subr.bf16.mxu0 0
        %725 = vmatpush1.bf16.msra.mxu0 0
        %726 = vmatprep.subr.bf16.mxu0 0
        %727 = vmatpush1.bf16.msra.mxu0 0
        %728 = vmatprep.subr.bf16.mxu0 0
        %729 = vmatpush1.bf16.msra.mxu0 0
        %730 = vmatprep.subr.bf16.mxu0 0
        %731 = vmatpush1.bf16.msra.mxu0 0
        %732 = vmatprep.subr.bf16.mxu0 0
        %733 = vmatpush1.bf16.msra.mxu0 0
        %734 = vmatprep.subr.bf16.mxu0 0
        %735 = vmatpush1.bf16.msra.mxu0 0
        %736 = vmatprep.subr.bf16.mxu0 0
        %737 = vmatpush1.bf16.msra.mxu0 0
        %738 = vmatprep.subr.bf16.mxu0 0
        %739 = vmatpush1.bf16.msra.mxu0 0
        %740 = vmatprep.subr.bf16.mxu0 0
        %741 = vmatpush1.bf16.msra.mxu0 0
        %742 = vmatprep.subr.bf16.mxu0 0
        %743 = vmatpush1.bf16.msra.mxu0 0
        %744 = vmatprep.subr.bf16.mxu0 0
        %745 = vmatpush1.bf16.msra.mxu0 0
        %746 = vmatprep.subr.bf16.mxu0 0
        %747 = vmatpush1.bf16.msra.mxu0 0
        %748 = vmatprep.subr.bf16.mxu0 0
        %749 = vmatpush1.bf16.msra.mxu0 0
        %750 = vmatprep.subr.bf16.mxu0 0
        %751 = vmatpush1.bf16.msra.mxu0 0
        %752 = vmatprep.subr.bf16.mxu0 0
        %753 = vmatpush1.bf16.msra.mxu0 0
        %754 = vmatprep.mubr.bf16.mxu0 0
        %755 = vmatmul.mubr.bf16.gmra.mrb[0].mxu0 %v711
        %v756 = vpop.f32.mrb[0].mxu0
        %v757 = vadd.f32 0.0, %v756
        %v758 = vpop.f32.mrb[0].mxu0
        %v759 = vadd.f32 0.0, %v758
        %v760 = vpop.f32.mrb[0].mxu0
        %v761 = vpop.f32.mrb[0].mxu0
        %762 = vdwg.mxu0
        %763 = vmatprep.subr.bf16.mxu0 0
        %764 = vmatpush1.bf16.msra.mxu0 %v720
        %765 = vmatprep.subr.bf16.mxu0 0
        %766 = vmatpush1.bf16.msra.mxu0 0
        %767 = vmatprep.subr.bf16.mxu0 0
        %768 = vmatpush1.bf16.msra.mxu0 0
        %769 = vmatprep.subr.bf16.mxu0 0
        %770 = vmatpush1.bf16.msra.mxu0 0
        %771 = vmatprep.subr.bf16.mxu0 0
        %772 = vmatpush1.bf16.msra.mxu0 0
        %773 = vmatprep.subr.bf16.mxu0 0
        %774 = vmatpush1.bf16.msra.mxu0 0
        %775 = vmatprep.subr.bf16.mxu0 0
        %776 = vmatpush1.bf16.msra.mxu0 0
        %777 = vmatprep.subr.bf16.mxu0 0
        %778 = vmatpush1.bf16.msra.mxu0 0
        %779 = vmatprep.subr.bf16.mxu0 0
        %780 = vmatpush1.bf16.msra.mxu0 0
        %781 = vmatprep.subr.bf16.mxu0 0
        %782 = vmatpush1.bf16.msra.mxu0 0
        %783 = vmatprep.subr.bf16.mxu0 0
        %784 = vmatpush1.bf16.msra.mxu0 0
        %785 = vmatprep.subr.bf16.mxu0 0
        %786 = vmatpush1.bf16.msra.mxu0 0
        %787 = vmatprep.subr.bf16.mxu0 0
        %788 = vmatpush1.bf16.msra.mxu0 0
        %789 = vmatprep.subr.bf16.mxu0 0
        %790 = vmatpush1.bf16.msra.mxu0 0
        %791 = vmatprep.subr.bf16.mxu0 0
        %792 = vmatpush1.bf16.msra.mxu0 0
        %793 = vmatprep.subr.bf16.mxu0 0
        %794 = vmatpush1.bf16.msra.mxu0 0
        %795 = vmatprep.mubr.bf16.mxu0 0
        %796 = vmatmul.mubr.bf16.gmra.mrb[0].mxu0 %v711
        %v797 = vpop.f32.mrb[0].mxu0
        %v798 = vadd.f32 0.0, %v797
        %v799 = vpop.f32.mrb[0].mxu0
        %v800 = vpop.f32.mrb[0].mxu0
        %v801 = vpop.f32.mrb[0].mxu0
        %802 = vdwg.mxu0
        %v803 = vadd.f32 %v693, %v757
        %v804 = vadd.f32 %v694, %v759
        %v805 = vadd.f32 %v695, %v798
        %s806 = scalar_lea.vmem %s2, 16
        %v807 = vld [vmem:[%s806] sm:$0xf]
        %808 = vrot.lane.b32.xlu0 %v380, 109
        %v809 = vpop.permute.xlu0 %808
        %810 = vrot.lane.b32.xlu0 %v381, 109
        %v811 = vpop.permute.xlu0 %810
        %812 = vrot.lane.b32.xlu0 %v382, 109
        %v813 = vpop.permute.xlu0 %812
        %814 = vrot.lane.b32.xlu0 %v383, 109
        %v815 = vpop.permute.xlu0 %814
        %vm816 = vcmask 891904
        %v817 = vsel %vm816, %v809, %v811
        %v818 = vsel %vm816, %v811, %v813
        %v819 = vsel %vm816, %v813, %v815
        %v821 = vsel %vm396, %v807, 0
        %v824 = vsel %vm299, %v817, 0
        %v827 = vsel %vm299, %v818, 0
        %v830 = vsel %vm299, %v819, 0
        %832 = vmatprep.subr.bf16.mxu0 %v827
        %833 = vmatpush1.bf16.msra.mxu0 %v824
        %834 = vmatprep.subr.bf16.mxu0 0
        %835 = vmatpush1.bf16.msra.mxu0 0
        %836 = vmatprep.subr.bf16.mxu0 0
        %837 = vmatpush1.bf16.msra.mxu0 0
        %838 = vmatprep.subr.bf16.mxu0 0
        %839 = vmatpush1.bf16.msra.mxu0 0
        %840 = vmatprep.subr.bf16.mxu0 0
        %841 = vmatpush1.bf16.msra.mxu0 0
        %842 = vmatprep.subr.bf16.mxu0 0
        %843 = vmatpush1.bf16.msra.mxu0 0
        %844 = vmatprep.subr.bf16.mxu0 0
        %845 = vmatpush1.bf16.msra.mxu0 0
        %846 = vmatprep.subr.bf16.mxu0 0
        %847 = vmatpush1.bf16.msra.mxu0 0
        %848 = vmatprep.subr.bf16.mxu0 0
        %849 = vmatpush1.bf16.msra.mxu0 0
        %850 = vmatprep.subr.bf16.mxu0 0
        %851 = vmatpush1.bf16.msra.mxu0 0
        %852 = vmatprep.subr.bf16.mxu0 0
        %853 = vmatpush1.bf16.msra.mxu0 0
        %854 = vmatprep.subr.bf16.mxu0 0
        %855 = vmatpush1.bf16.msra.mxu0 0
        %856 = vmatprep.subr.bf16.mxu0 0
        %857 = vmatpush1.bf16.msra.mxu0 0
        %858 = vmatprep.subr.bf16.mxu0 0
        %859 = vmatpush1.bf16.msra.mxu0 0
        %860 = vmatprep.subr.bf16.mxu0 0
        %861 = vmatpush1.bf16.msra.mxu0 0
        %862 = vmatprep.subr.bf16.mxu0 0
        %863 = vmatpush1.bf16.msra.mxu0 0
        %864 = vmatprep.mubr.bf16.mxu0 0
        %865 = vmatmul.mubr.bf16.gmra.mrb[0].mxu0 %v821
        %v866 = vpop.f32.mrb[0].mxu0
        %v867 = vadd.f32 0.0, %v866
        %v868 = vpop.f32.mrb[0].mxu0
        %v869 = vadd.f32 0.0, %v868
        %v870 = vpop.f32.mrb[0].mxu0
        %v871 = vpop.f32.mrb[0].mxu0
        %872 = vdwg.mxu0
        %873 = vmatprep.subr.bf16.mxu0 0
        %874 = vmatpush1.bf16.msra.mxu0 %v830
        %875 = vmatprep.subr.bf16.mxu0 0
        %876 = vmatpush1.bf16.msra.mxu0 0
        %877 = vmatprep.subr.bf16.mxu0 0
        %878 = vmatpush1.bf16.msra.mxu0 0
        %879 = vmatprep.subr.bf16.mxu0 0
        %880 = vmatpush1.bf16.msra.mxu0 0
        %881 = vmatprep.subr.bf16.mxu0 0
        %882 = vmatpush1.bf16.msra.mxu0 0
        %883 = vmatprep.subr.bf16.mxu0 0
        %884 = vmatpush1.bf16.msra.mxu0 0
        %885 = vmatprep.subr.bf16.mxu0 0
        %886 = vmatpush1.bf16.msra.mxu0 0
        %887 = vmatprep.subr.bf16.mxu0 0
        %888 = vmatpush1.bf16.msra.mxu0 0
        %889 = vmatprep.subr.bf16.mxu0 0
        %890 = vmatpush1.bf16.msra.mxu0 0
        %891 = vmatprep.subr.bf16.mxu0 0
        %892 = vmatpush1.bf16.msra.mxu0 0
        %893 = vmatprep.subr.bf16.mxu0 0
        %894 = vmatpush1.bf16.msra.mxu0 0
        %895 = vmatprep.subr.bf16.mxu0 0
        %896 = vmatpush1.bf16.msra.mxu0 0
        %897 = vmatprep.subr.bf16.mxu0 0
        %898 = vmatpush1.bf16.msra.mxu0 0
        %899 = vmatprep.subr.bf16.mxu0 0
        %900 = vmatpush1.bf16.msra.mxu0 0
        %901 = vmatprep.subr.bf16.mxu0 0
        %902 = vmatpush1.bf16.msra.mxu0 0
        %903 = vmatprep.subr.bf16.mxu0 0
        %904 = vmatpush1.bf16.msra.mxu0 0
        %905 = vmatprep.mubr.bf16.mxu0 0
        %906 = vmatmul.mubr.bf16.gmra.mrb[0].mxu0 %v821
        %v907 = vpop.f32.mrb[0].mxu0
        %v908 = vadd.f32 0.0, %v907
        %v909 = vpop.f32.mrb[0].mxu0
        %v910 = vpop.f32.mrb[0].mxu0
        %v911 = vpop.f32.mrb[0].mxu0
        %912 = vdwg.mxu0
        %v913 = vadd.f32 %v803, %v867
        %v914 = vadd.f32 %v804, %v869
        %v915 = vadd.f32 %v805, %v908
        %s916 = scalar_lea.vmem %s2, 20
        %v917 = vld [vmem:[%s916] sm:$0xf]
        %918 = vrot.lane.b32.xlu0 %v380, 108
        %v919 = vpop.permute.xlu0 %918
        %920 = vrot.lane.b32.xlu0 %v381, 108
        %v921 = vpop.permute.xlu0 %920
        %922 = vrot.lane.b32.xlu0 %v382, 108
        %v923 = vpop.permute.xlu0 %922
        %924 = vrot.lane.b32.xlu0 %v383, 108
        %v925 = vpop.permute.xlu0 %924
        %vm926 = vcmask 883712
        %v927 = vsel %vm926, %v919, %v921
        %v928 = vsel %vm926, %v921, %v923
        %v929 = vsel %vm926, %v923, %v925
        %v931 = vsel %vm396, %v917, 0
        %v934 = vsel %vm299, %v927, 0
        %v937 = vsel %vm299, %v928, 0
        %v940 = vsel %vm299, %v929, 0
        %942 = vmatprep.subr.bf16.mxu0 %v937
        %943 = vmatpush1.bf16.msra.mxu0 %v934
        %944 = vmatprep.subr.bf16.mxu0 0
        %945 = vmatpush1.bf16.msra.mxu0 0
        %946 = vmatprep.subr.bf16.mxu0 0
        %947 = vmatpush1.bf16.msra.mxu0 0
        %948 = vmatprep.subr.bf16.mxu0 0
        %949 = vmatpush1.bf16.msra.mxu0 0
        %950 = vmatprep.subr.bf16.mxu0 0
        %951 = vmatpush1.bf16.msra.mxu0 0
        %952 = vmatprep.subr.bf16.mxu0 0
        %953 = vmatpush1.bf16.msra.mxu0 0
        %954 = vmatprep.subr.bf16.mxu0 0
        %955 = vmatpush1.bf16.msra.mxu0 0
        %956 = vmatprep.subr.bf16.mxu0 0
        %957 = vmatpush1.bf16.msra.mxu0 0
        %958 = vmatprep.subr.bf16.mxu0 0
        %959 = vmatpush1.bf16.msra.mxu0 0
        %960 = vmatprep.subr.bf16.mxu0 0
        %961 = vmatpush1.bf16.msra.mxu0 0
        %962 = vmatprep.subr.bf16.mxu0 0
        %963 = vmatpush1.bf16.msra.mxu0 0
        %964 = vmatprep.subr.bf16.mxu0 0
        %965 = vmatpush1.bf16.msra.mxu0 0
        %966 = vmatprep.subr.bf16.mxu0 0
        %967 = vmatpush1.bf16.msra.mxu0 0
        %968 = vmatprep.subr.bf16.mxu0 0
        %969 = vmatpush1.bf16.msra.mxu0 0
        %970 = vmatprep.subr.bf16.mxu0 0
        %971 = vmatpush1.bf16.msra.mxu0 0
        %972 = vmatprep.subr.bf16.mxu0 0
        %973 = vmatpush1.bf16.msra.mxu0 0
        %974 = vmatprep.mubr.bf16.mxu0 0
        %975 = vmatmul.mubr.bf16.gmra.mrb[0].mxu0 %v931
        %v976 = vpop.f32.mrb[0].mxu0
        %v977 = vadd.f32 0.0, %v976
        %v978 = vpop.f32.mrb[0].mxu0
        %v979 = vadd.f32 0.0, %v978
        %v980 = vpop.f32.mrb[0].mxu0
        %v981 = vpop.f32.mrb[0].mxu0
        %982 = vdwg.mxu0
        %983 = vmatprep.subr.bf16.mxu0 0
        %984 = vmatpush1.bf16.msra.mxu0 %v940
        %985 = vmatprep.subr.bf16.mxu0 0
        %986 = vmatpush1.bf16.msra.mxu0 0
        %987 = vmatprep.subr.bf16.mxu0 0
        %988 = vmatpush1.bf16.msra.mxu0 0
        %989 = vmatprep.subr.bf16.mxu0 0
        %990 = vmatpush1.bf16.msra.mxu0 0
        %991 = vmatprep.subr.bf16.mxu0 0
        %992 = vmatpush1.bf16.msra.mxu0 0
        %993 = vmatprep.subr.bf16.mxu0 0
        %994 = vmatpush1.bf16.msra.mxu0 0
        %995 = vmatprep.subr.bf16.mxu0 0
        %996 = vmatpush1.bf16.msra.mxu0 0
        %997 = vmatprep.subr.bf16.mxu0 0
        %998 = vmatpush1.bf16.msra.mxu0 0
        %999 = vmatprep.subr.bf16.mxu0 0
        %1000 = vmatpush1.bf16.msra.mxu0 0
        %1001 = vmatprep.subr.bf16.mxu0 0
        %1002 = vmatpush1.bf16.msra.mxu0 0
        %1003 = vmatprep.subr.bf16.mxu0 0
        %1004 = vmatpush1.bf16.msra.mxu0 0
        %1005 = vmatprep.subr.bf16.mxu0 0
        %1006 = vmatpush1.bf16.msra.mxu0 0
        %1007 = vmatprep.subr.bf16.mxu0 0
        %1008 = vmatpush1.bf16.msra.mxu0 0
        %1009 = vmatprep.subr.bf16.mxu0 0
        %1010 = vmatpush1.bf16.msra.mxu0 0
        %1011 = vmatprep.subr.bf16.mxu0 0
        %1012 = vmatpush1.bf16.msra.mxu0 0
        %1013 = vmatprep.subr.bf16.mxu0 0
        %1014 = vmatpush1.bf16.msra.mxu0 0
        %1015 = vmatprep.mubr.bf16.mxu0 0
        %1016 = vmatmul.mubr.bf16.gmra.mrb[0].mxu0 %v931
        %v1017 = vpop.f32.mrb[0].mxu0
        %v1018 = vadd.f32 0.0, %v1017
        %v1019 = vpop.f32.mrb[0].mxu0
        %v1020 = vpop.f32.mrb[0].mxu0
        %v1021 = vpop.f32.mrb[0].mxu0
        %1022 = vdwg.mxu0
        %v1023 = vadd.f32 %v913, %v977
        %v1024 = vadd.f32 %v914, %v979
        %v1025 = vadd.f32 %v915, %v1018
        %s1026 = scalar_lea.vmem %s2, 24
        %v1027 = vld [vmem:[%s1026] sm:$0xf]
        %1028 = vrot.lane.b32.xlu0 %v380, 92
        %v1029 = vpop.permute.xlu0 %1028
        %1030 = vrot.lane.b32.xlu0 %v381, 92
        %v1031 = vpop.permute.xlu0 %1030
        %1032 = vrot.lane.b32.xlu0 %v382, 92
        %v1033 = vpop.permute.xlu0 %1032
        %1034 = vrot.lane.b32.xlu0 %v383, 92
        %v1035 = vpop.permute.xlu0 %1034
        %vm1036 = vcmask 752640
        %v1037 = vsel %vm1036, %v1029, %v1031
        %v1038 = vsel %vm1036, %v1031, %v1033
        %v1039 = vsel %vm1036, %v1033, %v1035
        %v1041 = vsel %vm396, %v1027, 0
        %v1044 = vsel %vm299, %v1037, 0
        %v1047 = vsel %vm299, %v1038, 0
        %v1050 = vsel %vm299, %v1039, 0
        %1052 = vmatprep.subr.bf16.mxu0 %v1047
        %1053 = vmatpush1.bf16.msra.mxu0 %v1044
        %1054 = vmatprep.subr.bf16.mxu0 0
        %1055 = vmatpush1.bf16.msra.mxu0 0
        %1056 = vmatprep.subr.bf16.mxu0 0
        %1057 = vmatpush1.bf16.msra.mxu0 0
        %1058 = vmatprep.subr.bf16.mxu0 0
        %1059 = vmatpush1.bf16.msra.mxu0 0
        %1060 = vmatprep.subr.bf16.mxu0 0
        %1061 = vmatpush1.bf16.msra.mxu0 0
        %1062 = vmatprep.subr.bf16.mxu0 0
        %1063 = vmatpush1.bf16.msra.mxu0 0
        %1064 = vmatprep.subr.bf16.mxu0 0
        %1065 = vmatpush1.bf16.msra.mxu0 0
        %1066 = vmatprep.subr.bf16.mxu0 0
        %1067 = vmatpush1.bf16.msra.mxu0 0
        %1068 = vmatprep.subr.bf16.mxu0 0
        %1069 = vmatpush1.bf16.msra.mxu0 0
        %1070 = vmatprep.subr.bf16.mxu0 0
        %1071 = vmatpush1.bf16.msra.mxu0 0
        %1072 = vmatprep.subr.bf16.mxu0 0
        %1073 = vmatpush1.bf16.msra.mxu0 0
        %1074 = vmatprep.subr.bf16.mxu0 0
        %1075 = vmatpush1.bf16.msra.mxu0 0
        %1076 = vmatprep.subr.bf16.mxu0 0
        %1077 = vmatpush1.bf16.msra.mxu0 0
        %1078 = vmatprep.subr.bf16.mxu0 0
        %1079 = vmatpush1.bf16.msra.mxu0 0
        %1080 = vmatprep.subr.bf16.mxu0 0
        %1081 = vmatpush1.bf16.msra.mxu0 0
        %1082 = vmatprep.subr.bf16.mxu0 0
        %1083 = vmatpush1.bf16.msra.mxu0 0
        %1084 = vmatprep.mubr.bf16.mxu0 0
        %1085 = vmatmul.mubr.bf16.gmra.mrb[0].mxu0 %v1041
        %v1086 = vpop.f32.mrb[0].mxu0
        %v1087 = vadd.f32 0.0, %v1086
        %v1088 = vpop.f32.mrb[0].mxu0
        %v1089 = vadd.f32 0.0, %v1088
        %v1090 = vpop.f32.mrb[0].mxu0
        %v1091 = vpop.f32.mrb[0].mxu0
        %1092 = vdwg.mxu0
        %1093 = vmatprep.subr.bf16.mxu0 0
        %1094 = vmatpush1.bf16.msra.mxu0 %v1050
        %1095 = vmatprep.subr.bf16.mxu0 0
        %1096 = vmatpush1.bf16.msra.mxu0 0
        %1097 = vmatprep.subr.bf16.mxu0 0
        %1098 = vmatpush1.bf16.msra.mxu0 0
        %1099 = vmatprep.subr.bf16.mxu0 0
        %1100 = vmatpush1.bf16.msra.mxu0 0
        %1101 = vmatprep.subr.bf16.mxu0 0
        %1102 = vmatpush1.bf16.msra.mxu0 0
        %1103 = vmatprep.subr.bf16.mxu0 0
        %1104 = vmatpush1.bf16.msra.mxu0 0
        %1105 = vmatprep.subr.bf16.mxu0 0
        %1106 = vmatpush1.bf16.msra.mxu0 0
        %1107 = vmatprep.subr.bf16.mxu0 0
        %1108 = vmatpush1.bf16.msra.mxu0 0
        %1109 = vmatprep.subr.bf16.mxu0 0
        %1110 = vmatpush1.bf16.msra.mxu0 0
        %1111 = vmatprep.subr.bf16.mxu0 0
        %1112 = vmatpush1.bf16.msra.mxu0 0
        %1113 = vmatprep.subr.bf16.mxu0 0
        %1114 = vmatpush1.bf16.msra.mxu0 0
        %1115 = vmatprep.subr.bf16.mxu0 0
        %1116 = vmatpush1.bf16.msra.mxu0 0
        %1117 = vmatprep.subr.bf16.mxu0 0
        %1118 = vmatpush1.bf16.msra.mxu0 0
        %1119 = vmatprep.subr.bf16.mxu0 0
        %1120 = vmatpush1.bf16.msra.mxu0 0
        %1121 = vmatprep.subr.bf16.mxu0 0
        %1122 = vmatpush1.bf16.msra.mxu0 0
        %1123 = vmatprep.subr.bf16.mxu0 0
        %1124 = vmatpush1.bf16.msra.mxu0 0
        %1125 = vmatprep.mubr.bf16.mxu0 0
        %1126 = vmatmul.mubr.bf16.gmra.mrb[0].mxu0 %v1041
        %v1127 = vpop.f32.mrb[0].mxu0
        %v1128 = vadd.f32 0.0, %v1127
        %v1129 = vpop.f32.mrb[0].mxu0
        %v1130 = vpop.f32.mrb[0].mxu0
        %v1131 = vpop.f32.mrb[0].mxu0
        %1132 = vdwg.mxu0
        %v1133 = vadd.f32 %v1023, %v1087
        %v1134 = vadd.f32 %v1024, %v1089
        %v1135 = vadd.f32 %v1025, %v1128
        %s1136 = scalar_lea.vmem %s2, 28
        %v1137 = vld [vmem:[%s1136] sm:$0xf]
        %1138 = vrot.lane.b32.xlu0 %v380, 91
        %v1139 = vpop.permute.xlu0 %1138
        %1140 = vrot.lane.b32.xlu0 %v381, 91
        %v1141 = vpop.permute.xlu0 %1140
        %1142 = vrot.lane.b32.xlu0 %v382, 91
        %v1143 = vpop.permute.xlu0 %1142
        %1144 = vrot.lane.b32.xlu0 %v383, 91
        %v1145 = vpop.permute.xlu0 %1144
        %vm1146 = vcmask 744448
        %v1147 = vsel %vm1146, %v1139, %v1141
        %v1148 = vsel %vm1146, %v1141, %v1143
        %v1149 = vsel %vm1146, %v1143, %v1145
        %v1151 = vsel %vm396, %v1137, 0
        %v1154 = vsel %vm299, %v1147, 0
        %v1157 = vsel %vm299, %v1148, 0
        %v1160 = vsel %vm299, %v1149, 0
        %1162 = vmatprep.subr.bf16.mxu0 %v1157
        %1163 = vmatpush1.bf16.msra.mxu0 %v1154
        %1164 = vmatprep.subr.bf16.mxu0 0
        %1165 = vmatpush1.bf16.msra.mxu0 0
        %1166 = vmatprep.subr.bf16.mxu0 0
        %1167 = vmatpush1.bf16.msra.mxu0 0
        %1168 = vmatprep.subr.bf16.mxu0 0
        %1169 = vmatpush1.bf16.msra.mxu0 0
        %1170 = vmatprep.subr.bf16.mxu0 0
        %1171 = vmatpush1.bf16.msra.mxu0 0
        %1172 = vmatprep.subr.bf16.mxu0 0
        %1173 = vmatpush1.bf16.msra.mxu0 0
        %1174 = vmatprep.subr.bf16.mxu0 0
        %1175 = vmatpush1.bf16.msra.mxu0 0
        %1176 = vmatprep.subr.bf16.mxu0 0
        %1177 = vmatpush1.bf16.msra.mxu0 0
        %1178 = vmatprep.subr.bf16.mxu0 0
        %1179 = vmatpush1.bf16.msra.mxu0 0
        %1180 = vmatprep.subr.bf16.mxu0 0
        %1181 = vmatpush1.bf16.msra.mxu0 0
        %1182 = vmatprep.subr.bf16.mxu0 0
        %1183 = vmatpush1.bf16.msra.mxu0 0
        %1184 = vmatprep.subr.bf16.mxu0 0
        %1185 = vmatpush1.bf16.msra.mxu0 0
        %1186 = vmatprep.subr.bf16.mxu0 0
        %1187 = vmatpush1.bf16.msra.mxu0 0
        %1188 = vmatprep.subr.bf16.mxu0 0
        %1189 = vmatpush1.bf16.msra.mxu0 0
        %1190 = vmatprep.subr.bf16.mxu0 0
        %1191 = vmatpush1.bf16.msra.mxu0 0
        %1192 = vmatprep.subr.bf16.mxu0 0
        %1193 = vmatpush1.bf16.msra.mxu0 0
        %1194 = vmatprep.mubr.bf16.mxu0 0
        %1195 = vmatmul.mubr.bf16.gmra.mrb[0].mxu0 %v1151
        %v1196 = vpop.f32.mrb[0].mxu0
        %v1197 = vadd.f32 0.0, %v1196
        %v1198 = vpop.f32.mrb[0].mxu0
        %v1199 = vadd.f32 0.0, %v1198
        %v1200 = vpop.f32.mrb[0].mxu0
        %v1201 = vpop.f32.mrb[0].mxu0
        %1202 = vdwg.mxu0
        %1203 = vmatprep.subr.bf16.mxu0 0
        %1204 = vmatpush1.bf16.msra.mxu0 %v1160
        %1205 = vmatprep.subr.bf16.mxu0 0
        %1206 = vmatpush1.bf16.msra.mxu0 0
        %1207 = vmatprep.subr.bf16.mxu0 0
        %1208 = vmatpush1.bf16.msra.mxu0 0
        %1209 = vmatprep.subr.bf16.mxu0 0
        %1210 = vmatpush1.bf16.msra.mxu0 0
        %1211 = vmatprep.subr.bf16.mxu0 0
        %1212 = vmatpush1.bf16.msra.mxu0 0
        %1213 = vmatprep.subr.bf16.mxu0 0
        %1214 = vmatpush1.bf16.msra.mxu0 0
        %1215 = vmatprep.subr.bf16.mxu0 0
        %1216 = vmatpush1.bf16.msra.mxu0 0
        %1217 = vmatprep.subr.bf16.mxu0 0
        %1218 = vmatpush1.bf16.msra.mxu0 0
        %1219 = vmatprep.subr.bf16.mxu0 0
        %1220 = vmatpush1.bf16.msra.mxu0 0
        %1221 = vmatprep.subr.bf16.mxu0 0
        %1222 = vmatpush1.bf16.msra.mxu0 0
        %1223 = vmatprep.subr.bf16.mxu0 0
        %1224 = vmatpush1.bf16.msra.mxu0 0
        %1225 = vmatprep.subr.bf16.mxu0 0
        %1226 = vmatpush1.bf16.msra.mxu0 0
        %1227 = vmatprep.subr.bf16.mxu0 0
        %1228 = vmatpush1.bf16.msra.mxu0 0
        %1229 = vmatprep.subr.bf16.mxu0 0
        %1230 = vmatpush1.bf16.msra.mxu0 0
        %1231 = vmatprep.subr.bf16.mxu0 0
        %1232 = vmatpush1.bf16.msra.mxu0 0
        %1233 = vmatprep.subr.bf16.mxu0 0
        %1234 = vmatpush1.bf16.msra.mxu0 0
        %1235 = vmatprep.mubr.bf16.mxu0 0
        %1236 = vmatmul.mubr.bf16.gmra.mrb[0].mxu0 %v1151
        %v1237 = vpop.f32.mrb[0].mxu0
        %v1238 = vadd.f32 0.0, %v1237
        %v1239 = vpop.f32.mrb[0].mxu0
        %v1240 = vpop.f32.mrb[0].mxu0
        %v1241 = vpop.f32.mrb[0].mxu0
        %1242 = vdwg.mxu0
        %v1243 = vadd.f32 %v1133, %v1197
        %v1244 = vadd.f32 %v1134, %v1199
        %v1245 = vadd.f32 %v1135, %v1238
        %s1246 = scalar_lea.vmem %s2, 32
        %v1247 = vld [vmem:[%s1246] sm:$0xf]
        %1248 = vrot.lane.b32.xlu0 %v380, 90
        %v1249 = vpop.permute.xlu0 %1248
        %1250 = vrot.lane.b32.xlu0 %v381, 90
        %v1251 = vpop.permute.xlu0 %1250
        %1252 = vrot.lane.b32.xlu0 %v382, 90
        %v1253 = vpop.permute.xlu0 %1252
        %1254 = vrot.lane.b32.xlu0 %v383, 90
        %v1255 = vpop.permute.xlu0 %1254
        %vm1256 = vcmask 736256
        %v1257 = vsel %vm1256, %v1249, %v1251
        %v1258 = vsel %vm1256, %v1251, %v1253
        %v1259 = vsel %vm1256, %v1253, %v1255
        %v1261 = vsel %vm396, %v1247, 0
        %v1264 = vsel %vm299, %v1257, 0
        %v1267 = vsel %vm299, %v1258, 0
        %v1270 = vsel %vm299, %v1259, 0
        %1272 = vmatprep.subr.bf16.mxu0 %v1267
        %1273 = vmatpush1.bf16.msra.mxu0 %v1264
        %1274 = vmatprep.subr.bf16.mxu0 0
        %1275 = vmatpush1.bf16.msra.mxu0 0
        %1276 = vmatprep.subr.bf16.mxu0 0
        %1277 = vmatpush1.bf16.msra.mxu0 0
        %1278 = vmatprep.subr.bf16.mxu0 0
        %1279 = vmatpush1.bf16.msra.mxu0 0
        %1280 = vmatprep.subr.bf16.mxu0 0
        %1281 = vmatpush1.bf16.msra.mxu0 0
        %1282 = vmatprep.subr.bf16.mxu0 0
        %1283 = vmatpush1.bf16.msra.mxu0 0
        %1284 = vmatprep.subr.bf16.mxu0 0
        %1285 = vmatpush1.bf16.msra.mxu0 0
        %1286 = vmatprep.subr.bf16.mxu0 0
        %1287 = vmatpush1.bf16.msra.mxu0 0
        %1288 = vmatprep.subr.bf16.mxu0 0
        %1289 = vmatpush1.bf16.msra.mxu0 0
        %1290 = vmatprep.subr.bf16.mxu0 0
        %1291 = vmatpush1.bf16.msra.mxu0 0
        %1292 = vmatprep.subr.bf16.mxu0 0
        %1293 = vmatpush1.bf16.msra.mxu0 0
        %1294 = vmatprep.subr.bf16.mxu0 0
        %1295 = vmatpush1.bf16.msra.mxu0 0
        %1296 = vmatprep.subr.bf16.mxu0 0
        %1297 = vmatpush1.bf16.msra.mxu0 0
        %1298 = vmatprep.subr.bf16.mxu0 0
        %1299 = vmatpush1.bf16.msra.mxu0 0
        %1300 = vmatprep.subr.bf16.mxu0 0
        %1301 = vmatpush1.bf16.msra.mxu0 0
        %1302 = vmatprep.subr.bf16.mxu0 0
        %1303 = vmatpush1.bf16.msra.mxu0 0
        %1304 = vmatprep.mubr.bf16.mxu0 0
        %1305 = vmatmul.mubr.bf16.gmra.mrb[0].mxu0 %v1261
        %v1306 = vpop.f32.mrb[0].mxu0
        %v1307 = vadd.f32 0.0, %v1306
        %v1308 = vpop.f32.mrb[0].mxu0
        %v1309 = vadd.f32 0.0, %v1308
        %v1310 = vpop.f32.mrb[0].mxu0
        %v1311 = vpop.f32.mrb[0].mxu0
        %1312 = vdwg.mxu0
        %1313 = vmatprep.subr.bf16.mxu0 0
        %1314 = vmatpush1.bf16.msra.mxu0 %v1270
        %1315 = vmatprep.subr.bf16.mxu0 0
        %1316 = vmatpush1.bf16.msra.mxu0 0
        %1317 = vmatprep.subr.bf16.mxu0 0
        %1318 = vmatpush1.bf16.msra.mxu0 0
        %1319 = vmatprep.subr.bf16.mxu0 0
        %1320 = vmatpush1.bf16.msra.mxu0 0
        %1321 = vmatprep.subr.bf16.mxu0 0
        %1322 = vmatpush1.bf16.msra.mxu0 0
        %1323 = vmatprep.subr.bf16.mxu0 0
        %1324 = vmatpush1.bf16.msra.mxu0 0
        %1325 = vmatprep.subr.bf16.mxu0 0
        %1326 = vmatpush1.bf16.msra.mxu0 0
        %1327 = vmatprep.subr.bf16.mxu0 0
        %1328 = vmatpush1.bf16.msra.mxu0 0
        %1329 = vmatprep.subr.bf16.mxu0 0
        %1330 = vmatpush1.bf16.msra.mxu0 0
        %1331 = vmatprep.subr.bf16.mxu0 0
        %1332 = vmatpush1.bf16.msra.mxu0 0
        %1333 = vmatprep.subr.bf16.mxu0 0
        %1334 = vmatpush1.bf16.msra.mxu0 0
        %1335 = vmatprep.subr.bf16.mxu0 0
        %1336 = vmatpush1.bf16.msra.mxu0 0
        %1337 = vmatprep.subr.bf16.mxu0 0
        %1338 = vmatpush1.bf16.msra.mxu0 0
        %1339 = vmatprep.subr.bf16.mxu0 0
        %1340 = vmatpush1.bf16.msra.mxu0 0
        %1341 = vmatprep.subr.bf16.mxu0 0
        %1342 = vmatpush1.bf16.msra.mxu0 0
        %1343 = vmatprep.subr.bf16.mxu0 0
        %1344 = vmatpush1.bf16.msra.mxu0 0
        %1345 = vmatprep.mubr.bf16.mxu0 0
        %1346 = vmatmul.mubr.bf16.gmra.mrb[0].mxu0 %v1261
        %v1347 = vpop.f32.mrb[0].mxu0
        %v1348 = vadd.f32 0.0, %v1347
        %v1349 = vpop.f32.mrb[0].mxu0
        %v1350 = vpop.f32.mrb[0].mxu0
        %v1351 = vpop.f32.mrb[0].mxu0
        %1352 = vdwg.mxu0
        %v1353 = vadd.f32 %v1243, %v1307
        %v1354 = vadd.f32 %v1244, %v1309
        %v1355 = vadd.f32 %v1245, %v1348
        %v1356 = vld [vmem:[%s3] sm:$0xff]
        %1358 = vset.pattern.permute.xlu0 0
        %1359 = vperm.xlu0 %1358, %v1356
        %v1360 = vpop.permute.xlu0 %1359
        %v1362 = vadd.f32 %v1353, %v1360
        %v1363 = vadd.f32 %v1354, %v1360
        %v1364 = vadd.f32 %v1355, %v1360
        %v1365 = vmax.f32 %v1362, 0.0
        %v1366 = vmax.f32 %v1363, 0.0
        %v1367 = vmax.f32 %v1364, 0.0
        %v1368 = vld [vmem:[%s6] sm:$0x7]
        %v1370 = vlaneseq
        %v1371 = vshrl.u32 %v1370, 7
        %v1372 = vsub.s32 0, %v1371
        %v1373 = vrot.slane %v1368, %v1372
        %v1374 = vlaneseq
        %v1375 = vshrl.u32 %v1374, 7
        %v1376 = vsub.s32 1, %v1375
        %v1377 = vrot.slane %v1368, %v1376
        %v1378 = vlaneseq
        %v1379 = vshrl.u32 %v1378, 7
        %v1380 = vsub.s32 2, %v1379
        %v1381 = vrot.slane %v1368, %v1380
        %v1385 = vmul.f32 %v1365, %v1373
        %v1386 = vmul.f32 %v1366, %v1377
        %v1387 = vmul.f32 %v1367, %v1381
        %v1388 = vpack.c.bf16 %v1385, %v1385
        %v1389 = vpack.c.bf16 %v1386, %v1386
        %v1390 = vpack.c.bf16 %v1387, %v1387
        %v1394 = vunpack.c.l.b16 %v1388
        %v1395 = vunpack.c.l.b16 %v1389
        %v1396 = vunpack.c.l.b16 %v1390
        %v1397 = vpack.c.b16 %v1395, %v1394
        %v1398 = vpack.c.b16 %v1396, %v1396
        %1399 = vrot.lane.b32.xlu0 %v1397, 19
        %v1400 = vpop.permute.xlu0 %1399
        %1401 = vrot.lane.b32.xlu0 %v1398, 19
        %v1402 = vpop.permute.xlu0 %1401
        %v1403 = vrot.slane %v1400, 4
        %v1404 = vrot.slane %v1402, 4
        %v1405 = vsel %vm325, %v1403, %v1400
        %vm1406 = vcmask 1043456
        %v1407 = vsel %vm1406, %v1403, %v1404
        %v1408 = vsel %vm325, %v1407, %v1402
        %vm1411 = vcmask 1043608
        %vm1412 = vcmask 1047556
        %vm1413 = vmor %vm1412, %vm1411
        %1414 = vst.msk [vmem:[#allocation2] sm:$0xff] %vm1413, %v1405
        %vm1415 = vcmask 154628
        %vm1416 = vmor %vm1415, %vm299
        %1417 = vst.msk [vmem:[#allocation2 + $0x8] sm:$0xff] %vm1416, %v1408
        %v1418 = vld [vmem:[#allocation2] sm:$0xff]
        %v1419 = vld [vmem:[#allocation2 + $0x8] sm:$0xf]
        %v1420 = vld [vmem:[%s4] sm:$0xf]
        %v1421 = vld [vmem:[#allocation2 + $0x8] sm:$0xff]
        %s1422 = scalar_lea.vmem %s4, 4
        %v1423 = vld [vmem:[%s1422] sm:$0xf]
        %v1426 = vunpack.c.l.b16 %v1418
        %v1427 = vunpack.c.h.b16 %v1418
        %v1428 = vunpack.c.l.b16 %v1421
        %v1429 = vunpack.c.h.b16 %v1421
        %v1430 = vpack.c.b16 %v1426, %v1426
        %v1431 = vpack.c.b16 %v1427, %v1427
        %v1432 = vpack.c.b16 %v1428, %v1428
        %v1433 = vpack.c.b16 %v1429, %v1429
        %1434 = vrot.lane.b32.xlu0 %v1430, 127
        %v1435 = vpop.permute.xlu0 %1434
        %1436 = vrot.lane.b32.xlu0 %v1431, 127
        %v1437 = vpop.permute.xlu0 %1436
        %1438 = vrot.lane.b32.xlu0 %v1432, 127
        %v1439 = vpop.permute.xlu0 %1438
        %1440 = vrot.lane.b32.xlu0 %v1433, 127
        %v1441 = vpop.permute.xlu0 %1440
        %v1442 = vsel %vm392, %v1435, %v1437
        %v1443 = vsel %vm392, %v1437, %v1439
        %v1444 = vsel %vm392, %v1439, %v1441
        %v1446 = vsel %vm396, %v1423, 0
        %v1449 = vsel %vm299, %v1442, 0
        %v1452 = vsel %vm299, %v1443, 0
        %v1455 = vsel %vm299, %v1444, 0
        %1457 = vmatprep.subr.bf16.mxu0 %v1452
        %1458 = vmatpush1.bf16.msra.mxu0 %v1449
        %1459 = vmatprep.subr.bf16.mxu0 0
        %1460 = vmatpush1.bf16.msra.mxu0 0
        %1461 = vmatprep.subr.bf16.mxu0 0
        %1462 = vmatpush1.bf16.msra.mxu0 0
        %1463 = vmatprep.subr.bf16.mxu0 0
        %1464 = vmatpush1.bf16.msra.mxu0 0
        %1465 = vmatprep.subr.bf16.mxu0 0
        %1466 = vmatpush1.bf16.msra.mxu0 0
        %1467 = vmatprep.subr.bf16.mxu0 0
        %1468 = vmatpush1.bf16.msra.mxu0 0
        %1469 = vmatprep.subr.bf16.mxu0 0
        %1470 = vmatpush1.bf16.msra.mxu0 0
        %1471 = vmatprep.subr.bf16.mxu0 0
        %1472 = vmatpush1.bf16.msra.mxu0 0
        %1473 = vmatprep.subr.bf16.mxu0 0
        %1474 = vmatpush1.bf16.msra.mxu0 0
        %1475 = vmatprep.subr.bf16.mxu0 0
        %1476 = vmatpush1.bf16.msra.mxu0 0
        %1477 = vmatprep.subr.bf16.mxu0 0
        %1478 = vmatpush1.bf16.msra.mxu0 0
        %1479 = vmatprep.subr.bf16.mxu0 0
        %1480 = vmatpush1.bf16.msra.mxu0 0
        %1481 = vmatprep.subr.bf16.mxu0 0
        %1482 = vmatpush1.bf16.msra.mxu0 0
        %1483 = vmatprep.subr.bf16.mxu0 0
        %1484 = vmatpush1.bf16.msra.mxu0 0
        %1485 = vmatprep.subr.bf16.mxu0 0
        %1486 = vmatpush1.bf16.msra.mxu0 0
        %1487 = vmatprep.subr.bf16.mxu0 0
        %1488 = vmatpush1.bf16.msra.mxu0 0
        %1489 = vmatprep.mubr.bf16.mxu0 0
        %1490 = vmatmul.mubr.bf16.gmra.mrb[0].mxu0 %v1446
        %v1491 = vpop.f32.mrb[0].mxu0
        %v1492 = vadd.f32 0.0, %v1491
        %v1493 = vpop.f32.mrb[0].mxu0
        %v1494 = vadd.f32 0.0, %v1493
        %v1495 = vpop.f32.mrb[0].mxu0
        %v1496 = vpop.f32.mrb[0].mxu0
        %1497 = vdwg.mxu0
        %1498 = vmatprep.subr.bf16.mxu0 0
        %1499 = vmatpush1.bf16.msra.mxu0 %v1455
        %1500 = vmatprep.subr.bf16.mxu0 0
        %1501 = vmatpush1.bf16.msra.mxu0 0
        %1502 = vmatprep.subr.bf16.mxu0 0
        %1503 = vmatpush1.bf16.msra.mxu0 0
        %1504 = vmatprep.subr.bf16.mxu0 0
        %1505 = vmatpush1.bf16.msra.mxu0 0
        %1506 = vmatprep.subr.bf16.mxu0 0
        %1507 = vmatpush1.bf16.msra.mxu0 0
        %1508 = vmatprep.subr.bf16.mxu0 0
        %1509 = vmatpush1.bf16.msra.mxu0 0
        %1510 = vmatprep.subr.bf16.mxu0 0
        %1511 = vmatpush1.bf16.msra.mxu0 0
        %1512 = vmatprep.subr.bf16.mxu0 0
        %1513 = vmatpush1.bf16.msra.mxu0 0
        %1514 = vmatprep.subr.bf16.mxu0 0
        %1515 = vmatpush1.bf16.msra.mxu0 0
        %1516 = vmatprep.subr.bf16.mxu0 0
        %1517 = vmatpush1.bf16.msra.mxu0 0
        %1518 = vmatprep.subr.bf16.mxu0 0
        %1519 = vmatpush1.bf16.msra.mxu0 0
        %1520 = vmatprep.subr.bf16.mxu0 0
        %1521 = vmatpush1.bf16.msra.mxu0 0
        %1522 = vmatprep.subr.bf16.mxu0 0
        %1523 = vmatpush1.bf16.msra.mxu0 0
        %1524 = vmatprep.subr.bf16.mxu0 0
        %1525 = vmatpush1.bf16.msra.mxu0 0
        %1526 = vmatprep.subr.bf16.mxu0 0
        %1527 = vmatpush1.bf16.msra.mxu0 0
        %1528 = vmatprep.subr.bf16.mxu0 0
        %1529 = vmatpush1.bf16.msra.mxu0 0
        %1530 = vmatprep.mubr.bf16.mxu0 0
        %1531 = vmatmul.mubr.bf16.gmra.mrb[0].mxu0 %v1446
        %v1532 = vpop.f32.mrb[0].mxu0
        %v1533 = vadd.f32 0.0, %v1532
        %v1534 = vpop.f32.mrb[0].mxu0
        %v1535 = vpop.f32.mrb[0].mxu0
        %v1536 = vpop.f32.mrb[0].mxu0
        %1537 = vdwg.mxu0
        %v1539 = vunpack.c.l.b16 %v1419
        %v1540 = vpack.c.b16 %v1539, %v1539
        %v1542 = vsel %vm396, %v1420, 0
        %v1545 = vsel %vm299, %v1430, 0
        %v1548 = vsel %vm299, %v1431, 0
        %v1551 = vsel %vm299, %v1540, 0
        %1553 = vmatprep.subr.bf16.mxu0 %v1548
        %1554 = vmatpush1.bf16.msra.mxu0 %v1545
        %1555 = vmatprep.subr.bf16.mxu0 0
        %1556 = vmatpush1.bf16.msra.mxu0 0
        %1557 = vmatprep.subr.bf16.mxu0 0
        %1558 = vmatpush1.bf16.msra.mxu0 0
        %1559 = vmatprep.subr.bf16.mxu0 0
        %1560 = vmatpush1.bf16.msra.mxu0 0
        %1561 = vmatprep.subr.bf16.mxu0 0
        %1562 = vmatpush1.bf16.msra.mxu0 0
        %1563 = vmatprep.subr.bf16.mxu0 0
        %1564 = vmatpush1.bf16.msra.mxu0 0
        %1565 = vmatprep.subr.bf16.mxu0 0
        %1566 = vmatpush1.bf16.msra.mxu0 0
        %1567 = vmatprep.subr.bf16.mxu0 0
        %1568 = vmatpush1.bf16.msra.mxu0 0
        %1569 = vmatprep.subr.bf16.mxu0 0
        %1570 = vmatpush1.bf16.msra.mxu0 0
        %1571 = vmatprep.subr.bf16.mxu0 0
        %1572 = vmatpush1.bf16.msra.mxu0 0
        %1573 = vmatprep.subr.bf16.mxu0 0
        %1574 = vmatpush1.bf16.msra.mxu0 0
        %1575 = vmatprep.subr.bf16.mxu0 0
        %1576 = vmatpush1.bf16.msra.mxu0 0
        %1577 = vmatprep.subr.bf16.mxu0 0
        %1578 = vmatpush1.bf16.msra.mxu0 0
        %1579 = vmatprep.subr.bf16.mxu0 0
        %1580 = vmatpush1.bf16.msra.mxu0 0
        %1581 = vmatprep.subr.bf16.mxu0 0
        %1582 = vmatpush1.bf16.msra.mxu0 0
        %1583 = vmatprep.subr.bf16.mxu0 0
        %1584 = vmatpush1.bf16.msra.mxu0 0
        %1585 = vmatprep.mubr.bf16.mxu0 0
        %1586 = vmatmul.mubr.bf16.gmra.mrb[0].mxu0 %v1542
        %v1587 = vpop.f32.mrb[0].mxu0
        %v1588 = vadd.f32 %v1492, %v1587
        %v1589 = vpop.f32.mrb[0].mxu0
        %v1590 = vadd.f32 %v1494, %v1589
        %v1591 = vpop.f32.mrb[0].mxu0
        %v1592 = vpop.f32.mrb[0].mxu0
        %1593 = vdwg.mxu0
        %1594 = vmatprep.subr.bf16.mxu0 0
        %1595 = vmatpush1.bf16.msra.mxu0 %v1551
        %1596 = vmatprep.subr.bf16.mxu0 0
        %1597 = vmatpush1.bf16.msra.mxu0 0
        %1598 = vmatprep.subr.bf16.mxu0 0
        %1599 = vmatpush1.bf16.msra.mxu0 0
        %1600 = vmatprep.subr.bf16.mxu0 0
        %1601 = vmatpush1.bf16.msra.mxu0 0
        %1602 = vmatprep.subr.bf16.mxu0 0
        %1603 = vmatpush1.bf16.msra.mxu0 0
        %1604 = vmatprep.subr.bf16.mxu0 0
        %1605 = vmatpush1.bf16.msra.mxu0 0
        %1606 = vmatprep.subr.bf16.mxu0 0
        %1607 = vmatpush1.bf16.msra.mxu0 0
        %1608 = vmatprep.subr.bf16.mxu0 0
        %1609 = vmatpush1.bf16.msra.mxu0 0
        %1610 = vmatprep.subr.bf16.mxu0 0
        %1611 = vmatpush1.bf16.msra.mxu0 0
        %1612 = vmatprep.subr.bf16.mxu0 0
        %1613 = vmatpush1.bf16.msra.mxu0 0
        %1614 = vmatprep.subr.bf16.mxu0 0
        %1615 = vmatpush1.bf16.msra.mxu0 0
        %1616 = vmatprep.subr.bf16.mxu0 0
        %1617 = vmatpush1.bf16.msra.mxu0 0
        %1618 = vmatprep.subr.bf16.mxu0 0
        %1619 = vmatpush1.bf16.msra.mxu0 0
        %1620 = vmatprep.subr.bf16.mxu0 0
        %1621 = vmatpush1.bf16.msra.mxu0 0
        %1622 = vmatprep.subr.bf16.mxu0 0
        %1623 = vmatpush1.bf16.msra.mxu0 0
        %1624 = vmatprep.subr.bf16.mxu0 0
        %1625 = vmatpush1.bf16.msra.mxu0 0
        %1626 = vmatprep.mubr.bf16.mxu0 0
        %1627 = vmatmul.mubr.bf16.gmra.mrb[0].mxu0 %v1542
        %v1628 = vpop.f32.mrb[0].mxu0
        %v1629 = vadd.f32 %v1533, %v1628
        %v1630 = vpop.f32.mrb[0].mxu0
        %v1631 = vpop.f32.mrb[0].mxu0
        %v1632 = vpop.f32.mrb[0].mxu0
        %1633 = vdwg.mxu0
        %s1634 = scalar_lea.vmem %s4, 8
        %v1635 = vld [vmem:[%s1634] sm:$0xf]
        %1636 = vrot.lane.b32.xlu0 %v1430, 126
        %v1637 = vpop.permute.xlu0 %1636
        %1638 = vrot.lane.b32.xlu0 %v1431, 126
        %v1639 = vpop.permute.xlu0 %1638
        %1640 = vrot.lane.b32.xlu0 %v1432, 126
        %v1641 = vpop.permute.xlu0 %1640
        %1642 = vrot.lane.b32.xlu0 %v1433, 126
        %v1643 = vpop.permute.xlu0 %1642
        %v1644 = vsel %vm596, %v1637, %v1639
        %v1645 = vsel %vm596, %v1639, %v1641
        %v1646 = vsel %vm596, %v1641, %v1643
        %v1648 = vsel %vm396, %v1635, 0
        %v1651 = vsel %vm299, %v1644, 0
        %v1654 = vsel %vm299, %v1645, 0
        %v1657 = vsel %vm299, %v1646, 0
        %1659 = vmatprep.subr.bf16.mxu0 %v1654
        %1660 = vmatpush1.bf16.msra.mxu0 %v1651
        %1661 = vmatprep.subr.bf16.mxu0 0
        %1662 = vmatpush1.bf16.msra.mxu0 0
        %1663 = vmatprep.subr.bf16.mxu0 0
        %1664 = vmatpush1.bf16.msra.mxu0 0
        %1665 = vmatprep.subr.bf16.mxu0 0
        %1666 = vmatpush1.bf16.msra.mxu0 0
        %1667 = vmatprep.subr.bf16.mxu0 0
        %1668 = vmatpush1.bf16.msra.mxu0 0
        %1669 = vmatprep.subr.bf16.mxu0 0
        %1670 = vmatpush1.bf16.msra.mxu0 0
        %1671 = vmatprep.subr.bf16.mxu0 0
        %1672 = vmatpush1.bf16.msra.mxu0 0
        %1673 = vmatprep.subr.bf16.mxu0 0
        %1674 = vmatpush1.bf16.msra.mxu0 0
        %1675 = vmatprep.subr.bf16.mxu0 0
        %1676 = vmatpush1.bf16.msra.mxu0 0
        %1677 = vmatprep.subr.bf16.mxu0 0
        %1678 = vmatpush1.bf16.msra.mxu0 0
        %1679 = vmatprep.subr.bf16.mxu0 0
        %1680 = vmatpush1.bf16.msra.mxu0 0
        %1681 = vmatprep.subr.bf16.mxu0 0
        %1682 = vmatpush1.bf16.msra.mxu0 0
        %1683 = vmatprep.subr.bf16.mxu0 0
        %1684 = vmatpush1.bf16.msra.mxu0 0
        %1685 = vmatprep.subr.bf16.mxu0 0
        %1686 = vmatpush1.bf16.msra.mxu0 0
        %1687 = vmatprep.subr.bf16.mxu0 0
        %1688 = vmatpush1.bf16.msra.mxu0 0
        %1689 = vmatprep.subr.bf16.mxu0 0
        %1690 = vmatpush1.bf16.msra.mxu0 0
        %1691 = vmatprep.mubr.bf16.mxu0 0
        %1692 = vmatmul.mubr.bf16.gmra.mrb[0].mxu0 %v1648
        %v1693 = vpop.f32.mrb[0].mxu0
        %v1694 = vadd.f32 0.0, %v1693
        %v1695 = vpop.f32.mrb[0].mxu0
        %v1696 = vadd.f32 0.0, %v1695
        %v1697 = vpop.f32.mrb[0].mxu0
        %v1698 = vpop.f32.mrb[0].mxu0
        %1699 = vdwg.mxu0
        %1700 = vmatprep.subr.bf16.mxu0 0
        %1701 = vmatpush1.bf16.msra.mxu0 %v1657
        %1702 = vmatprep.subr.bf16.mxu0 0
        %1703 = vmatpush1.bf16.msra.mxu0 0
        %1704 = vmatprep.subr.bf16.mxu0 0
        %1705 = vmatpush1.bf16.msra.mxu0 0
        %1706 = vmatprep.subr.bf16.mxu0 0
        %1707 = vmatpush1.bf16.msra.mxu0 0
        %1708 = vmatprep.subr.bf16.mxu0 0
        %1709 = vmatpush1.bf16.msra.mxu0 0
        %1710 = vmatprep.subr.bf16.mxu0 0
        %1711 = vmatpush1.bf16.msra.mxu0 0
        %1712 = vmatprep.subr.bf16.mxu0 0
        %1713 = vmatpush1.bf16.msra.mxu0 0
        %1714 = vmatprep.subr.bf16.mxu0 0
        %1715 = vmatpush1.bf16.msra.mxu0 0
        %1716 = vmatprep.subr.bf16.mxu0 0
        %1717 = vmatpush1.bf16.msra.mxu0 0
        %1718 = vmatprep.subr.bf16.mxu0 0
        %1719 = vmatpush1.bf16.msra.mxu0 0
        %1720 = vmatprep.subr.bf16.mxu0 0
        %1721 = vmatpush1.bf16.msra.mxu0 0
        %1722 = vmatprep.subr.bf16.mxu0 0
        %1723 = vmatpush1.bf16.msra.mxu0 0
        %1724 = vmatprep.subr.bf16.mxu0 0
        %1725 = vmatpush1.bf16.msra.mxu0 0
        %1726 = vmatprep.subr.bf16.mxu0 0
        %1727 = vmatpush1.bf16.msra.mxu0 0
        %1728 = vmatprep.subr.bf16.mxu0 0
        %1729 = vmatpush1.bf16.msra.mxu0 0
        %1730 = vmatprep.subr.bf16.mxu0 0
        %1731 = vmatpush1.bf16.msra.mxu0 0
        %1732 = vmatprep.mubr.bf16.mxu0 0
        %1733 = vmatmul.mubr.bf16.gmra.mrb[0].mxu0 %v1648
        %v1734 = vpop.f32.mrb[0].mxu0
        %v1735 = vadd.f32 0.0, %v1734
        %v1736 = vpop.f32.mrb[0].mxu0
        %v1737 = vpop.f32.mrb[0].mxu0
        %v1738 = vpop.f32.mrb[0].mxu0
        %1739 = vdwg.mxu0
        %v1740 = vadd.f32 %v1588, %v1694
        %v1741 = vadd.f32 %v1590, %v1696
        %v1742 = vadd.f32 %v1629, %v1735
        %s1743 = scalar_lea.vmem %s4, 12
        %v1744 = vld [vmem:[%s1743] sm:$0xf]
        %1745 = vrot.lane.b32.xlu0 %v1430, 110
        %v1746 = vpop.permute.xlu0 %1745
        %1747 = vrot.lane.b32.xlu0 %v1431, 110
        %v1748 = vpop.permute.xlu0 %1747
        %1749 = vrot.lane.b32.xlu0 %v1432, 110
        %v1750 = vpop.permute.xlu0 %1749
        %1751 = vrot.lane.b32.xlu0 %v1433, 110
        %v1752 = vpop.permute.xlu0 %1751
        %v1753 = vsel %vm706, %v1746, %v1748
        %v1754 = vsel %vm706, %v1748, %v1750
        %v1755 = vsel %vm706, %v1750, %v1752
        %v1757 = vsel %vm396, %v1744, 0
        %v1760 = vsel %vm299, %v1753, 0
        %v1763 = vsel %vm299, %v1754, 0
        %v1766 = vsel %vm299, %v1755, 0
        %1768 = vmatprep.subr.bf16.mxu0 %v1763
        %1769 = vmatpush1.bf16.msra.mxu0 %v1760
        %1770 = vmatprep.subr.bf16.mxu0 0
        %1771 = vmatpush1.bf16.msra.mxu0 0
        %1772 = vmatprep.subr.bf16.mxu0 0
        %1773 = vmatpush1.bf16.msra.mxu0 0
        %1774 = vmatprep.subr.bf16.mxu0 0
        %1775 = vmatpush1.bf16.msra.mxu0 0
        %1776 = vmatprep.subr.bf16.mxu0 0
        %1777 = vmatpush1.bf16.msra.mxu0 0
        %1778 = vmatprep.subr.bf16.mxu0 0
        %1779 = vmatpush1.bf16.msra.mxu0 0
        %1780 = vmatprep.subr.bf16.mxu0 0
        %1781 = vmatpush1.bf16.msra.mxu0 0
        %1782 = vmatprep.subr.bf16.mxu0 0
        %1783 = vmatpush1.bf16.msra.mxu0 0
        %1784 = vmatprep.subr.bf16.mxu0 0
        %1785 = vmatpush1.bf16.msra.mxu0 0
        %1786 = vmatprep.subr.bf16.mxu0 0
        %1787 = vmatpush1.bf16.msra.mxu0 0
        %1788 = vmatprep.subr.bf16.mxu0 0
        %1789 = vmatpush1.bf16.msra.mxu0 0
        %1790 = vmatprep.subr.bf16.mxu0 0
        %1791 = vmatpush1.bf16.msra.mxu0 0
        %1792 = vmatprep.subr.bf16.mxu0 0
        %1793 = vmatpush1.bf16.msra.mxu0 0
        %1794 = vmatprep.subr.bf16.mxu0 0
        %1795 = vmatpush1.bf16.msra.mxu0 0
        %1796 = vmatprep.subr.bf16.mxu0 0
        %1797 = vmatpush1.bf16.msra.mxu0 0
        %1798 = vmatprep.subr.bf16.mxu0 0
        %1799 = vmatpush1.bf16.msra.mxu0 0
        %1800 = vmatprep.mubr.bf16.mxu0 0
        %1801 = vmatmul.mubr.bf16.gmra.mrb[0].mxu0 %v1757
        %v1802 = vpop.f32.mrb[0].mxu0
        %v1803 = vadd.f32 0.0, %v1802
        %v1804 = vpop.f32.mrb[0].mxu0
        %v1805 = vadd.f32 0.0, %v1804
        %v1806 = vpop.f32.mrb[0].mxu0
        %v1807 = vpop.f32.mrb[0].mxu0
        %1808 = vdwg.mxu0
        %1809 = vmatprep.subr.bf16.mxu0 0
        %1810 = vmatpush1.bf16.msra.mxu0 %v1766
        %1811 = vmatprep.subr.bf16.mxu0 0
        %1812 = vmatpush1.bf16.msra.mxu0 0
        %1813 = vmatprep.subr.bf16.mxu0 0
        %1814 = vmatpush1.bf16.msra.mxu0 0
        %1815 = vmatprep.subr.bf16.mxu0 0
        %1816 = vmatpush1.bf16.msra.mxu0 0
        %1817 = vmatprep.subr.bf16.mxu0 0
        %1818 = vmatpush1.bf16.msra.mxu0 0
        %1819 = vmatprep.subr.bf16.mxu0 0
        %1820 = vmatpush1.bf16.msra.mxu0 0
        %1821 = vmatprep.subr.bf16.mxu0 0
        %1822 = vmatpush1.bf16.msra.mxu0 0
        %1823 = vmatprep.subr.bf16.mxu0 0
        %1824 = vmatpush1.bf16.msra.mxu0 0
        %1825 = vmatprep.subr.bf16.mxu0 0
        %1826 = vmatpush1.bf16.msra.mxu0 0
        %1827 = vmatprep.subr.bf16.mxu0 0
        %1828 = vmatpush1.bf16.msra.mxu0 0
        %1829 = vmatprep.subr.bf16.mxu0 0
        %1830 = vmatpush1.bf16.msra.mxu0 0
        %1831 = vmatprep.subr.bf16.mxu0 0
        %1832 = vmatpush1.bf16.msra.mxu0 0
        %1833 = vmatprep.subr.bf16.mxu0 0
        %1834 = vmatpush1.bf16.msra.mxu0 0
        %1835 = vmatprep.subr.bf16.mxu0 0
        %1836 = vmatpush1.bf16.msra.mxu0 0
        %1837 = vmatprep.subr.bf16.mxu0 0
        %1838 = vmatpush1.bf16.msra.mxu0 0
        %1839 = vmatprep.subr.bf16.mxu0 0
        %1840 = vmatpush1.bf16.msra.mxu0 0
        %1841 = vmatprep.mubr.bf16.mxu0 0
        %1842 = vmatmul.mubr.bf16.gmra.mrb[0].mxu0 %v1757
        %v1843 = vpop.f32.mrb[0].mxu0
        %v1844 = vadd.f32 0.0, %v1843
        %v1845 = vpop.f32.mrb[0].mxu0
        %v1846 = vpop.f32.mrb[0].mxu0
        %v1847 = vpop.f32.mrb[0].mxu0
        %1848 = vdwg.mxu0
        %v1849 = vadd.f32 %v1740, %v1803
        %v1850 = vadd.f32 %v1741, %v1805
        %v1851 = vadd.f32 %v1742, %v1844
        %s1852 = scalar_lea.vmem %s4, 16
        %v1853 = vld [vmem:[%s1852] sm:$0xf]
        %1854 = vrot.lane.b32.xlu0 %v1430, 109
        %v1855 = vpop.permute.xlu0 %1854
        %1856 = vrot.lane.b32.xlu0 %v1431, 109
        %v1857 = vpop.permute.xlu0 %1856
        %1858 = vrot.lane.b32.xlu0 %v1432, 109
        %v1859 = vpop.permute.xlu0 %1858
        %1860 = vrot.lane.b32.xlu0 %v1433, 109
        %v1861 = vpop.permute.xlu0 %1860
        %v1862 = vsel %vm816, %v1855, %v1857
        %v1863 = vsel %vm816, %v1857, %v1859
        %v1864 = vsel %vm816, %v1859, %v1861
        %v1866 = vsel %vm396, %v1853, 0
        %v1869 = vsel %vm299, %v1862, 0
        %v1872 = vsel %vm299, %v1863, 0
        %v1875 = vsel %vm299, %v1864, 0
        %1877 = vmatprep.subr.bf16.mxu0 %v1872
        %1878 = vmatpush1.bf16.msra.mxu0 %v1869
        %1879 = vmatprep.subr.bf16.mxu0 0
        %1880 = vmatpush1.bf16.msra.mxu0 0
        %1881 = vmatprep.subr.bf16.mxu0 0
        %1882 = vmatpush1.bf16.msra.mxu0 0
        %1883 = vmatprep.subr.bf16.mxu0 0
        %1884 = vmatpush1.bf16.msra.mxu0 0
        %1885 = vmatprep.subr.bf16.mxu0 0
        %1886 = vmatpush1.bf16.msra.mxu0 0
        %1887 = vmatprep.subr.bf16.mxu0 0
        %1888 = vmatpush1.bf16.msra.mxu0 0
        %1889 = vmatprep.subr.bf16.mxu0 0
        %1890 = vmatpush1.bf16.msra.mxu0 0
        %1891 = vmatprep.subr.bf16.mxu0 0
        %1892 = vmatpush1.bf16.msra.mxu0 0
        %1893 = vmatprep.subr.bf16.mxu0 0
        %1894 = vmatpush1.bf16.msra.mxu0 0
        %1895 = vmatprep.subr.bf16.mxu0 0
        %1896 = vmatpush1.bf16.msra.mxu0 0
        %1897 = vmatprep.subr.bf16.mxu0 0
        %1898 = vmatpush1.bf16.msra.mxu0 0
        %1899 = vmatprep.subr.bf16.mxu0 0
        %1900 = vmatpush1.bf16.msra.mxu0 0
        %1901 = vmatprep.subr.bf16.mxu0 0
        %1902 = vmatpush1.bf16.msra.mxu0 0
        %1903 = vmatprep.subr.bf16.mxu0 0
        %1904 = vmatpush1.bf16.msra.mxu0 0
        %1905 = vmatprep.subr.bf16.mxu0 0
        %1906 = vmatpush1.bf16.msra.mxu0 0
        %1907 = vmatprep.subr.bf16.mxu0 0
        %1908 = vmatpush1.bf16.msra.mxu0 0
        %1909 = vmatprep.mubr.bf16.mxu0 0
        %1910 = vmatmul.mubr.bf16.gmra.mrb[0].mxu0 %v1866
        %v1911 = vpop.f32.mrb[0].mxu0
        %v1912 = vadd.f32 0.0, %v1911
        %v1913 = vpop.f32.mrb[0].mxu0
        %v1914 = vadd.f32 0.0, %v1913
        %v1915 = vpop.f32.mrb[0].mxu0
        %v1916 = vpop.f32.mrb[0].mxu0
        %1917 = vdwg.mxu0
        %1918 = vmatprep.subr.bf16.mxu0 0
        %1919 = vmatpush1.bf16.msra.mxu0 %v1875
        %1920 = vmatprep.subr.bf16.mxu0 0
        %1921 = vmatpush1.bf16.msra.mxu0 0
        %1922 = vmatprep.subr.bf16.mxu0 0
        %1923 = vmatpush1.bf16.msra.mxu0 0
        %1924 = vmatprep.subr.bf16.mxu0 0
        %1925 = vmatpush1.bf16.msra.mxu0 0
        %1926 = vmatprep.subr.bf16.mxu0 0
        %1927 = vmatpush1.bf16.msra.mxu0 0
        %1928 = vmatprep.subr.bf16.mxu0 0
        %1929 = vmatpush1.bf16.msra.mxu0 0
        %1930 = vmatprep.subr.bf16.mxu0 0
        %1931 = vmatpush1.bf16.msra.mxu0 0
        %1932 = vmatprep.subr.bf16.mxu0 0
        %1933 = vmatpush1.bf16.msra.mxu0 0
        %1934 = vmatprep.subr.bf16.mxu0 0
        %1935 = vmatpush1.bf16.msra.mxu0 0
        %1936 = vmatprep.subr.bf16.mxu0 0
        %1937 = vmatpush1.bf16.msra.mxu0 0
        %1938 = vmatprep.subr.bf16.mxu0 0
        %1939 = vmatpush1.bf16.msra.mxu0 0
        %1940 = vmatprep.subr.bf16.mxu0 0
        %1941 = vmatpush1.bf16.msra.mxu0 0
        %1942 = vmatprep.subr.bf16.mxu0 0
        %1943 = vmatpush1.bf16.msra.mxu0 0
        %1944 = vmatprep.subr.bf16.mxu0 0
        %1945 = vmatpush1.bf16.msra.mxu0 0
        %1946 = vmatprep.subr.bf16.mxu0 0
        %1947 = vmatpush1.bf16.msra.mxu0 0
        %1948 = vmatprep.subr.bf16.mxu0 0
        %1949 = vmatpush1.bf16.msra.mxu0 0
        %1950 = vmatprep.mubr.bf16.mxu0 0
        %1951 = vmatmul.mubr.bf16.gmra.mrb[0].mxu0 %v1866
        %v1952 = vpop.f32.mrb[0].mxu0
        %v1953 = vadd.f32 0.0, %v1952
        %v1954 = vpop.f32.mrb[0].mxu0
        %v1955 = vpop.f32.mrb[0].mxu0
        %v1956 = vpop.f32.mrb[0].mxu0
        %1957 = vdwg.mxu0
        %v1958 = vadd.f32 %v1849, %v1912
        %v1959 = vadd.f32 %v1850, %v1914
        %v1960 = vadd.f32 %v1851, %v1953
        %s1961 = scalar_lea.vmem %s4, 20
        %v1962 = vld [vmem:[%s1961] sm:$0xf]
        %1963 = vrot.lane.b32.xlu0 %v1430, 108
        %v1964 = vpop.permute.xlu0 %1963
        %1965 = vrot.lane.b32.xlu0 %v1431, 108
        %v1966 = vpop.permute.xlu0 %1965
        %1967 = vrot.lane.b32.xlu0 %v1432, 108
        %v1968 = vpop.permute.xlu0 %1967
        %1969 = vrot.lane.b32.xlu0 %v1433, 108
        %v1970 = vpop.permute.xlu0 %1969
        %v1971 = vsel %vm926, %v1964, %v1966
        %v1972 = vsel %vm926, %v1966, %v1968
        %v1973 = vsel %vm926, %v1968, %v1970
        %v1975 = vsel %vm396, %v1962, 0
        %v1978 = vsel %vm299, %v1971, 0
        %v1981 = vsel %vm299, %v1972, 0
        %v1984 = vsel %vm299, %v1973, 0
        %1986 = vmatprep.subr.bf16.mxu0 %v1981
        %1987 = vmatpush1.bf16.msra.mxu0 %v1978
        %1988 = vmatprep.subr.bf16.mxu0 0
        %1989 = vmatpush1.bf16.msra.mxu0 0
        %1990 = vmatprep.subr.bf16.mxu0 0
        %1991 = vmatpush1.bf16.msra.mxu0 0
        %1992 = vmatprep.subr.bf16.mxu0 0
        %1993 = vmatpush1.bf16.msra.mxu0 0
        %1994 = vmatprep.subr.bf16.mxu0 0
        %1995 = vmatpush1.bf16.msra.mxu0 0
        %1996 = vmatprep.subr.bf16.mxu0 0
        %1997 = vmatpush1.bf16.msra.mxu0 0
        %1998 = vmatprep.subr.bf16.mxu0 0
        %1999 = vmatpush1.bf16.msra.mxu0 0
        %2000 = vmatprep.subr.bf16.mxu0 0
        %2001 = vmatpush1.bf16.msra.mxu0 0
        %2002 = vmatprep.subr.bf16.mxu0 0
        %2003 = vmatpush1.bf16.msra.mxu0 0
        %2004 = vmatprep.subr.bf16.mxu0 0
        %2005 = vmatpush1.bf16.msra.mxu0 0
        %2006 = vmatprep.subr.bf16.mxu0 0
        %2007 = vmatpush1.bf16.msra.mxu0 0
        %2008 = vmatprep.subr.bf16.mxu0 0
        %2009 = vmatpush1.bf16.msra.mxu0 0
        %2010 = vmatprep.subr.bf16.mxu0 0
        %2011 = vmatpush1.bf16.msra.mxu0 0
        %2012 = vmatprep.subr.bf16.mxu0 0
        %2013 = vmatpush1.bf16.msra.mxu0 0
        %2014 = vmatprep.subr.bf16.mxu0 0
        %2015 = vmatpush1.bf16.msra.mxu0 0
        %2016 = vmatprep.subr.bf16.mxu0 0
        %2017 = vmatpush1.bf16.msra.mxu0 0
        %2018 = vmatprep.mubr.bf16.mxu0 0
        %2019 = vmatmul.mubr.bf16.gmra.mrb[0].mxu0 %v1975
        %v2020 = vpop.f32.mrb[0].mxu0
        %v2021 = vadd.f32 0.0, %v2020
        %v2022 = vpop.f32.mrb[0].mxu0
        %v2023 = vadd.f32 0.0, %v2022
        %v2024 = vpop.f32.mrb[0].mxu0
        %v2025 = vpop.f32.mrb[0].mxu0
        %2026 = vdwg.mxu0
        %2027 = vmatprep.subr.bf16.mxu0 0
        %2028 = vmatpush1.bf16.msra.mxu0 %v1984
        %2029 = vmatprep.subr.bf16.mxu0 0
        %2030 = vmatpush1.bf16.msra.mxu0 0
        %2031 = vmatprep.subr.bf16.mxu0 0
        %2032 = vmatpush1.bf16.msra.mxu0 0
        %2033 = vmatprep.subr.bf16.mxu0 0
        %2034 = vmatpush1.bf16.msra.mxu0 0
        %2035 = vmatprep.subr.bf16.mxu0 0
        %2036 = vmatpush1.bf16.msra.mxu0 0
        %2037 = vmatprep.subr.bf16.mxu0 0
        %2038 = vmatpush1.bf16.msra.mxu0 0
        %2039 = vmatprep.subr.bf16.mxu0 0
        %2040 = vmatpush1.bf16.msra.mxu0 0
        %2041 = vmatprep.subr.bf16.mxu0 0
        %2042 = vmatpush1.bf16.msra.mxu0 0
        %2043 = vmatprep.subr.bf16.mxu0 0
        %2044 = vmatpush1.bf16.msra.mxu0 0
        %2045 = vmatprep.subr.bf16.mxu0 0
        %2046 = vmatpush1.bf16.msra.mxu0 0
        %2047 = vmatprep.subr.bf16.mxu0 0
        %2048 = vmatpush1.bf16.msra.mxu0 0
        %2049 = vmatprep.subr.bf16.mxu0 0
        %2050 = vmatpush1.bf16.msra.mxu0 0
        %2051 = vmatprep.subr.bf16.mxu0 0
        %2052 = vmatpush1.bf16.msra.mxu0 0
        %2053 = vmatprep.subr.bf16.mxu0 0
        %2054 = vmatpush1.bf16.msra.mxu0 0
        %2055 = vmatprep.subr.bf16.mxu0 0
        %2056 = vmatpush1.bf16.msra.mxu0 0
        %2057 = vmatprep.subr.bf16.mxu0 0
        %2058 = vmatpush1.bf16.msra.mxu0 0
        %2059 = vmatprep.mubr.bf16.mxu0 0
        %2060 = vmatmul.mubr.bf16.gmra.mrb[0].mxu0 %v1975
        %v2061 = vpop.f32.mrb[0].mxu0
        %v2062 = vadd.f32 0.0, %v2061
        %v2063 = vpop.f32.mrb[0].mxu0
        %v2064 = vpop.f32.mrb[0].mxu0
        %v2065 = vpop.f32.mrb[0].mxu0
        %2066 = vdwg.mxu0
        %v2067 = vadd.f32 %v1958, %v2021
        %v2068 = vadd.f32 %v1959, %v2023
        %v2069 = vadd.f32 %v1960, %v2062
        %s2070 = scalar_lea.vmem %s4, 24
        %v2071 = vld [vmem:[%s2070] sm:$0xf]
        %2072 = vrot.lane.b32.xlu0 %v1430, 92
        %v2073 = vpop.permute.xlu0 %2072
        %2074 = vrot.lane.b32.xlu0 %v1431, 92
        %v2075 = vpop.permute.xlu0 %2074
        %2076 = vrot.lane.b32.xlu0 %v1432, 92
        %v2077 = vpop.permute.xlu0 %2076
        %2078 = vrot.lane.b32.xlu0 %v1433, 92
        %v2079 = vpop.permute.xlu0 %2078
        %v2080 = vsel %vm1036, %v2073, %v2075
        %v2081 = vsel %vm1036, %v2075, %v2077
        %v2082 = vsel %vm1036, %v2077, %v2079
        %v2084 = vsel %vm396, %v2071, 0
        %v2087 = vsel %vm299, %v2080, 0
        %v2090 = vsel %vm299, %v2081, 0
        %v2093 = vsel %vm299, %v2082, 0
        %2095 = vmatprep.subr.bf16.mxu0 %v2090
        %2096 = vmatpush1.bf16.msra.mxu0 %v2087
        %2097 = vmatprep.subr.bf16.mxu0 0
        %2098 = vmatpush1.bf16.msra.mxu0 0
        %2099 = vmatprep.subr.bf16.mxu0 0
        %2100 = vmatpush1.bf16.msra.mxu0 0
        %2101 = vmatprep.subr.bf16.mxu0 0
        %2102 = vmatpush1.bf16.msra.mxu0 0
        %2103 = vmatprep.subr.bf16.mxu0 0
        %2104 = vmatpush1.bf16.msra.mxu0 0
        %2105 = vmatprep.subr.bf16.mxu0 0
        %2106 = vmatpush1.bf16.msra.mxu0 0
        %2107 = vmatprep.subr.bf16.mxu0 0
        %2108 = vmatpush1.bf16.msra.mxu0 0
        %2109 = vmatprep.subr.bf16.mxu0 0
        %2110 = vmatpush1.bf16.msra.mxu0 0
        %2111 = vmatprep.subr.bf16.mxu0 0
        %2112 = vmatpush1.bf16.msra.mxu0 0
        %2113 = vmatprep.subr.bf16.mxu0 0
        %2114 = vmatpush1.bf16.msra.mxu0 0
        %2115 = vmatprep.subr.bf16.mxu0 0
        %2116 = vmatpush1.bf16.msra.mxu0 0
        %2117 = vmatprep.subr.bf16.mxu0 0
        %2118 = vmatpush1.bf16.msra.mxu0 0
        %2119 = vmatprep.subr.bf16.mxu0 0
        %2120 = vmatpush1.bf16.msra.mxu0 0
        %2121 = vmatprep.subr.bf16.mxu0 0
        %2122 = vmatpush1.bf16.msra.mxu0 0
        %2123 = vmatprep.subr.bf16.mxu0 0
        %2124 = vmatpush1.bf16.msra.mxu0 0
        %2125 = vmatprep.subr.bf16.mxu0 0
        %2126 = vmatpush1.bf16.msra.mxu0 0
        %2127 = vmatprep.mubr.bf16.mxu0 0
        %2128 = vmatmul.mubr.bf16.gmra.mrb[0].mxu0 %v2084
        %v2129 = vpop.f32.mrb[0].mxu0
        %v2130 = vadd.f32 0.0, %v2129
        %v2131 = vpop.f32.mrb[0].mxu0
        %v2132 = vadd.f32 0.0, %v2131
        %v2133 = vpop.f32.mrb[0].mxu0
        %v2134 = vpop.f32.mrb[0].mxu0
        %2135 = vdwg.mxu0
        %2136 = vmatprep.subr.bf16.mxu0 0
        %2137 = vmatpush1.bf16.msra.mxu0 %v2093
        %2138 = vmatprep.subr.bf16.mxu0 0
        %2139 = vmatpush1.bf16.msra.mxu0 0
        %2140 = vmatprep.subr.bf16.mxu0 0
        %2141 = vmatpush1.bf16.msra.mxu0 0
        %2142 = vmatprep.subr.bf16.mxu0 0
        %2143 = vmatpush1.bf16.msra.mxu0 0
        %2144 = vmatprep.subr.bf16.mxu0 0
        %2145 = vmatpush1.bf16.msra.mxu0 0
        %2146 = vmatprep.subr.bf16.mxu0 0
        %2147 = vmatpush1.bf16.msra.mxu0 0
        %2148 = vmatprep.subr.bf16.mxu0 0
        %2149 = vmatpush1.bf16.msra.mxu0 0
        %2150 = vmatprep.subr.bf16.mxu0 0
        %2151 = vmatpush1.bf16.msra.mxu0 0
        %2152 = vmatprep.subr.bf16.mxu0 0
        %2153 = vmatpush1.bf16.msra.mxu0 0
        %2154 = vmatprep.subr.bf16.mxu0 0
        %2155 = vmatpush1.bf16.msra.mxu0 0
        %2156 = vmatprep.subr.bf16.mxu0 0
        %2157 = vmatpush1.bf16.msra.mxu0 0
        %2158 = vmatprep.subr.bf16.mxu0 0
        %2159 = vmatpush1.bf16.msra.mxu0 0
        %2160 = vmatprep.subr.bf16.mxu0 0
        %2161 = vmatpush1.bf16.msra.mxu0 0
        %2162 = vmatprep.subr.bf16.mxu0 0
        %2163 = vmatpush1.bf16.msra.mxu0 0
        %2164 = vmatprep.subr.bf16.mxu0 0
        %2165 = vmatpush1.bf16.msra.mxu0 0
        %2166 = vmatprep.subr.bf16.mxu0 0
        %2167 = vmatpush1.bf16.msra.mxu0 0
        %2168 = vmatprep.mubr.bf16.mxu0 0
        %2169 = vmatmul.mubr.bf16.gmra.mrb[0].mxu0 %v2084
        %v2170 = vpop.f32.mrb[0].mxu0
        %v2171 = vadd.f32 0.0, %v2170
        %v2172 = vpop.f32.mrb[0].mxu0
        %v2173 = vpop.f32.mrb[0].mxu0
        %v2174 = vpop.f32.mrb[0].mxu0
        %2175 = vdwg.mxu0
        %v2176 = vadd.f32 %v2067, %v2130
        %v2177 = vadd.f32 %v2068, %v2132
        %v2178 = vadd.f32 %v2069, %v2171
        %s2179 = scalar_lea.vmem %s4, 28
        %v2180 = vld [vmem:[%s2179] sm:$0xf]
        %2181 = vrot.lane.b32.xlu0 %v1430, 91
        %v2182 = vpop.permute.xlu0 %2181
        %2183 = vrot.lane.b32.xlu0 %v1431, 91
        %v2184 = vpop.permute.xlu0 %2183
        %2185 = vrot.lane.b32.xlu0 %v1432, 91
        %v2186 = vpop.permute.xlu0 %2185
        %2187 = vrot.lane.b32.xlu0 %v1433, 91
        %v2188 = vpop.permute.xlu0 %2187
        %v2189 = vsel %vm1146, %v2182, %v2184
        %v2190 = vsel %vm1146, %v2184, %v2186
        %v2191 = vsel %vm1146, %v2186, %v2188
        %v2193 = vsel %vm396, %v2180, 0
        %v2196 = vsel %vm299, %v2189, 0
        %v2199 = vsel %vm299, %v2190, 0
        %v2202 = vsel %vm299, %v2191, 0
        %2204 = vmatprep.subr.bf16.mxu0 %v2199
        %2205 = vmatpush1.bf16.msra.mxu0 %v2196
        %2206 = vmatprep.subr.bf16.mxu0 0
        %2207 = vmatpush1.bf16.msra.mxu0 0
        %2208 = vmatprep.subr.bf16.mxu0 0
        %2209 = vmatpush1.bf16.msra.mxu0 0
        %2210 = vmatprep.subr.bf16.mxu0 0
        %2211 = vmatpush1.bf16.msra.mxu0 0
        %2212 = vmatprep.subr.bf16.mxu0 0
        %2213 = vmatpush1.bf16.msra.mxu0 0
        %2214 = vmatprep.subr.bf16.mxu0 0
        %2215 = vmatpush1.bf16.msra.mxu0 0
        %2216 = vmatprep.subr.bf16.mxu0 0
        %2217 = vmatpush1.bf16.msra.mxu0 0
        %2218 = vmatprep.subr.bf16.mxu0 0
        %2219 = vmatpush1.bf16.msra.mxu0 0
        %2220 = vmatprep.subr.bf16.mxu0 0
        %2221 = vmatpush1.bf16.msra.mxu0 0
        %2222 = vmatprep.subr.bf16.mxu0 0
        %2223 = vmatpush1.bf16.msra.mxu0 0
        %2224 = vmatprep.subr.bf16.mxu0 0
        %2225 = vmatpush1.bf16.msra.mxu0 0
        %2226 = vmatprep.subr.bf16.mxu0 0
        %2227 = vmatpush1.bf16.msra.mxu0 0
        %2228 = vmatprep.subr.bf16.mxu0 0
        %2229 = vmatpush1.bf16.msra.mxu0 0
        %2230 = vmatprep.subr.bf16.mxu0 0
        %2231 = vmatpush1.bf16.msra.mxu0 0
        %2232 = vmatprep.subr.bf16.mxu0 0
        %2233 = vmatpush1.bf16.msra.mxu0 0
        %2234 = vmatprep.subr.bf16.mxu0 0
        %2235 = vmatpush1.bf16.msra.mxu0 0
        %2236 = vmatprep.mubr.bf16.mxu0 0
        %2237 = vmatmul.mubr.bf16.gmra.mrb[0].mxu0 %v2193
        %v2238 = vpop.f32.mrb[0].mxu0
        %v2239 = vadd.f32 0.0, %v2238
        %v2240 = vpop.f32.mrb[0].mxu0
        %v2241 = vadd.f32 0.0, %v2240
        %v2242 = vpop.f32.mrb[0].mxu0
        %v2243 = vpop.f32.mrb[0].mxu0
        %2244 = vdwg.mxu0
        %2245 = vmatprep.subr.bf16.mxu0 0
        %2246 = vmatpush1.bf16.msra.mxu0 %v2202
        %2247 = vmatprep.subr.bf16.mxu0 0
        %2248 = vmatpush1.bf16.msra.mxu0 0
        %2249 = vmatprep.subr.bf16.mxu0 0
        %2250 = vmatpush1.bf16.msra.mxu0 0
        %2251 = vmatprep.subr.bf16.mxu0 0
        %2252 = vmatpush1.bf16.msra.mxu0 0
        %2253 = vmatprep.subr.bf16.mxu0 0
        %2254 = vmatpush1.bf16.msra.mxu0 0
        %2255 = vmatprep.subr.bf16.mxu0 0
        %2256 = vmatpush1.bf16.msra.mxu0 0
        %2257 = vmatprep.subr.bf16.mxu0 0
        %2258 = vmatpush1.bf16.msra.mxu0 0
        %2259 = vmatprep.subr.bf16.mxu0 0
        %2260 = vmatpush1.bf16.msra.mxu0 0
        %2261 = vmatprep.subr.bf16.mxu0 0
        %2262 = vmatpush1.bf16.msra.mxu0 0
        %2263 = vmatprep.subr.bf16.mxu0 0
        %2264 = vmatpush1.bf16.msra.mxu0 0
        %2265 = vmatprep.subr.bf16.mxu0 0
        %2266 = vmatpush1.bf16.msra.mxu0 0
        %2267 = vmatprep.subr.bf16.mxu0 0
        %2268 = vmatpush1.bf16.msra.mxu0 0
        %2269 = vmatprep.subr.bf16.mxu0 0
        %2270 = vmatpush1.bf16.msra.mxu0 0
        %2271 = vmatprep.subr.bf16.mxu0 0
        %2272 = vmatpush1.bf16.msra.mxu0 0
        %2273 = vmatprep.subr.bf16.mxu0 0
        %2274 = vmatpush1.bf16.msra.mxu0 0
        %2275 = vmatprep.subr.bf16.mxu0 0
        %2276 = vmatpush1.bf16.msra.mxu0 0
        %2277 = vmatprep.mubr.bf16.mxu0 0
        %2278 = vmatmul.mubr.bf16.gmra.mrb[0].mxu0 %v2193
        %v2279 = vpop.f32.mrb[0].mxu0
        %v2280 = vadd.f32 0.0, %v2279
        %v2281 = vpop.f32.mrb[0].mxu0
        %v2282 = vpop.f32.mrb[0].mxu0
        %v2283 = vpop.f32.mrb[0].mxu0
        %2284 = vdwg.mxu0
        %v2285 = vadd.f32 %v2176, %v2239
        %v2286 = vadd.f32 %v2177, %v2241
        %v2287 = vadd.f32 %v2178, %v2280
        %s2288 = scalar_lea.vmem %s4, 32
        %v2289 = vld [vmem:[%s2288] sm:$0xf]
        %2290 = vrot.lane.b32.xlu0 %v1430, 90
        %v2291 = vpop.permute.xlu0 %2290
        %2292 = vrot.lane.b32.xlu0 %v1431, 90
        %v2293 = vpop.permute.xlu0 %2292
        %2294 = vrot.lane.b32.xlu0 %v1432, 90
        %v2295 = vpop.permute.xlu0 %2294
        %2296 = vrot.lane.b32.xlu0 %v1433, 90
        %v2297 = vpop.permute.xlu0 %2296
        %v2298 = vsel %vm1256, %v2291, %v2293
        %v2299 = vsel %vm1256, %v2293, %v2295
        %v2300 = vsel %vm1256, %v2295, %v2297
        %v2302 = vsel %vm396, %v2289, 0
        %v2305 = vsel %vm299, %v2298, 0
        %v2308 = vsel %vm299, %v2299, 0
        %v2311 = vsel %vm299, %v2300, 0
        %2313 = vmatprep.subr.bf16.mxu0 %v2308
        %2314 = vmatpush1.bf16.msra.mxu0 %v2305
        %2315 = vmatprep.subr.bf16.mxu0 0
        %2316 = vmatpush1.bf16.msra.mxu0 0
        %2317 = vmatprep.subr.bf16.mxu0 0
        %2318 = vmatpush1.bf16.msra.mxu0 0
        %2319 = vmatprep.subr.bf16.mxu0 0
        %2320 = vmatpush1.bf16.msra.mxu0 0
        %2321 = vmatprep.subr.bf16.mxu0 0
        %2322 = vmatpush1.bf16.msra.mxu0 0
        %2323 = vmatprep.subr.bf16.mxu0 0
        %2324 = vmatpush1.bf16.msra.mxu0 0
        %2325 = vmatprep.subr.bf16.mxu0 0
        %2326 = vmatpush1.bf16.msra.mxu0 0
        %2327 = vmatprep.subr.bf16.mxu0 0
        %2328 = vmatpush1.bf16.msra.mxu0 0
        %2329 = vmatprep.subr.bf16.mxu0 0
        %2330 = vmatpush1.bf16.msra.mxu0 0
        %2331 = vmatprep.subr.bf16.mxu0 0
        %2332 = vmatpush1.bf16.msra.mxu0 0
        %2333 = vmatprep.subr.bf16.mxu0 0
        %2334 = vmatpush1.bf16.msra.mxu0 0
        %2335 = vmatprep.subr.bf16.mxu0 0
        %2336 = vmatpush1.bf16.msra.mxu0 0
        %2337 = vmatprep.subr.bf16.mxu0 0
        %2338 = vmatpush1.bf16.msra.mxu0 0
        %2339 = vmatprep.subr.bf16.mxu0 0
        %2340 = vmatpush1.bf16.msra.mxu0 0
        %2341 = vmatprep.subr.bf16.mxu0 0
        %2342 = vmatpush1.bf16.msra.mxu0 0
        %2343 = vmatprep.subr.bf16.mxu0 0
        %2344 = vmatpush1.bf16.msra.mxu0 0
        %2345 = vmatprep.mubr.bf16.mxu0 0
        %2346 = vmatmul.mubr.bf16.gmra.mrb[0].mxu0 %v2302
        %v2347 = vpop.f32.mrb[0].mxu0
        %v2348 = vadd.f32 0.0, %v2347
        %v2349 = vpop.f32.mrb[0].mxu0
        %v2350 = vadd.f32 0.0, %v2349
        %v2351 = vpop.f32.mrb[0].mxu0
        %v2352 = vpop.f32.mrb[0].mxu0
        %2353 = vdwg.mxu0
        %2354 = vmatprep.subr.bf16.mxu0 0
        %2355 = vmatpush1.bf16.msra.mxu0 %v2311
        %2356 = vmatprep.subr.bf16.mxu0 0
        %2357 = vmatpush1.bf16.msra.mxu0 0
        %2358 = vmatprep.subr.bf16.mxu0 0
        %2359 = vmatpush1.bf16.msra.mxu0 0
        %2360 = vmatprep.subr.bf16.mxu0 0
        %2361 = vmatpush1.bf16.msra.mxu0 0
        %2362 = vmatprep.subr.bf16.mxu0 0
        %2363 = vmatpush1.bf16.msra.mxu0 0
        %2364 = vmatprep.subr.bf16.mxu0 0
        %2365 = vmatpush1.bf16.msra.mxu0 0
        %2366 = vmatprep.subr.bf16.mxu0 0
        %2367 = vmatpush1.bf16.msra.mxu0 0
        %2368 = vmatprep.subr.bf16.mxu0 0
        %2369 = vmatpush1.bf16.msra.mxu0 0
        %2370 = vmatprep.subr.bf16.mxu0 0
        %2371 = vmatpush1.bf16.msra.mxu0 0
        %2372 = vmatprep.subr.bf16.mxu0 0
        %2373 = vmatpush1.bf16.msra.mxu0 0
        %2374 = vmatprep.subr.bf16.mxu0 0
        %2375 = vmatpush1.bf16.msra.mxu0 0
        %2376 = vmatprep.subr.bf16.mxu0 0
        %2377 = vmatpush1.bf16.msra.mxu0 0
        %2378 = vmatprep.subr.bf16.mxu0 0
        %2379 = vmatpush1.bf16.msra.mxu0 0
        %2380 = vmatprep.subr.bf16.mxu0 0
        %2381 = vmatpush1.bf16.msra.mxu0 0
        %2382 = vmatprep.subr.bf16.mxu0 0
        %2383 = vmatpush1.bf16.msra.mxu0 0
        %2384 = vmatprep.subr.bf16.mxu0 0
        %2385 = vmatpush1.bf16.msra.mxu0 0
        %2386 = vmatprep.mubr.bf16.mxu0 0
        %2387 = vmatmul.mubr.bf16.gmra.mrb[0].mxu0 %v2302
        %v2388 = vpop.f32.mrb[0].mxu0
        %v2389 = vadd.f32 0.0, %v2388
        %v2390 = vpop.f32.mrb[0].mxu0
        %v2391 = vpop.f32.mrb[0].mxu0
        %v2392 = vpop.f32.mrb[0].mxu0
        %2393 = vdwg.mxu0
        %v2394 = vadd.f32 %v2285, %v2348
        %v2395 = vadd.f32 %v2286, %v2350
        %v2396 = vadd.f32 %v2287, %v2389
        %v2397 = vld [vmem:[%s5] sm:$0xff]
        %2399 = vset.pattern.permute.xlu0 0
        %2400 = vperm.xlu0 %2399, %v2397
        %v2401 = vpop.permute.xlu0 %2400
        %v2403 = vadd.f32 %v2394, %v2401
        %v2404 = vadd.f32 %v2395, %v2401
        %v2405 = vadd.f32 %v2396, %v2401
        %v2406 = vmax.f32 %v2403, 0.0
        %v2407 = vmax.f32 %v2404, 0.0
        %v2408 = vmax.f32 %v2405, 0.0
        %2410 = vrot.lane.b32.xlu0 %v2406, 109
        %v2411 = vpop.permute.xlu0 %2410
        %vm2413 = vcmask 130048
        %2414 = vst.msk [vmem:[%s286] sm:$0xff] %vm2413, %v2411
        %2415 = vrot.lane.b32.xlu0 %v2406, 107
        %v2416 = vpop.permute.xlu0 %2415
        %vm2418 = vcmask 261248
        %2419 = vst.msk [vmem:[%s286] sm:$0xff] %vm2418, %v2416
        %2420 = vrot.lane.b32.xlu0 %v2406, 105
        %v2421 = vpop.permute.xlu0 %2420
        %vm2423 = vcmask 392448
        %2424 = vst.msk [vmem:[%s286] sm:$0xff] %vm2423, %v2421
        %2425 = vrot.lane.b32.xlu0 %v2406, 103
        %v2426 = vpop.permute.xlu0 %2425
        %vm2428 = vcmask 523648
        %2429 = vst.msk [vmem:[%s286] sm:$0xff] %vm2428, %v2426
        %2430 = vrot.lane.b32.xlu0 %v2406, 101
        %v2431 = vpop.permute.xlu0 %2430
        %vm2433 = vcmask 654848
        %2434 = vst.msk [vmem:[%s286] sm:$0xff] %vm2433, %v2431
        %2435 = vrot.lane.b32.xlu0 %v2406, 99
        %v2436 = vpop.permute.xlu0 %2435
        %vm2438 = vcmask 786048
        %2439 = vst.msk [vmem:[%s286] sm:$0xff] %vm2438, %v2436
        %2441 = vrot.lane.b32.xlu0 %v2406, 97
        %v2442 = vpop.permute.xlu0 %2441
        %2443 = vrot.lane.b32.xlu0 %v2407, 97
        %v2444 = vpop.permute.xlu0 %2443
        %vm2445 = vcmask 793600
        %v2446 = vsel %vm2445, %v2442, %v2444
        %vm2448 = vcmask 917248
        %2449 = vst.msk [vmem:[%s286] sm:$0xff] %vm2448, %v2446
        %2450 = vrot.lane.b32.xlu0 %v2407, 95
        %v2451 = vpop.permute.xlu0 %2450
        %vm2453 = vcmask 1048448
        %2454 = vst.msk [vmem:[%s286] sm:$0xff] %vm2453, %v2451
        %2455 = vrot.lane.b32.xlu0 %v2407, 93
        %v2456 = vpop.permute.xlu0 %2455
        %2458 = vst.msk [vmem:[%s286 + $0x8] sm:$0xff] %vm2413, %v2456
        %2459 = vrot.lane.b32.xlu0 %v2407, 91
        %v2460 = vpop.permute.xlu0 %2459
        %2462 = vst.msk [vmem:[%s286 + $0x8] sm:$0xff] %vm2418, %v2460
        %2463 = vrot.lane.b32.xlu0 %v2407, 89
        %v2464 = vpop.permute.xlu0 %2463
        %2466 = vst.msk [vmem:[%s286 + $0x8] sm:$0xff] %vm2423, %v2464
        %2467 = vrot.lane.b32.xlu0 %v2407, 87
        %v2468 = vpop.permute.xlu0 %2467
        %2470 = vst.msk [vmem:[%s286 + $0x8] sm:$0xff] %vm2428, %v2468
        %2471 = vrot.lane.b32.xlu0 %v2407, 85
        %v2472 = vpop.permute.xlu0 %2471
        %2474 = vst.msk [vmem:[%s286 + $0x8] sm:$0xff] %vm2433, %v2472
        %2476 = vrot.lane.b32.xlu0 %v2407, 83
        %v2477 = vpop.permute.xlu0 %2476
        %2478 = vrot.lane.b32.xlu0 %v2408, 83
        %v2479 = vpop.permute.xlu0 %2478
        %vm2480 = vcmask 678912
        %v2481 = vsel %vm2480, %v2477, %v2479
        %2483 = vst.msk [vmem:[%s286 + $0x8] sm:$0xff] %vm2438, %v2481
        %2484 = vrot.lane.b32.xlu0 %v2408, 81
        %v2485 = vpop.permute.xlu0 %2484
        %2487 = vst.msk [vmem:[%s286 + $0x8] sm:$0xff] %vm2448, %v2485
        %2488 = vrot.lane.b32.xlu0 %v2408, 79
        %v2489 = vpop.permute.xlu0 %2488
        %2491 = vst.msk [vmem:[%s286 + $0x8] sm:$0xff] %vm2453, %v2489
        %s2492 = sand.u32 %s186, 1
        %s2493 = scalar_lea.sflag [#allocation4], %s2492
        %s2494 = sand.u32 %s186, 1
        %s2495 = smul.addr %s2494, 16
        %s2496 = scalar_lea.vmem [#allocation3], %s2495
        // Predicated region
        $region49: #{tpu_custom_call.1} parent=47 // pred_check
          %p2497 = pneg %p196
        $region50: #{tpu_custom_call.1} parent=47 // pred_check_branch
          %2499 = sbr.rel (%p2497) target = $region52
        $region51: #{tpu_custom_call.1} parent=47 // pred_region
          %s2501 = ssub.s32 256, 256
          %2502 = vsyncadd %s2493, %s2501
          %s2503 = smul.addr %s21, 2
          %s2504 = smul.addr %s2503, 128
          %s2505 = scalar_lea.hbm %s7, %s2504
          %s2507 = sshll.u32 %s2496, 4
          %s2508 = int_to_ptr.vmem [resolvable:$true] %s2507
          %2510 = dma.vmem_to_hbm [thread:$0]  %s2508, 256, %s2505, %s2493
        $region52: #{tpu_custom_call.1} parent=47 // pred_fallthru
          _
      $region48: #{tpu_custom_call.1} parent=5 // pred_fallthru
        _
      %p2511 = scmp.le.s32.totalorder 2, %s16
      // Predicated region
      $region53: #{tpu_custom_call.1} parent=5 // pred_check
        %p2512 = pneg %p2511
      $region54: #{tpu_custom_call.1} parent=5 // pred_check_branch
        %2514 = sbr.rel (%p2512) target = $region56
      $region55: #{tpu_custom_call.1} parent=5 // pred_region
        %s2515 = ssub.s32 %s16, 2
        // Predicated region
        $region57: #{tpu_custom_call.1} parent=55 // pred_check
          %p2516 = pneg %p202
        $region58: #{tpu_custom_call.1} parent=55 // pred_check_branch
          %2518 = sbr.rel (%p2516) target = $region60
        $region59: #{tpu_custom_call.1} parent=55 // pred_region
          %s2519 = sand.u32 %s187, 1
          %s2520 = scalar_lea.sflag [#allocation4], %s2519
          %s2521 = sand.u32 %s187, 1
          %s2522 = smul.addr %s2521, 16
          %s2523 = scalar_lea.vmem [#allocation3], %s2522
          %2524 = dma.done %s2520, 256
        $region60: #{tpu_custom_call.1} parent=55 // pred_fallthru
          _
      $region56: #{tpu_custom_call.1} parent=5 // pred_fallthru
        _
    $region6: #{tpu_custom_call.1} parent=1 // loop_footer
      %s20 = sadd.s32 1, %s16
    $region7: #{tpu_custom_call.1} parent=1 // loop_footer_branch
      %15 = sbr.rel target = $region3
    $region8: #{tpu_custom_call.1} parent=1 // loop_exit
      _
    %2525 = vsyncpa [#allocation4], 1
    %s2526 = scalar_lea.sflag [#allocation4], 1
    %2527 = vsyncpa %s2526, 1

</llo_original>
